<compile_context>
chip_gen: v5e
topology: v5e:2x2
jax: 0.10.0
libtpu: 0.0.40
codegen_flags: <defaults>
</compile_context>

<pallas_src>
import jax
import jax.numpy as jnp
import numpy as np
from jax.experimental import pallas as pl
from jax.experimental.pallas import tpu as pltpu

HI = jax.lax.Precision.HIGHEST      # used only by the pure-JAX reference
PADS = (3, 1)                       # Conv1d padding: 3 for block 0, 1 afterwards (STATIC)
KSIZE = 3
EPS = 1e-5
LANES = 128                         # lane-dense classifier width (num_classes padded to 128)


# --------------------------------------------------------------------------
# Trace-time constants (built in the wrapper, passed as tiny VMEM operands)
# --------------------------------------------------------------------------
def _pool_matrix_np(l_out):
    """(l_out//2, l_out) matrix with 0.5 at (r, 2r) and (r, 2r+1): AvgPool1d(2,2) as matmul."""
    p = np.zeros((l_out // 2, l_out), np.float32)
    rows = np.arange(l_out // 2)
    p[rows, 2 * rows] = 0.5
    p[rows, 2 * rows + 1] = 0.5
    return jnp.asarray(p)


# --------------------------------------------------------------------------
# In-kernel helpers
# --------------------------------------------------------------------------
def _conv_block(xb, w_ref, gamma, beta, pool, pad):
    """Conv1d(k=3, pad) -> InstanceNorm(affine) -> ReLU -> AvgPool1d(2,2), (L, C) layout.

    xb    : (L, C_in)           activation (cast to bf16 for the MXU taps)
    w_ref : (K, C_in, C_out)    per-tap Conv1d weights (bf16 ref)
    gamma, beta : (1, C_out)    instance-norm affine (f32)
    pool  : (L_out//2, L_out)   avg-pool matrix (f32, precomputed in the wrapper)
    """
    L, C_in = xb.shape
    C_out = w_ref.shape[2]
    L_out = L + 2 * pad - (KSIZE - 1)

    xb = xb.astype(jnp.bfloat16)
    zeros = jnp.zeros((pad, C_in), jnp.bfloat16)
    xp = jnp.concatenate([zeros, xb, zeros], axis=0)            # (L + 2*pad, C_in)

    # 3-tap accumulated matmuls: no (L_out, 3*C_in) im2col buffer, no lane concat.
    y = jnp.zeros((L_out, C_out), jnp.float32)
    for k in range(KSIZE):
        y = y + jnp.dot(xp[k:k + L_out, :], w_ref[k],
                        preferred_element_type=jnp.float32)
    # Conv bias omitted: a per-channel constant cancels exactly in the mean subtraction.

    # Single-pass norm statistics + pre-folded affine scale/shift.
    mean = jnp.mean(y, axis=0, keepdims=True)
    msq = jnp.mean(y * y, axis=0, keepdims=True)
    var = jnp.maximum(msq - mean * mean, 0.0)
    scale = gamma * jax.lax.rsqrt(var + EPS)
    shift = beta - mean * scale
    y = jnp.maximum(y * scale + shift, 0.0)                     # norm + affine + ReLU
    return jnp.dot(pool, y, preferred_element_type=jnp.float32)  # (L_out//2, C_out) f32


# --------------------------------------------------------------------------
# Fused kernel: conv block 1 -> conv block 2 -> LSTM -> classifier
# (one batch element per grid step; on v7x each TensorCore takes one)
# --------------------------------------------------------------------------
def fused_net_kernel(x_ref, w1_ref, g1_ref, b1_ref, p1_ref,
                     w2_ref, g2_ref, b2_ref, p2_ref,
                     wih_ref, whh_ref, bl_ref, wc_ref, bc_ref, out_ref):
    # x_ref   : (1, L, C_in) bf16       input, already (L, C)-oriented by the wrapper
    # w*_ref  : (K, C_in, C_out) bf16   per-tap conv weights
    # g*/b*   : (1, C_out) f32          instance-norm affine params
    # p*_ref  : (L_pool, L_out) f32     avg-pool matrices
    # wih_ref : (C, 4H), whh_ref: (H, 4H), bl_ref: (1, 4H)  LSTM (gate order i,f,g,o), f32
    # wc_ref  : (H, 128), bc_ref: (1, 128)                   classifier, zero-padded lanes
    # out_ref : (1, 1, 128) f32
    H = whh_ref.shape[0]

    # ---- CNN feature extractor (all activations live in VMEM / vregs) ----
    f = _conv_block(x_ref[0], w1_ref, g1_ref[...], b1_ref[...], p1_ref[...], PADS[0])
    f = _conv_block(f, w2_ref, g2_ref[...], b2_ref[...], p2_ref[...], PADS[1])
    T = f.shape[0]                           # (T, C): already "permute(0, 2, 1)"-oriented

    # ---- LSTM: input projection hoisted out of the serial recurrence ----
    gx = jnp.dot(f, wih_ref[...], preferred_element_type=jnp.float32) + bl_ref[...]  # (T, 4H)
    whh = whh_ref[...]
    h = jnp.zeros((1, H), jnp.float32)
    c = jnp.zeros((1, H), jnp.float32)
    for t in range(T):                       # static unroll of the T-step recurrence
        gates = gx[t:t + 1, :] + jnp.dot(h, whh, preferred_element_type=jnp.float32)
        # ONE EUP pass for all gate nonlinearities: sigmoid(x) = 0.5*tanh(0.5x) + 0.5
        th = jnp.tanh(jnp.concatenate([0.5 * gates, gates], axis=0))   # (2, 4H)
        sig = 0.5 * th[0:1, :] + 0.5
        i_g = sig[:, 0 * H:1 * H]
        f_g = sig[:, 1 * H:2 * H]
        o_g = sig[:, 3 * H:4 * H]
        g_g = th[1:2, 2 * H:3 * H]
        c = f_g * c + i_g * g_g
        h = o_g * jnp.tanh(c)

    # ---- classifier: lane-dense (128-wide) final matmul + store ----
    logits = jnp.dot(h, wc_ref[...], preferred_element_type=jnp.float32) + bc_ref[...]
    out_ref[...] = logits[None].astype(out_ref.dtype)


def _const_spec(a):
    ndim = a.ndim
    return pl.BlockSpec(a.shape, lambda b: (0,) * ndim)


@jax.jit
def conv_to_lstm_net(x, params):
    """x: (B, 64, L) NCL -> logits (B, num_classes). One fused pallas_call, grid over B."""
    B, C_in, L = x.shape
    xt = jnp.transpose(x, (0, 2, 1)).astype(jnp.bfloat16)       # (B, L, C_in)

    ops = []
    l_cur = L
    for idx, p in enumerate(params["conv"]):
        W = p["W"]                                              # (C_out, C_in, K) PyTorch layout
        C_out = W.shape[0]
        w_taps = jnp.transpose(W, (2, 1, 0)).astype(jnp.bfloat16)   # (K, C_in, C_out)
        pad = PADS[idx]
        l_out = l_cur + 2 * pad - (KSIZE - 1)
        ops += [w_taps,
                p["gamma"].reshape(1, C_out),
                p["beta"].reshape(1, C_out),
                _pool_matrix_np(l_out)]
        l_cur = l_out // 2

    H = params["whh"].shape[0]
    NC = params["wc"].shape[1]
    wc_pad = jnp.zeros((H, LANES), jnp.float32).at[:, :NC].set(params["wc"])
    bc_pad = jnp.zeros((1, LANES), jnp.float32).at[:, :NC].set(params["bc"])
    ops += [params["wih"], params["whh"], params["b_lstm"], wc_pad, bc_pad]

    in_specs = ([pl.BlockSpec((1, L, C_in), lambda b: (b, 0, 0))]
                + [_const_spec(a) for a in ops])

    out = pl.pallas_call(
        fused_net_kernel,
        out_shape=jax.ShapeDtypeStruct((B, 1, LANES), jnp.float32),
        grid=(B,),
        in_specs=in_specs,
        out_specs=pl.BlockSpec((1, 1, LANES), lambda b: (b, 0, 0)),
        compiler_params=pltpu.CompilerParams(dimension_semantics=("parallel",)),
    )(xt, *ops)
    return out.reshape(B, LANES)[:, :NC]


# --------------------------------------------------------------------------
# Pure-JAX f32/HIGHEST reference (keeps the conv bias; numerically same math)
# --------------------------------------------------------------------------
@jax.jit
def reference_forward(x, params):
    out = x
    for idx, p in enumerate(params["conv"]):
        pad = PADS[idx]
        out = jax.lax.conv_general_dilated(
            out, p["W"], window_strides=(1,), padding=[(pad, pad)],
            dimension_numbers=("NCH", "OIH", "NCH"), precision=HI)
        out = out + p["b"][None, :, None]
        mean = out.mean(axis=2, keepdims=True)
        var = ((out - mean) ** 2).mean(axis=2, keepdims=True)
        out = (out - mean) * jax.lax.rsqrt(var + EPS)
        out = out * p["gamma"][None, :, None] + p["beta"][None, :, None]
        out = jnp.maximum(out, 0.0)
        Bx, Cx, Lx = out.shape
        out = out.reshape(Bx, Cx, Lx // 2, 2).mean(-1)          # AvgPool1d(2, 2)

    seq = jnp.transpose(out, (0, 2, 1))                         # (B, T, C)
    B = seq.shape[0]
    H = params["whh"].shape[0]
    wih, whh, bias = params["wih"], params["whh"], params["b_lstm"]

    def step(carry, x_t):
        h, c = carry
        gates = (jnp.dot(x_t, wih, precision=HI)
                 + jnp.dot(h, whh, precision=HI) + bias)
        i = jax.nn.sigmoid(gates[:, :H])
        f = jax.nn.sigmoid(gates[:, H:2 * H])
        g = jnp.tanh(gates[:, 2 * H:3 * H])
        o = jax.nn.sigmoid(gates[:, 3 * H:])
        c = f * c + i * g
        h = o * jnp.tanh(c)
        return (h, c), None

    (h, _), _ = jax.lax.scan(
        step, (jnp.zeros((B, H), jnp.float32), jnp.zeros((B, H), jnp.float32)),
        jnp.swapaxes(seq, 0, 1))
    return jnp.dot(h, params["wc"], precision=HI) + params["bc"]


# --------------------------------------------------------------------------
# Deterministic parameter init + driver
# --------------------------------------------------------------------------
def make_params(key, num_classes=10, cnn_width=32, cnn_depth=2, lstm_width=32,
                in_channels=64):
    ks = iter(jax.random.split(key, 32))
    params = {"conv": []}
    c_in = in_channels
    for _ in range(cnn_depth):
        params["conv"].append(dict(
            W=0.1 * jax.random.normal(next(ks), (cnn_width, c_in, KSIZE), jnp.float32),
            b=0.05 * jax.random.normal(next(ks), (cnn_width,), jnp.float32),
            gamma=1.0 + 0.1 * jax.random.normal(next(ks), (cnn_width,), jnp.float32),
            beta=0.1 * jax.random.normal(next(ks), (cnn_width,), jnp.float32),
        ))
        c_in = cnn_width

    H, C = lstm_width, cnn_width
    # PyTorch layout is (4H, C)/(4H, H); we store the transposed (C, 4H)/(H, 4H),
    # gate order i, f, g, o.
    params["wih"] = 0.1 * jax.random.normal(next(ks), (C, 4 * H), jnp.float32)
    params["whh"] = 0.1 * jax.random.normal(next(ks), (H, 4 * H), jnp.float32)
    b_ih = 0.05 * jax.random.normal(next(ks), (4 * H,), jnp.float32)
    b_hh = 0.05 * jax.random.normal(next(ks), (4 * H,), jnp.float32)
    params["b_lstm"] = (b_ih + b_hh).reshape(1, 4 * H)
    params["wc"] = 0.1 * jax.random.normal(next(ks), (H, num_classes), jnp.float32)
    params["bc"] = 0.05 * jax.random.normal(next(ks), (num_classes,),
                                            jnp.float32).reshape(1, num_classes)
    return params


if __name__ == "__main__":
    key = jax.random.PRNGKey(0)
    k_param, k_x = jax.random.split(key)

    B, C_IN, L_IN = 2, 64, 64     # ConvNet hard-codes 64 input channels
    params = make_params(k_param)
    x = jax.random.normal(k_x, (B, C_IN, L_IN), jnp.float32)

    out = jax.block_until_ready(conv_to_lstm_net(x, params))
    assert out.shape == (B, 10), out.shape

    ref = jax.block_until_ready(reference_forward(x, params))
    # Kernel feeds the conv/feature matmuls with bf16 operands (single-pass MXU);
    # reference is f32 / HIGHEST, so allow a bf16-class tolerance.
    np.testing.assert_allclose(np.asarray(out), np.asarray(ref), rtol=3e-2, atol=3e-2)
    print("KERNEL_OK")
</pallas_src>

<mosaic_0001>
module attributes {stable_mosaic.version = 11 : i64} {
  func.func @fused_net_kernel(%arg0: i32, %arg1: memref<1x64x64xbf16, #tpu.memory_space<vmem>>, %arg2: memref<3x64x32xbf16, #tpu.memory_space<vmem>>, %arg3: memref<1x32xf32, #tpu.memory_space<vmem>>, %arg4: memref<1x32xf32, #tpu.memory_space<vmem>>, %arg5: memref<34x68xf32, #tpu.memory_space<vmem>>, %arg6: memref<3x32x32xbf16, #tpu.memory_space<vmem>>, %arg7: memref<1x32xf32, #tpu.memory_space<vmem>>, %arg8: memref<1x32xf32, #tpu.memory_space<vmem>>, %arg9: memref<17x34xf32, #tpu.memory_space<vmem>>, %arg10: memref<32x128xf32, #tpu.memory_space<vmem>>, %arg11: memref<32x128xf32, #tpu.memory_space<vmem>>, %arg12: memref<1x128xf32, #tpu.memory_space<vmem>>, %arg13: memref<32x128xf32, #tpu.memory_space<vmem>>, %arg14: memref<1x128xf32, #tpu.memory_space<vmem>>, %arg15: memref<1x1x128xf32, #tpu.memory_space<vmem>>) attributes {dimension_semantics = [#tpu.dimension_semantics<parallel>], iteration_bounds = array<i64: 2>, scalar_prefetch = 0 : i64, scratch_operands = 0 : i64, tpu.core_type = #tpu.core_type<tc>, window_params = [{transform_indices = @transform_0, window_bounds = array<i64: 1, 64, 64>}, {pipeline_mode = #tpu.pipeline_mode<synchronous>, transform_indices = @transform_1, window_bounds = array<i64: 3, 64, 32>}, {pipeline_mode = #tpu.pipeline_mode<synchronous>, transform_indices = @transform_2, window_bounds = array<i64: 1, 32>}, {pipeline_mode = #tpu.pipeline_mode<synchronous>, transform_indices = @transform_3, window_bounds = array<i64: 1, 32>}, {pipeline_mode = #tpu.pipeline_mode<synchronous>, transform_indices = @transform_4, window_bounds = array<i64: 34, 68>}, {pipeline_mode = #tpu.pipeline_mode<synchronous>, transform_indices = @transform_5, window_bounds = array<i64: 3, 32, 32>}, {pipeline_mode = #tpu.pipeline_mode<synchronous>, transform_indices = @transform_6, window_bounds = array<i64: 1, 32>}, {pipeline_mode = #tpu.pipeline_mode<synchronous>, transform_indices = @transform_7, window_bounds = array<i64: 1, 32>}, {pipeline_mode = #tpu.pipeline_mode<synchronous>, transform_indices = @transform_8, window_bounds = array<i64: 17, 34>}, {pipeline_mode = #tpu.pipeline_mode<synchronous>, transform_indices = @transform_9, window_bounds = array<i64: 32, 128>}, {pipeline_mode = #tpu.pipeline_mode<synchronous>, transform_indices = @transform_10, window_bounds = array<i64: 32, 128>}, {pipeline_mode = #tpu.pipeline_mode<synchronous>, transform_indices = @transform_11, window_bounds = array<i64: 1, 128>}, {pipeline_mode = #tpu.pipeline_mode<synchronous>, transform_indices = @transform_12, window_bounds = array<i64: 32, 128>}, {pipeline_mode = #tpu.pipeline_mode<synchronous>, transform_indices = @transform_13, window_bounds = array<i64: 1, 128>}, {transform_indices = @transform_14, window_bounds = array<i64: 1, 1, 128>}]} {
    %c0 = arith.constant 0 : index
    %c0_0 = arith.constant 0 : index
    %c0_1 = arith.constant 0 : index
    %0 = vector.load %arg1[%c0, %c0_0, %c0_1] : memref<1x64x64xbf16, #tpu.memory_space<vmem>>, vector<1x64x64xbf16>
    %1 = vector.shape_cast %0 : vector<1x64x64xbf16> to vector<64x64xbf16>
    %c0_2 = arith.constant 0 : index
    %c0_3 = arith.constant 0 : index
    %2 = vector.load %arg3[%c0_2, %c0_3] : memref<1x32xf32, #tpu.memory_space<vmem>>, vector<1x32xf32>
    %c0_4 = arith.constant 0 : index
    %c0_5 = arith.constant 0 : index
    %3 = vector.load %arg4[%c0_4, %c0_5] : memref<1x32xf32, #tpu.memory_space<vmem>>, vector<1x32xf32>
    %c0_6 = arith.constant 0 : index
    %c0_7 = arith.constant 0 : index
    %4 = vector.load %arg5[%c0_6, %c0_7] : memref<34x68xf32, #tpu.memory_space<vmem>>, vector<34x68xf32>
    %cst = arith.constant 0.000000e+00 : bf16
    %5 = vector.broadcast %cst : bf16 to vector<3x64xbf16>
    %6 = tpu.concatenate %5, %1, %5 in 0 : vector<3x64xbf16>, vector<64x64xbf16>, vector<3x64xbf16> -> vector<70x64xbf16>
    %cst_8 = arith.constant 0.000000e+00 : f32
    %7 = vector.broadcast %cst_8 : f32 to vector<68x32xf32>
    %8 = vector.extract_strided_slice %6 {offsets = [0, 0], sizes = [68, 64], strides = [1, 1]} : vector<70x64xbf16> to vector<68x64xbf16>
    %c0_9 = arith.constant 0 : index
    %c0_10 = arith.constant 0 : index
    %c0_11 = arith.constant 0 : index
    %9 = vector.load %arg2[%c0_9, %c0_10, %c0_11] : memref<3x64x32xbf16, #tpu.memory_space<vmem>>, vector<1x64x32xbf16>
    %10 = vector.shape_cast %9 : vector<1x64x32xbf16> to vector<64x32xbf16>
    %cst_12 = arith.constant dense<0.000000e+00> : vector<68x32xf32>
    %11 = tpu.matmul %8, %10, %cst_12 {dimension_numbers = #tpu.dot_dimension_numbers<[1], [0], [0], [1], [0, 0, 1, 1], [], []>} : vector<68x64xbf16>, vector<64x32xbf16>, vector<68x32xf32> -> vector<68x32xf32>
    %12 = arith.addf %7, %11 : vector<68x32xf32>
    %13 = vector.extract_strided_slice %6 {offsets = [1, 0], sizes = [68, 64], strides = [1, 1]} : vector<70x64xbf16> to vector<68x64xbf16>
    %c1 = arith.constant 1 : index
    %c0_13 = arith.constant 0 : index
    %c0_14 = arith.constant 0 : index
    %14 = vector.load %arg2[%c1, %c0_13, %c0_14] : memref<3x64x32xbf16, #tpu.memory_space<vmem>>, vector<1x64x32xbf16>
    %15 = vector.shape_cast %14 : vector<1x64x32xbf16> to vector<64x32xbf16>
    %cst_15 = arith.constant dense<0.000000e+00> : vector<68x32xf32>
    %16 = tpu.matmul %13, %15, %cst_15 {dimension_numbers = #tpu.dot_dimension_numbers<[1], [0], [0], [1], [0, 0, 1, 1], [], []>} : vector<68x64xbf16>, vector<64x32xbf16>, vector<68x32xf32> -> vector<68x32xf32>
    %17 = arith.addf %12, %16 : vector<68x32xf32>
    %18 = vector.extract_strided_slice %6 {offsets = [2, 0], sizes = [68, 64], strides = [1, 1]} : vector<70x64xbf16> to vector<68x64xbf16>
    %c2 = arith.constant 2 : index
    %c0_16 = arith.constant 0 : index
    %c0_17 = arith.constant 0 : index
    %19 = vector.load %arg2[%c2, %c0_16, %c0_17] : memref<3x64x32xbf16, #tpu.memory_space<vmem>>, vector<1x64x32xbf16>
    %20 = vector.shape_cast %19 : vector<1x64x32xbf16> to vector<64x32xbf16>
    %cst_18 = arith.constant dense<0.000000e+00> : vector<68x32xf32>
    %21 = tpu.matmul %18, %20, %cst_18 {dimension_numbers = #tpu.dot_dimension_numbers<[1], [0], [0], [1], [0, 0, 1, 1], [], []>} : vector<68x64xbf16>, vector<64x32xbf16>, vector<68x32xf32> -> vector<68x32xf32>
    %22 = arith.addf %17, %21 : vector<68x32xf32>
    %cst_19 = arith.constant dense<0.000000e+00> : vector<32xf32>
    %23 = vector.multi_reduction <add>, %22, %cst_19 [0] : vector<68x32xf32> to vector<32xf32>
    %24 = vector.shape_cast %23 : vector<32xf32> to vector<1x32xf32>
    %cst_20 = arith.constant 6.800000e+01 : f32
    %25 = vector.broadcast %cst_20 : f32 to vector<1x32xf32>
    %26 = arith.divf %24, %25 : vector<1x32xf32>
    %27 = arith.mulf %22, %22 : vector<68x32xf32>
    %cst_21 = arith.constant dense<0.000000e+00> : vector<32xf32>
    %28 = vector.multi_reduction <add>, %27, %cst_21 [0] : vector<68x32xf32> to vector<32xf32>
    %29 = vector.shape_cast %28 : vector<32xf32> to vector<1x32xf32>
    %cst_22 = arith.constant 6.800000e+01 : f32
    %30 = vector.broadcast %cst_22 : f32 to vector<1x32xf32>
    %31 = arith.divf %29, %30 : vector<1x32xf32>
    %32 = arith.mulf %26, %26 : vector<1x32xf32>
    %33 = arith.subf %31, %32 : vector<1x32xf32>
    %cst_23 = arith.constant 0.000000e+00 : f32
    %34 = vector.broadcast %cst_23 : f32 to vector<1x32xf32>
    %35 = arith.maximumf %33, %34 : vector<1x32xf32>
    %cst_24 = arith.constant 9.99999974E-6 : f32
    %36 = vector.broadcast %cst_24 : f32 to vector<1x32xf32>
    %37 = arith.addf %35, %36 : vector<1x32xf32>
    %38 = math.rsqrt %37 : vector<1x32xf32>
    %39 = arith.mulf %2, %38 : vector<1x32xf32>
    %40 = arith.mulf %26, %39 : vector<1x32xf32>
    %41 = arith.subf %3, %40 : vector<1x32xf32>
    %42 = vector.broadcast %39 : vector<1x32xf32> to vector<68x32xf32>
    %43 = arith.mulf %22, %42 : vector<68x32xf32>
    %44 = vector.broadcast %41 : vector<1x32xf32> to vector<68x32xf32>
    %45 = arith.addf %43, %44 : vector<68x32xf32>
    %cst_25 = arith.constant 0.000000e+00 : f32
    %46 = vector.broadcast %cst_25 : f32 to vector<68x32xf32>
    %47 = arith.maximumf %45, %46 : vector<68x32xf32>
    %cst_26 = arith.constant dense<0.000000e+00> : vector<34x32xf32>
    %48 = tpu.matmul %4, %47, %cst_26 {dimension_numbers = #tpu.dot_dimension_numbers<[1], [0], [0], [1], [0, 0, 1, 1], [], []>} : vector<34x68xf32>, vector<68x32xf32>, vector<34x32xf32> -> vector<34x32xf32>
    %c0_27 = arith.constant 0 : index
    %c0_28 = arith.constant 0 : index
    %49 = vector.load %arg7[%c0_27, %c0_28] : memref<1x32xf32, #tpu.memory_space<vmem>>, vector<1x32xf32>
    %c0_29 = arith.constant 0 : index
    %c0_30 = arith.constant 0 : index
    %50 = vector.load %arg8[%c0_29, %c0_30] : memref<1x32xf32, #tpu.memory_space<vmem>>, vector<1x32xf32>
    %c0_31 = arith.constant 0 : index
    %c0_32 = arith.constant 0 : index
    %51 = vector.load %arg9[%c0_31, %c0_32] : memref<17x34xf32, #tpu.memory_space<vmem>>, vector<17x34xf32>
    %52 = arith.truncf %48 : vector<34x32xf32> to vector<34x32xbf16>
    %cst_33 = arith.constant 0.000000e+00 : bf16
    %53 = vector.broadcast %cst_33 : bf16 to vector<1x32xbf16>
    %54 = tpu.concatenate %53, %52, %53 in 0 : vector<1x32xbf16>, vector<34x32xbf16>, vector<1x32xbf16> -> vector<36x32xbf16>
    %cst_34 = arith.constant 0.000000e+00 : f32
    %55 = vector.broadcast %cst_34 : f32 to vector<34x32xf32>
    %56 = vector.extract_strided_slice %54 {offsets = [0, 0], sizes = [34, 32], strides = [1, 1]} : vector<36x32xbf16> to vector<34x32xbf16>
    %c0_35 = arith.constant 0 : index
    %c0_36 = arith.constant 0 : index
    %c0_37 = arith.constant 0 : index
    %57 = vector.load %arg6[%c0_35, %c0_36, %c0_37] : memref<3x32x32xbf16, #tpu.memory_space<vmem>>, vector<1x32x32xbf16>
    %58 = vector.shape_cast %57 : vector<1x32x32xbf16> to vector<32x32xbf16>
    %cst_38 = arith.constant dense<0.000000e+00> : vector<34x32xf32>
    %59 = tpu.matmul %56, %58, %cst_38 {dimension_numbers = #tpu.dot_dimension_numbers<[1], [0], [0], [1], [0, 0, 1, 1], [], []>} : vector<34x32xbf16>, vector<32x32xbf16>, vector<34x32xf32> -> vector<34x32xf32>
    %60 = arith.addf %55, %59 : vector<34x32xf32>
    %61 = vector.extract_strided_slice %54 {offsets = [1, 0], sizes = [34, 32], strides = [1, 1]} : vector<36x32xbf16> to vector<34x32xbf16>
    %c1_39 = arith.constant 1 : index
    %c0_40 = arith.constant 0 : index
    %c0_41 = arith.constant 0 : index
    %62 = vector.load %arg6[%c1_39, %c0_40, %c0_41] : memref<3x32x32xbf16, #tpu.memory_space<vmem>>, vector<1x32x32xbf16>
    %63 = vector.shape_cast %62 : vector<1x32x32xbf16> to vector<32x32xbf16>
    %cst_42 = arith.constant dense<0.000000e+00> : vector<34x32xf32>
    %64 = tpu.matmul %61, %63, %cst_42 {dimension_numbers = #tpu.dot_dimension_numbers<[1], [0], [0], [1], [0, 0, 1, 1], [], []>} : vector<34x32xbf16>, vector<32x32xbf16>, vector<34x32xf32> -> vector<34x32xf32>
    %65 = arith.addf %60, %64 : vector<34x32xf32>
    %66 = vector.extract_strided_slice %54 {offsets = [2, 0], sizes = [34, 32], strides = [1, 1]} : vector<36x32xbf16> to vector<34x32xbf16>
    %c2_43 = arith.constant 2 : index
    %c0_44 = arith.constant 0 : index
    %c0_45 = arith.constant 0 : index
    %67 = vector.load %arg6[%c2_43, %c0_44, %c0_45] : memref<3x32x32xbf16, #tpu.memory_space<vmem>>, vector<1x32x32xbf16>
    %68 = vector.shape_cast %67 : vector<1x32x32xbf16> to vector<32x32xbf16>
    %cst_46 = arith.constant dense<0.000000e+00> : vector<34x32xf32>
    %69 = tpu.matmul %66, %68, %cst_46 {dimension_numbers = #tpu.dot_dimension_numbers<[1], [0], [0], [1], [0, 0, 1, 1], [], []>} : vector<34x32xbf16>, vector<32x32xbf16>, vector<34x32xf32> -> vector<34x32xf32>
    %70 = arith.addf %65, %69 : vector<34x32xf32>
    %cst_47 = arith.constant dense<0.000000e+00> : vector<32xf32>
    %71 = vector.multi_reduction <add>, %70, %cst_47 [0] : vector<34x32xf32> to vector<32xf32>
    %72 = vector.shape_cast %71 : vector<32xf32> to vector<1x32xf32>
    %cst_48 = arith.constant 3.400000e+01 : f32
    %73 = vector.broadcast %cst_48 : f32 to vector<1x32xf32>
    %74 = arith.divf %72, %73 : vector<1x32xf32>
    %75 = arith.mulf %70, %70 : vector<34x32xf32>
    %cst_49 = arith.constant dense<0.000000e+00> : vector<32xf32>
    %76 = vector.multi_reduction <add>, %75, %cst_49 [0] : vector<34x32xf32> to vector<32xf32>
    %77 = vector.shape_cast %76 : vector<32xf32> to vector<1x32xf32>
    %cst_50 = arith.constant 3.400000e+01 : f32
    %78 = vector.broadcast %cst_50 : f32 to vector<1x32xf32>
    %79 = arith.divf %77, %78 : vector<1x32xf32>
    %80 = arith.mulf %74, %74 : vector<1x32xf32>
    %81 = arith.subf %79, %80 : vector<1x32xf32>
    %cst_51 = arith.constant 0.000000e+00 : f32
    %82 = vector.broadcast %cst_51 : f32 to vector<1x32xf32>
    %83 = arith.maximumf %81, %82 : vector<1x32xf32>
    %cst_52 = arith.constant 9.99999974E-6 : f32
    %84 = vector.broadcast %cst_52 : f32 to vector<1x32xf32>
    %85 = arith.addf %83, %84 : vector<1x32xf32>
    %86 = math.rsqrt %85 : vector<1x32xf32>
    %87 = arith.mulf %49, %86 : vector<1x32xf32>
    %88 = arith.mulf %74, %87 : vector<1x32xf32>
    %89 = arith.subf %50, %88 : vector<1x32xf32>
    %90 = vector.broadcast %87 : vector<1x32xf32> to vector<34x32xf32>
    %91 = arith.mulf %70, %90 : vector<34x32xf32>
    %92 = vector.broadcast %89 : vector<1x32xf32> to vector<34x32xf32>
    %93 = arith.addf %91, %92 : vector<34x32xf32>
    %cst_53 = arith.constant 0.000000e+00 : f32
    %94 = vector.broadcast %cst_53 : f32 to vector<34x32xf32>
    %95 = arith.maximumf %93, %94 : vector<34x32xf32>
    %cst_54 = arith.constant dense<0.000000e+00> : vector<17x32xf32>
    %96 = tpu.matmul %51, %95, %cst_54 {dimension_numbers = #tpu.dot_dimension_numbers<[1], [0], [0], [1], [0, 0, 1, 1], [], []>} : vector<17x34xf32>, vector<34x32xf32>, vector<17x32xf32> -> vector<17x32xf32>
    %c0_55 = arith.constant 0 : index
    %c0_56 = arith.constant 0 : index
    %97 = vector.load %arg10[%c0_55, %c0_56] : memref<32x128xf32, #tpu.memory_space<vmem>>, vector<32x128xf32>
    %cst_57 = arith.constant dense<0.000000e+00> : vector<17x128xf32>
    %98 = tpu.matmul %96, %97, %cst_57 {dimension_numbers = #tpu.dot_dimension_numbers<[1], [0], [0], [1], [0, 0, 1, 1], [], []>} : vector<17x32xf32>, vector<32x128xf32>, vector<17x128xf32> -> vector<17x128xf32>
    %c0_58 = arith.constant 0 : index
    %c0_59 = arith.constant 0 : index
    %99 = vector.load %arg12[%c0_58, %c0_59] : memref<1x128xf32, #tpu.memory_space<vmem>>, vector<1x128xf32>
    %100 = vector.broadcast %99 : vector<1x128xf32> to vector<17x128xf32>
    %101 = arith.addf %98, %100 : vector<17x128xf32>
    %c0_60 = arith.constant 0 : index
    %c0_61 = arith.constant 0 : index
    %102 = vector.load %arg11[%c0_60, %c0_61] : memref<32x128xf32, #tpu.memory_space<vmem>>, vector<32x128xf32>
    %cst_62 = arith.constant 0.000000e+00 : f32
    %103 = vector.broadcast %cst_62 : f32 to vector<1x32xf32>
    %cst_63 = arith.constant 0.000000e+00 : f32
    %104 = vector.broadcast %cst_63 : f32 to vector<1x32xf32>
    %105 = vector.extract_strided_slice %101 {offsets = [0, 0], sizes = [1, 128], strides = [1, 1]} : vector<17x128xf32> to vector<1x128xf32>
    %cst_64 = arith.constant dense<0.000000e+00> : vector<1x128xf32>
    %106 = tpu.matmul %103, %102, %cst_64 {dimension_numbers = #tpu.dot_dimension_numbers<[1], [0], [0], [1], [0, 0, 1, 1], [], []>} : vector<1x32xf32>, vector<32x128xf32>, vector<1x128xf32> -> vector<1x128xf32>
    %107 = arith.addf %105, %106 : vector<1x128xf32>
    %cst_65 = arith.constant 5.000000e-01 : f32
    %108 = vector.broadcast %cst_65 : f32 to vector<1x128xf32>
    %109 = arith.mulf %108, %107 : vector<1x128xf32>
    %110 = tpu.concatenate %109, %107 in 0 : vector<1x128xf32>, vector<1x128xf32> -> vector<2x128xf32>
    %111 = math.tanh %110 : vector<2x128xf32>
    %112 = vector.extract_strided_slice %111 {offsets = [0, 0], sizes = [1, 128], strides = [1, 1]} : vector<2x128xf32> to vector<1x128xf32>
    %cst_66 = arith.constant 5.000000e-01 : f32
    %113 = vector.broadcast %cst_66 : f32 to vector<1x128xf32>
    %114 = arith.mulf %113, %112 : vector<1x128xf32>
    %cst_67 = arith.constant 5.000000e-01 : f32
    %115 = vector.broadcast %cst_67 : f32 to vector<1x128xf32>
    %116 = arith.addf %114, %115 : vector<1x128xf32>
    %117 = vector.extract_strided_slice %116 {offsets = [0, 0], sizes = [1, 32], strides = [1, 1]} : vector<1x128xf32> to vector<1x32xf32>
    %118 = vector.extract_strided_slice %116 {offsets = [0, 32], sizes = [1, 32], strides = [1, 1]} : vector<1x128xf32> to vector<1x32xf32>
    %119 = vector.extract_strided_slice %116 {offsets = [0, 96], sizes = [1, 32], strides = [1, 1]} : vector<1x128xf32> to vector<1x32xf32>
    %120 = vector.extract_strided_slice %111 {offsets = [1, 64], sizes = [1, 32], strides = [1, 1]} : vector<2x128xf32> to vector<1x32xf32>
    %121 = arith.mulf %118, %104 : vector<1x32xf32>
    %122 = arith.mulf %117, %120 : vector<1x32xf32>
    %123 = arith.addf %121, %122 : vector<1x32xf32>
    %124 = math.tanh %123 : vector<1x32xf32>
    %125 = arith.mulf %119, %124 : vector<1x32xf32>
    %126 = vector.extract_strided_slice %101 {offsets = [1, 0], sizes = [1, 128], strides = [1, 1]} : vector<17x128xf32> to vector<1x128xf32>
    %cst_68 = arith.constant dense<0.000000e+00> : vector<1x128xf32>
    %127 = tpu.matmul %125, %102, %cst_68 {dimension_numbers = #tpu.dot_dimension_numbers<[1], [0], [0], [1], [0, 0, 1, 1], [], []>} : vector<1x32xf32>, vector<32x128xf32>, vector<1x128xf32> -> vector<1x128xf32>
    %128 = arith.addf %126, %127 : vector<1x128xf32>
    %cst_69 = arith.constant 5.000000e-01 : f32
    %129 = vector.broadcast %cst_69 : f32 to vector<1x128xf32>
    %130 = arith.mulf %129, %128 : vector<1x128xf32>
    %131 = tpu.concatenate %130, %128 in 0 : vector<1x128xf32>, vector<1x128xf32> -> vector<2x128xf32>
    %132 = math.tanh %131 : vector<2x128xf32>
    %133 = vector.extract_strided_slice %132 {offsets = [0, 0], sizes = [1, 128], strides = [1, 1]} : vector<2x128xf32> to vector<1x128xf32>
    %cst_70 = arith.constant 5.000000e-01 : f32
    %134 = vector.broadcast %cst_70 : f32 to vector<1x128xf32>
    %135 = arith.mulf %134, %133 : vector<1x128xf32>
    %cst_71 = arith.constant 5.000000e-01 : f32
    %136 = vector.broadcast %cst_71 : f32 to vector<1x128xf32>
    %137 = arith.addf %135, %136 : vector<1x128xf32>
    %138 = vector.extract_strided_slice %137 {offsets = [0, 0], sizes = [1, 32], strides = [1, 1]} : vector<1x128xf32> to vector<1x32xf32>
    %139 = vector.extract_strided_slice %137 {offsets = [0, 32], sizes = [1, 32], strides = [1, 1]} : vector<1x128xf32> to vector<1x32xf32>
    %140 = vector.extract_strided_slice %137 {offsets = [0, 96], sizes = [1, 32], strides = [1, 1]} : vector<1x128xf32> to vector<1x32xf32>
    %141 = vector.extract_strided_slice %132 {offsets = [1, 64], sizes = [1, 32], strides = [1, 1]} : vector<2x128xf32> to vector<1x32xf32>
    %142 = arith.mulf %139, %123 : vector<1x32xf32>
    %143 = arith.mulf %138, %141 : vector<1x32xf32>
    %144 = arith.addf %142, %143 : vector<1x32xf32>
    %145 = math.tanh %144 : vector<1x32xf32>
    %146 = arith.mulf %140, %145 : vector<1x32xf32>
    %147 = vector.extract_strided_slice %101 {offsets = [2, 0], sizes = [1, 128], strides = [1, 1]} : vector<17x128xf32> to vector<1x128xf32>
    %cst_72 = arith.constant dense<0.000000e+00> : vector<1x128xf32>
    %148 = tpu.matmul %146, %102, %cst_72 {dimension_numbers = #tpu.dot_dimension_numbers<[1], [0], [0], [1], [0, 0, 1, 1], [], []>} : vector<1x32xf32>, vector<32x128xf32>, vector<1x128xf32> -> vector<1x128xf32>
    %149 = arith.addf %147, %148 : vector<1x128xf32>
    %cst_73 = arith.constant 5.000000e-01 : f32
    %150 = vector.broadcast %cst_73 : f32 to vector<1x128xf32>
    %151 = arith.mulf %150, %149 : vector<1x128xf32>
    %152 = tpu.concatenate %151, %149 in 0 : vector<1x128xf32>, vector<1x128xf32> -> vector<2x128xf32>
    %153 = math.tanh %152 : vector<2x128xf32>
    %154 = vector.extract_strided_slice %153 {offsets = [0, 0], sizes = [1, 128], strides = [1, 1]} : vector<2x128xf32> to vector<1x128xf32>
    %cst_74 = arith.constant 5.000000e-01 : f32
    %155 = vector.broadcast %cst_74 : f32 to vector<1x128xf32>
    %156 = arith.mulf %155, %154 : vector<1x128xf32>
    %cst_75 = arith.constant 5.000000e-01 : f32
    %157 = vector.broadcast %cst_75 : f32 to vector<1x128xf32>
    %158 = arith.addf %156, %157 : vector<1x128xf32>
    %159 = vector.extract_strided_slice %158 {offsets = [0, 0], sizes = [1, 32], strides = [1, 1]} : vector<1x128xf32> to vector<1x32xf32>
    %160 = vector.extract_strided_slice %158 {offsets = [0, 32], sizes = [1, 32], strides = [1, 1]} : vector<1x128xf32> to vector<1x32xf32>
    %161 = vector.extract_strided_slice %158 {offsets = [0, 96], sizes = [1, 32], strides = [1, 1]} : vector<1x128xf32> to vector<1x32xf32>
    %162 = vector.extract_strided_slice %153 {offsets = [1, 64], sizes = [1, 32], strides = [1, 1]} : vector<2x128xf32> to vector<1x32xf32>
    %163 = arith.mulf %160, %144 : vector<1x32xf32>
    %164 = arith.mulf %159, %162 : vector<1x32xf32>
    %165 = arith.addf %163, %164 : vector<1x32xf32>
    %166 = math.tanh %165 : vector<1x32xf32>
    %167 = arith.mulf %161, %166 : vector<1x32xf32>
    %168 = vector.extract_strided_slice %101 {offsets = [3, 0], sizes = [1, 128], strides = [1, 1]} : vector<17x128xf32> to vector<1x128xf32>
    %cst_76 = arith.constant dense<0.000000e+00> : vector<1x128xf32>
    %169 = tpu.matmul %167, %102, %cst_76 {dimension_numbers = #tpu.dot_dimension_numbers<[1], [0], [0], [1], [0, 0, 1, 1], [], []>} : vector<1x32xf32>, vector<32x128xf32>, vector<1x128xf32> -> vector<1x128xf32>
    %170 = arith.addf %168, %169 : vector<1x128xf32>
    %cst_77 = arith.constant 5.000000e-01 : f32
    %171 = vector.broadcast %cst_77 : f32 to vector<1x128xf32>
    %172 = arith.mulf %171, %170 : vector<1x128xf32>
    %173 = tpu.concatenate %172, %170 in 0 : vector<1x128xf32>, vector<1x128xf32> -> vector<2x128xf32>
    %174 = math.tanh %173 : vector<2x128xf32>
    %175 = vector.extract_strided_slice %174 {offsets = [0, 0], sizes = [1, 128], strides = [1, 1]} : vector<2x128xf32> to vector<1x128xf32>
    %cst_78 = arith.constant 5.000000e-01 : f32
    %176 = vector.broadcast %cst_78 : f32 to vector<1x128xf32>
    %177 = arith.mulf %176, %175 : vector<1x128xf32>
    %cst_79 = arith.constant 5.000000e-01 : f32
    %178 = vector.broadcast %cst_79 : f32 to vector<1x128xf32>
    %179 = arith.addf %177, %178 : vector<1x128xf32>
    %180 = vector.extract_strided_slice %179 {offsets = [0, 0], sizes = [1, 32], strides = [1, 1]} : vector<1x128xf32> to vector<1x32xf32>
    %181 = vector.extract_strided_slice %179 {offsets = [0, 32], sizes = [1, 32], strides = [1, 1]} : vector<1x128xf32> to vector<1x32xf32>
    %182 = vector.extract_strided_slice %179 {offsets = [0, 96], sizes = [1, 32], strides = [1, 1]} : vector<1x128xf32> to vector<1x32xf32>
    %183 = vector.extract_strided_slice %174 {offsets = [1, 64], sizes = [1, 32], strides = [1, 1]} : vector<2x128xf32> to vector<1x32xf32>
    %184 = arith.mulf %181, %165 : vector<1x32xf32>
    %185 = arith.mulf %180, %183 : vector<1x32xf32>
    %186 = arith.addf %184, %185 : vector<1x32xf32>
    %187 = math.tanh %186 : vector<1x32xf32>
    %188 = arith.mulf %182, %187 : vector<1x32xf32>
    %189 = vector.extract_strided_slice %101 {offsets = [4, 0], sizes = [1, 128], strides = [1, 1]} : vector<17x128xf32> to vector<1x128xf32>
    %cst_80 = arith.constant dense<0.000000e+00> : vector<1x128xf32>
    %190 = tpu.matmul %188, %102, %cst_80 {dimension_numbers = #tpu.dot_dimension_numbers<[1], [0], [0], [1], [0, 0, 1, 1], [], []>} : vector<1x32xf32>, vector<32x128xf32>, vector<1x128xf32> -> vector<1x128xf32>
    %191 = arith.addf %189, %190 : vector<1x128xf32>
    %cst_81 = arith.constant 5.000000e-01 : f32
    %192 = vector.broadcast %cst_81 : f32 to vector<1x128xf32>
    %193 = arith.mulf %192, %191 : vector<1x128xf32>
    %194 = tpu.concatenate %193, %191 in 0 : vector<1x128xf32>, vector<1x128xf32> -> vector<2x128xf32>
    %195 = math.tanh %194 : vector<2x128xf32>
    %196 = vector.extract_strided_slice %195 {offsets = [0, 0], sizes = [1, 128], strides = [1, 1]} : vector<2x128xf32> to vector<1x128xf32>
    %cst_82 = arith.constant 5.000000e-01 : f32
    %197 = vector.broadcast %cst_82 : f32 to vector<1x128xf32>
    %198 = arith.mulf %197, %196 : vector<1x128xf32>
    %cst_83 = arith.constant 5.000000e-01 : f32
    %199 = vector.broadcast %cst_83 : f32 to vector<1x128xf32>
    %200 = arith.addf %198, %199 : vector<1x128xf32>
    %201 = vector.extract_strided_slice %200 {offsets = [0, 0], sizes = [1, 32], strides = [1, 1]} : vector<1x128xf32> to vector<1x32xf32>
    %202 = vector.extract_strided_slice %200 {offsets = [0, 32], sizes = [1, 32], strides = [1, 1]} : vector<1x128xf32> to vector<1x32xf32>
    %203 = vector.extract_strided_slice %200 {offsets = [0, 96], sizes = [1, 32], strides = [1, 1]} : vector<1x128xf32> to vector<1x32xf32>
    %204 = vector.extract_strided_slice %195 {offsets = [1, 64], sizes = [1, 32], strides = [1, 1]} : vector<2x128xf32> to vector<1x32xf32>
    %205 = arith.mulf %202, %186 : vector<1x32xf32>
    %206 = arith.mulf %201, %204 : vector<1x32xf32>
    %207 = arith.addf %205, %206 : vector<1x32xf32>
    %208 = math.tanh %207 : vector<1x32xf32>
    %209 = arith.mulf %203, %208 : vector<1x32xf32>
    %210 = vector.extract_strided_slice %101 {offsets = [5, 0], sizes = [1, 128], strides = [1, 1]} : vector<17x128xf32> to vector<1x128xf32>
    %cst_84 = arith.constant dense<0.000000e+00> : vector<1x128xf32>
    %211 = tpu.matmul %209, %102, %cst_84 {dimension_numbers = #tpu.dot_dimension_numbers<[1], [0], [0], [1], [0, 0, 1, 1], [], []>} : vector<1x32xf32>, vector<32x128xf32>, vector<1x128xf32> -> vector<1x128xf32>
    %212 = arith.addf %210, %211 : vector<1x128xf32>
    %cst_85 = arith.constant 5.000000e-01 : f32
    %213 = vector.broadcast %cst_85 : f32 to vector<1x128xf32>
    %214 = arith.mulf %213, %212 : vector<1x128xf32>
    %215 = tpu.concatenate %214, %212 in 0 : vector<1x128xf32>, vector<1x128xf32> -> vector<2x128xf32>
    %216 = math.tanh %215 : vector<2x128xf32>
    %217 = vector.extract_strided_slice %216 {offsets = [0, 0], sizes = [1, 128], strides = [1, 1]} : vector<2x128xf32> to vector<1x128xf32>
    %cst_86 = arith.constant 5.000000e-01 : f32
    %218 = vector.broadcast %cst_86 : f32 to vector<1x128xf32>
    %219 = arith.mulf %218, %217 : vector<1x128xf32>
    %cst_87 = arith.constant 5.000000e-01 : f32
    %220 = vector.broadcast %cst_87 : f32 to vector<1x128xf32>
    %221 = arith.addf %219, %220 : vector<1x128xf32>
    %222 = vector.extract_strided_slice %221 {offsets = [0, 0], sizes = [1, 32], strides = [1, 1]} : vector<1x128xf32> to vector<1x32xf32>
    %223 = vector.extract_strided_slice %221 {offsets = [0, 32], sizes = [1, 32], strides = [1, 1]} : vector<1x128xf32> to vector<1x32xf32>
    %224 = vector.extract_strided_slice %221 {offsets = [0, 96], sizes = [1, 32], strides = [1, 1]} : vector<1x128xf32> to vector<1x32xf32>
    %225 = vector.extract_strided_slice %216 {offsets = [1, 64], sizes = [1, 32], strides = [1, 1]} : vector<2x128xf32> to vector<1x32xf32>
    %226 = arith.mulf %223, %207 : vector<1x32xf32>
    %227 = arith.mulf %222, %225 : vector<1x32xf32>
    %228 = arith.addf %226, %227 : vector<1x32xf32>
    %229 = math.tanh %228 : vector<1x32xf32>
    %230 = arith.mulf %224, %229 : vector<1x32xf32>
    %231 = vector.extract_strided_slice %101 {offsets = [6, 0], sizes = [1, 128], strides = [1, 1]} : vector<17x128xf32> to vector<1x128xf32>
    %cst_88 = arith.constant dense<0.000000e+00> : vector<1x128xf32>
    %232 = tpu.matmul %230, %102, %cst_88 {dimension_numbers = #tpu.dot_dimension_numbers<[1], [0], [0], [1], [0, 0, 1, 1], [], []>} : vector<1x32xf32>, vector<32x128xf32>, vector<1x128xf32> -> vector<1x128xf32>
    %233 = arith.addf %231, %232 : vector<1x128xf32>
    %cst_89 = arith.constant 5.000000e-01 : f32
    %234 = vector.broadcast %cst_89 : f32 to vector<1x128xf32>
    %235 = arith.mulf %234, %233 : vector<1x128xf32>
    %236 = tpu.concatenate %235, %233 in 0 : vector<1x128xf32>, vector<1x128xf32> -> vector<2x128xf32>
    %237 = math.tanh %236 : vector<2x128xf32>
    %238 = vector.extract_strided_slice %237 {offsets = [0, 0], sizes = [1, 128], strides = [1, 1]} : vector<2x128xf32> to vector<1x128xf32>
    %cst_90 = arith.constant 5.000000e-01 : f32
    %239 = vector.broadcast %cst_90 : f32 to vector<1x128xf32>
    %240 = arith.mulf %239, %238 : vector<1x128xf32>
    %cst_91 = arith.constant 5.000000e-01 : f32
    %241 = vector.broadcast %cst_91 : f32 to vector<1x128xf32>
    %242 = arith.addf %240, %241 : vector<1x128xf32>
    %243 = vector.extract_strided_slice %242 {offsets = [0, 0], sizes = [1, 32], strides = [1, 1]} : vector<1x128xf32> to vector<1x32xf32>
    %244 = vector.extract_strided_slice %242 {offsets = [0, 32], sizes = [1, 32], strides = [1, 1]} : vector<1x128xf32> to vector<1x32xf32>
    %245 = vector.extract_strided_slice %242 {offsets = [0, 96], sizes = [1, 32], strides = [1, 1]} : vector<1x128xf32> to vector<1x32xf32>
    %246 = vector.extract_strided_slice %237 {offsets = [1, 64], sizes = [1, 32], strides = [1, 1]} : vector<2x128xf32> to vector<1x32xf32>
    %247 = arith.mulf %244, %228 : vector<1x32xf32>
    %248 = arith.mulf %243, %246 : vector<1x32xf32>
    %249 = arith.addf %247, %248 : vector<1x32xf32>
    %250 = math.tanh %249 : vector<1x32xf32>
    %251 = arith.mulf %245, %250 : vector<1x32xf32>
    %252 = vector.extract_strided_slice %101 {offsets = [7, 0], sizes = [1, 128], strides = [1, 1]} : vector<17x128xf32> to vector<1x128xf32>
    %cst_92 = arith.constant dense<0.000000e+00> : vector<1x128xf32>
    %253 = tpu.matmul %251, %102, %cst_92 {dimension_numbers = #tpu.dot_dimension_numbers<[1], [0], [0], [1], [0, 0, 1, 1], [], []>} : vector<1x32xf32>, vector<32x128xf32>, vector<1x128xf32> -> vector<1x128xf32>
    %254 = arith.addf %252, %253 : vector<1x128xf32>
    %cst_93 = arith.constant 5.000000e-01 : f32
    %255 = vector.broadcast %cst_93 : f32 to vector<1x128xf32>
    %256 = arith.mulf %255, %254 : vector<1x128xf32>
    %257 = tpu.concatenate %256, %254 in 0 : vector<1x128xf32>, vector<1x128xf32> -> vector<2x128xf32>
    %258 = math.tanh %257 : vector<2x128xf32>
    %259 = vector.extract_strided_slice %258 {offsets = [0, 0], sizes = [1, 128], strides = [1, 1]} : vector<2x128xf32> to vector<1x128xf32>
    %cst_94 = arith.constant 5.000000e-01 : f32
    %260 = vector.broadcast %cst_94 : f32 to vector<1x128xf32>
    %261 = arith.mulf %260, %259 : vector<1x128xf32>
    %cst_95 = arith.constant 5.000000e-01 : f32
    %262 = vector.broadcast %cst_95 : f32 to vector<1x128xf32>
    %263 = arith.addf %261, %262 : vector<1x128xf32>
    %264 = vector.extract_strided_slice %263 {offsets = [0, 0], sizes = [1, 32], strides = [1, 1]} : vector<1x128xf32> to vector<1x32xf32>
    %265 = vector.extract_strided_slice %263 {offsets = [0, 32], sizes = [1, 32], strides = [1, 1]} : vector<1x128xf32> to vector<1x32xf32>
    %266 = vector.extract_strided_slice %263 {offsets = [0, 96], sizes = [1, 32], strides = [1, 1]} : vector<1x128xf32> to vector<1x32xf32>
    %267 = vector.extract_strided_slice %258 {offsets = [1, 64], sizes = [1, 32], strides = [1, 1]} : vector<2x128xf32> to vector<1x32xf32>
    %268 = arith.mulf %265, %249 : vector<1x32xf32>
    %269 = arith.mulf %264, %267 : vector<1x32xf32>
    %270 = arith.addf %268, %269 : vector<1x32xf32>
    %271 = math.tanh %270 : vector<1x32xf32>
    %272 = arith.mulf %266, %271 : vector<1x32xf32>
    %273 = vector.extract_strided_slice %101 {offsets = [8, 0], sizes = [1, 128], strides = [1, 1]} : vector<17x128xf32> to vector<1x128xf32>
    %cst_96 = arith.constant dense<0.000000e+00> : vector<1x128xf32>
    %274 = tpu.matmul %272, %102, %cst_96 {dimension_numbers = #tpu.dot_dimension_numbers<[1], [0], [0], [1], [0, 0, 1, 1], [], []>} : vector<1x32xf32>, vector<32x128xf32>, vector<1x128xf32> -> vector<1x128xf32>
    %275 = arith.addf %273, %274 : vector<1x128xf32>
    %cst_97 = arith.constant 5.000000e-01 : f32
    %276 = vector.broadcast %cst_97 : f32 to vector<1x128xf32>
    %277 = arith.mulf %276, %275 : vector<1x128xf32>
    %278 = tpu.concatenate %277, %275 in 0 : vector<1x128xf32>, vector<1x128xf32> -> vector<2x128xf32>
    %279 = math.tanh %278 : vector<2x128xf32>
    %280 = vector.extract_strided_slice %279 {offsets = [0, 0], sizes = [1, 128], strides = [1, 1]} : vector<2x128xf32> to vector<1x128xf32>
    %cst_98 = arith.constant 5.000000e-01 : f32
    %281 = vector.broadcast %cst_98 : f32 to vector<1x128xf32>
    %282 = arith.mulf %281, %280 : vector<1x128xf32>
    %cst_99 = arith.constant 5.000000e-01 : f32
    %283 = vector.broadcast %cst_99 : f32 to vector<1x128xf32>
    %284 = arith.addf %282, %283 : vector<1x128xf32>
    %285 = vector.extract_strided_slice %284 {offsets = [0, 0], sizes = [1, 32], strides = [1, 1]} : vector<1x128xf32> to vector<1x32xf32>
    %286 = vector.extract_strided_slice %284 {offsets = [0, 32], sizes = [1, 32], strides = [1, 1]} : vector<1x128xf32> to vector<1x32xf32>
    %287 = vector.extract_strided_slice %284 {offsets = [0, 96], sizes = [1, 32], strides = [1, 1]} : vector<1x128xf32> to vector<1x32xf32>
    %288 = vector.extract_strided_slice %279 {offsets = [1, 64], sizes = [1, 32], strides = [1, 1]} : vector<2x128xf32> to vector<1x32xf32>
    %289 = arith.mulf %286, %270 : vector<1x32xf32>
    %290 = arith.mulf %285, %288 : vector<1x32xf32>
    %291 = arith.addf %289, %290 : vector<1x32xf32>
    %292 = math.tanh %291 : vector<1x32xf32>
    %293 = arith.mulf %287, %292 : vector<1x32xf32>
    %294 = vector.extract_strided_slice %101 {offsets = [9, 0], sizes = [1, 128], strides = [1, 1]} : vector<17x128xf32> to vector<1x128xf32>
    %cst_100 = arith.constant dense<0.000000e+00> : vector<1x128xf32>
    %295 = tpu.matmul %293, %102, %cst_100 {dimension_numbers = #tpu.dot_dimension_numbers<[1], [0], [0], [1], [0, 0, 1, 1], [], []>} : vector<1x32xf32>, vector<32x128xf32>, vector<1x128xf32> -> vector<1x128xf32>
    %296 = arith.addf %294, %295 : vector<1x128xf32>
    %cst_101 = arith.constant 5.000000e-01 : f32
    %297 = vector.broadcast %cst_101 : f32 to vector<1x128xf32>
    %298 = arith.mulf %297, %296 : vector<1x128xf32>
    %299 = tpu.concatenate %298, %296 in 0 : vector<1x128xf32>, vector<1x128xf32> -> vector<2x128xf32>
    %300 = math.tanh %299 : vector<2x128xf32>
    %301 = vector.extract_strided_slice %300 {offsets = [0, 0], sizes = [1, 128], strides = [1, 1]} : vector<2x128xf32> to vector<1x128xf32>
    %cst_102 = arith.constant 5.000000e-01 : f32
    %302 = vector.broadcast %cst_102 : f32 to vector<1x128xf32>
    %303 = arith.mulf %302, %301 : vector<1x128xf32>
    %cst_103 = arith.constant 5.000000e-01 : f32
    %304 = vector.broadcast %cst_103 : f32 to vector<1x128xf32>
    %305 = arith.addf %303, %304 : vector<1x128xf32>
    %306 = vector.extract_strided_slice %305 {offsets = [0, 0], sizes = [1, 32], strides = [1, 1]} : vector<1x128xf32> to vector<1x32xf32>
    %307 = vector.extract_strided_slice %305 {offsets = [0, 32], sizes = [1, 32], strides = [1, 1]} : vector<1x128xf32> to vector<1x32xf32>
    %308 = vector.extract_strided_slice %305 {offsets = [0, 96], sizes = [1, 32], strides = [1, 1]} : vector<1x128xf32> to vector<1x32xf32>
    %309 = vector.extract_strided_slice %300 {offsets = [1, 64], sizes = [1, 32], strides = [1, 1]} : vector<2x128xf32> to vector<1x32xf32>
    %310 = arith.mulf %307, %291 : vector<1x32xf32>
    %311 = arith.mulf %306, %309 : vector<1x32xf32>
    %312 = arith.addf %310, %311 : vector<1x32xf32>
    %313 = math.tanh %312 : vector<1x32xf32>
    %314 = arith.mulf %308, %313 : vector<1x32xf32>
    %315 = vector.extract_strided_slice %101 {offsets = [10, 0], sizes = [1, 128], strides = [1, 1]} : vector<17x128xf32> to vector<1x128xf32>
    %cst_104 = arith.constant dense<0.000000e+00> : vector<1x128xf32>
    %316 = tpu.matmul %314, %102, %cst_104 {dimension_numbers = #tpu.dot_dimension_numbers<[1], [0], [0], [1], [0, 0, 1, 1], [], []>} : vector<1x32xf32>, vector<32x128xf32>, vector<1x128xf32> -> vector<1x128xf32>
    %317 = arith.addf %315, %316 : vector<1x128xf32>
    %cst_105 = arith.constant 5.000000e-01 : f32
    %318 = vector.broadcast %cst_105 : f32 to vector<1x128xf32>
    %319 = arith.mulf %318, %317 : vector<1x128xf32>
    %320 = tpu.concatenate %319, %317 in 0 : vector<1x128xf32>, vector<1x128xf32> -> vector<2x128xf32>
    %321 = math.tanh %320 : vector<2x128xf32>
    %322 = vector.extract_strided_slice %321 {offsets = [0, 0], sizes = [1, 128], strides = [1, 1]} : vector<2x128xf32> to vector<1x128xf32>
    %cst_106 = arith.constant 5.000000e-01 : f32
    %323 = vector.broadcast %cst_106 : f32 to vector<1x128xf32>
    %324 = arith.mulf %323, %322 : vector<1x128xf32>
    %cst_107 = arith.constant 5.000000e-01 : f32
    %325 = vector.broadcast %cst_107 : f32 to vector<1x128xf32>
    %326 = arith.addf %324, %325 : vector<1x128xf32>
    %327 = vector.extract_strided_slice %326 {offsets = [0, 0], sizes = [1, 32], strides = [1, 1]} : vector<1x128xf32> to vector<1x32xf32>
    %328 = vector.extract_strided_slice %326 {offsets = [0, 32], sizes = [1, 32], strides = [1, 1]} : vector<1x128xf32> to vector<1x32xf32>
    %329 = vector.extract_strided_slice %326 {offsets = [0, 96], sizes = [1, 32], strides = [1, 1]} : vector<1x128xf32> to vector<1x32xf32>
    %330 = vector.extract_strided_slice %321 {offsets = [1, 64], sizes = [1, 32], strides = [1, 1]} : vector<2x128xf32> to vector<1x32xf32>
    %331 = arith.mulf %328, %312 : vector<1x32xf32>
    %332 = arith.mulf %327, %330 : vector<1x32xf32>
    %333 = arith.addf %331, %332 : vector<1x32xf32>
    %334 = math.tanh %333 : vector<1x32xf32>
    %335 = arith.mulf %329, %334 : vector<1x32xf32>
    %336 = vector.extract_strided_slice %101 {offsets = [11, 0], sizes = [1, 128], strides = [1, 1]} : vector<17x128xf32> to vector<1x128xf32>
    %cst_108 = arith.constant dense<0.000000e+00> : vector<1x128xf32>
    %337 = tpu.matmul %335, %102, %cst_108 {dimension_numbers = #tpu.dot_dimension_numbers<[1], [0], [0], [1], [0, 0, 1, 1], [], []>} : vector<1x32xf32>, vector<32x128xf32>, vector<1x128xf32> -> vector<1x128xf32>
    %338 = arith.addf %336, %337 : vector<1x128xf32>
    %cst_109 = arith.constant 5.000000e-01 : f32
    %339 = vector.broadcast %cst_109 : f32 to vector<1x128xf32>
    %340 = arith.mulf %339, %338 : vector<1x128xf32>
    %341 = tpu.concatenate %340, %338 in 0 : vector<1x128xf32>, vector<1x128xf32> -> vector<2x128xf32>
    %342 = math.tanh %341 : vector<2x128xf32>
    %343 = vector.extract_strided_slice %342 {offsets = [0, 0], sizes = [1, 128], strides = [1, 1]} : vector<2x128xf32> to vector<1x128xf32>
    %cst_110 = arith.constant 5.000000e-01 : f32
    %344 = vector.broadcast %cst_110 : f32 to vector<1x128xf32>
    %345 = arith.mulf %344, %343 : vector<1x128xf32>
    %cst_111 = arith.constant 5.000000e-01 : f32
    %346 = vector.broadcast %cst_111 : f32 to vector<1x128xf32>
    %347 = arith.addf %345, %346 : vector<1x128xf32>
    %348 = vector.extract_strided_slice %347 {offsets = [0, 0], sizes = [1, 32], strides = [1, 1]} : vector<1x128xf32> to vector<1x32xf32>
    %349 = vector.extract_strided_slice %347 {offsets = [0, 32], sizes = [1, 32], strides = [1, 1]} : vector<1x128xf32> to vector<1x32xf32>
    %350 = vector.extract_strided_slice %347 {offsets = [0, 96], sizes = [1, 32], strides = [1, 1]} : vector<1x128xf32> to vector<1x32xf32>
    %351 = vector.extract_strided_slice %342 {offsets = [1, 64], sizes = [1, 32], strides = [1, 1]} : vector<2x128xf32> to vector<1x32xf32>
    %352 = arith.mulf %349, %333 : vector<1x32xf32>
    %353 = arith.mulf %348, %351 : vector<1x32xf32>
    %354 = arith.addf %352, %353 : vector<1x32xf32>
    %355 = math.tanh %354 : vector<1x32xf32>
    %356 = arith.mulf %350, %355 : vector<1x32xf32>
    %357 = vector.extract_strided_slice %101 {offsets = [12, 0], sizes = [1, 128], strides = [1, 1]} : vector<17x128xf32> to vector<1x128xf32>
    %cst_112 = arith.constant dense<0.000000e+00> : vector<1x128xf32>
    %358 = tpu.matmul %356, %102, %cst_112 {dimension_numbers = #tpu.dot_dimension_numbers<[1], [0], [0], [1], [0, 0, 1, 1], [], []>} : vector<1x32xf32>, vector<32x128xf32>, vector<1x128xf32> -> vector<1x128xf32>
    %359 = arith.addf %357, %358 : vector<1x128xf32>
    %cst_113 = arith.constant 5.000000e-01 : f32
    %360 = vector.broadcast %cst_113 : f32 to vector<1x128xf32>
    %361 = arith.mulf %360, %359 : vector<1x128xf32>
    %362 = tpu.concatenate %361, %359 in 0 : vector<1x128xf32>, vector<1x128xf32> -> vector<2x128xf32>
    %363 = math.tanh %362 : vector<2x128xf32>
    %364 = vector.extract_strided_slice %363 {offsets = [0, 0], sizes = [1, 128], strides = [1, 1]} : vector<2x128xf32> to vector<1x128xf32>
    %cst_114 = arith.constant 5.000000e-01 : f32
    %365 = vector.broadcast %cst_114 : f32 to vector<1x128xf32>
    %366 = arith.mulf %365, %364 : vector<1x128xf32>
    %cst_115 = arith.constant 5.000000e-01 : f32
    %367 = vector.broadcast %cst_115 : f32 to vector<1x128xf32>
    %368 = arith.addf %366, %367 : vector<1x128xf32>
    %369 = vector.extract_strided_slice %368 {offsets = [0, 0], sizes = [1, 32], strides = [1, 1]} : vector<1x128xf32> to vector<1x32xf32>
    %370 = vector.extract_strided_slice %368 {offsets = [0, 32], sizes = [1, 32], strides = [1, 1]} : vector<1x128xf32> to vector<1x32xf32>
    %371 = vector.extract_strided_slice %368 {offsets = [0, 96], sizes = [1, 32], strides = [1, 1]} : vector<1x128xf32> to vector<1x32xf32>
    %372 = vector.extract_strided_slice %363 {offsets = [1, 64], sizes = [1, 32], strides = [1, 1]} : vector<2x128xf32> to vector<1x32xf32>
    %373 = arith.mulf %370, %354 : vector<1x32xf32>
    %374 = arith.mulf %369, %372 : vector<1x32xf32>
    %375 = arith.addf %373, %374 : vector<1x32xf32>
    %376 = math.tanh %375 : vector<1x32xf32>
    %377 = arith.mulf %371, %376 : vector<1x32xf32>
    %378 = vector.extract_strided_slice %101 {offsets = [13, 0], sizes = [1, 128], strides = [1, 1]} : vector<17x128xf32> to vector<1x128xf32>
    %cst_116 = arith.constant dense<0.000000e+00> : vector<1x128xf32>
    %379 = tpu.matmul %377, %102, %cst_116 {dimension_numbers = #tpu.dot_dimension_numbers<[1], [0], [0], [1], [0, 0, 1, 1], [], []>} : vector<1x32xf32>, vector<32x128xf32>, vector<1x128xf32> -> vector<1x128xf32>
    %380 = arith.addf %378, %379 : vector<1x128xf32>
    %cst_117 = arith.constant 5.000000e-01 : f32
    %381 = vector.broadcast %cst_117 : f32 to vector<1x128xf32>
    %382 = arith.mulf %381, %380 : vector<1x128xf32>
    %383 = tpu.concatenate %382, %380 in 0 : vector<1x128xf32>, vector<1x128xf32> -> vector<2x128xf32>
    %384 = math.tanh %383 : vector<2x128xf32>
    %385 = vector.extract_strided_slice %384 {offsets = [0, 0], sizes = [1, 128], strides = [1, 1]} : vector<2x128xf32> to vector<1x128xf32>
    %cst_118 = arith.constant 5.000000e-01 : f32
    %386 = vector.broadcast %cst_118 : f32 to vector<1x128xf32>
    %387 = arith.mulf %386, %385 : vector<1x128xf32>
    %cst_119 = arith.constant 5.000000e-01 : f32
    %388 = vector.broadcast %cst_119 : f32 to vector<1x128xf32>
    %389 = arith.addf %387, %388 : vector<1x128xf32>
    %390 = vector.extract_strided_slice %389 {offsets = [0, 0], sizes = [1, 32], strides = [1, 1]} : vector<1x128xf32> to vector<1x32xf32>
    %391 = vector.extract_strided_slice %389 {offsets = [0, 32], sizes = [1, 32], strides = [1, 1]} : vector<1x128xf32> to vector<1x32xf32>
    %392 = vector.extract_strided_slice %389 {offsets = [0, 96], sizes = [1, 32], strides = [1, 1]} : vector<1x128xf32> to vector<1x32xf32>
    %393 = vector.extract_strided_slice %384 {offsets = [1, 64], sizes = [1, 32], strides = [1, 1]} : vector<2x128xf32> to vector<1x32xf32>
    %394 = arith.mulf %391, %375 : vector<1x32xf32>
    %395 = arith.mulf %390, %393 : vector<1x32xf32>
    %396 = arith.addf %394, %395 : vector<1x32xf32>
    %397 = math.tanh %396 : vector<1x32xf32>
    %398 = arith.mulf %392, %397 : vector<1x32xf32>
    %399 = vector.extract_strided_slice %101 {offsets = [14, 0], sizes = [1, 128], strides = [1, 1]} : vector<17x128xf32> to vector<1x128xf32>
    %cst_120 = arith.constant dense<0.000000e+00> : vector<1x128xf32>
    %400 = tpu.matmul %398, %102, %cst_120 {dimension_numbers = #tpu.dot_dimension_numbers<[1], [0], [0], [1], [0, 0, 1, 1], [], []>} : vector<1x32xf32>, vector<32x128xf32>, vector<1x128xf32> -> vector<1x128xf32>
    %401 = arith.addf %399, %400 : vector<1x128xf32>
    %cst_121 = arith.constant 5.000000e-01 : f32
    %402 = vector.broadcast %cst_121 : f32 to vector<1x128xf32>
    %403 = arith.mulf %402, %401 : vector<1x128xf32>
    %404 = tpu.concatenate %403, %401 in 0 : vector<1x128xf32>, vector<1x128xf32> -> vector<2x128xf32>
    %405 = math.tanh %404 : vector<2x128xf32>
    %406 = vector.extract_strided_slice %405 {offsets = [0, 0], sizes = [1, 128], strides = [1, 1]} : vector<2x128xf32> to vector<1x128xf32>
    %cst_122 = arith.constant 5.000000e-01 : f32
    %407 = vector.broadcast %cst_122 : f32 to vector<1x128xf32>
    %408 = arith.mulf %407, %406 : vector<1x128xf32>
    %cst_123 = arith.constant 5.000000e-01 : f32
    %409 = vector.broadcast %cst_123 : f32 to vector<1x128xf32>
    %410 = arith.addf %408, %409 : vector<1x128xf32>
    %411 = vector.extract_strided_slice %410 {offsets = [0, 0], sizes = [1, 32], strides = [1, 1]} : vector<1x128xf32> to vector<1x32xf32>
    %412 = vector.extract_strided_slice %410 {offsets = [0, 32], sizes = [1, 32], strides = [1, 1]} : vector<1x128xf32> to vector<1x32xf32>
    %413 = vector.extract_strided_slice %410 {offsets = [0, 96], sizes = [1, 32], strides = [1, 1]} : vector<1x128xf32> to vector<1x32xf32>
    %414 = vector.extract_strided_slice %405 {offsets = [1, 64], sizes = [1, 32], strides = [1, 1]} : vector<2x128xf32> to vector<1x32xf32>
    %415 = arith.mulf %412, %396 : vector<1x32xf32>
    %416 = arith.mulf %411, %414 : vector<1x32xf32>
    %417 = arith.addf %415, %416 : vector<1x32xf32>
    %418 = math.tanh %417 : vector<1x32xf32>
    %419 = arith.mulf %413, %418 : vector<1x32xf32>
    %420 = vector.extract_strided_slice %101 {offsets = [15, 0], sizes = [1, 128], strides = [1, 1]} : vector<17x128xf32> to vector<1x128xf32>
    %cst_124 = arith.constant dense<0.000000e+00> : vector<1x128xf32>
    %421 = tpu.matmul %419, %102, %cst_124 {dimension_numbers = #tpu.dot_dimension_numbers<[1], [0], [0], [1], [0, 0, 1, 1], [], []>} : vector<1x32xf32>, vector<32x128xf32>, vector<1x128xf32> -> vector<1x128xf32>
    %422 = arith.addf %420, %421 : vector<1x128xf32>
    %cst_125 = arith.constant 5.000000e-01 : f32
    %423 = vector.broadcast %cst_125 : f32 to vector<1x128xf32>
    %424 = arith.mulf %423, %422 : vector<1x128xf32>
    %425 = tpu.concatenate %424, %422 in 0 : vector<1x128xf32>, vector<1x128xf32> -> vector<2x128xf32>
    %426 = math.tanh %425 : vector<2x128xf32>
    %427 = vector.extract_strided_slice %426 {offsets = [0, 0], sizes = [1, 128], strides = [1, 1]} : vector<2x128xf32> to vector<1x128xf32>
    %cst_126 = arith.constant 5.000000e-01 : f32
    %428 = vector.broadcast %cst_126 : f32 to vector<1x128xf32>
    %429 = arith.mulf %428, %427 : vector<1x128xf32>
    %cst_127 = arith.constant 5.000000e-01 : f32
    %430 = vector.broadcast %cst_127 : f32 to vector<1x128xf32>
    %431 = arith.addf %429, %430 : vector<1x128xf32>
    %432 = vector.extract_strided_slice %431 {offsets = [0, 0], sizes = [1, 32], strides = [1, 1]} : vector<1x128xf32> to vector<1x32xf32>
    %433 = vector.extract_strided_slice %431 {offsets = [0, 32], sizes = [1, 32], strides = [1, 1]} : vector<1x128xf32> to vector<1x32xf32>
    %434 = vector.extract_strided_slice %431 {offsets = [0, 96], sizes = [1, 32], strides = [1, 1]} : vector<1x128xf32> to vector<1x32xf32>
    %435 = vector.extract_strided_slice %426 {offsets = [1, 64], sizes = [1, 32], strides = [1, 1]} : vector<2x128xf32> to vector<1x32xf32>
    %436 = arith.mulf %433, %417 : vector<1x32xf32>
    %437 = arith.mulf %432, %435 : vector<1x32xf32>
    %438 = arith.addf %436, %437 : vector<1x32xf32>
    %439 = math.tanh %438 : vector<1x32xf32>
    %440 = arith.mulf %434, %439 : vector<1x32xf32>
    %441 = vector.extract_strided_slice %101 {offsets = [16, 0], sizes = [1, 128], strides = [1, 1]} : vector<17x128xf32> to vector<1x128xf32>
    %cst_128 = arith.constant dense<0.000000e+00> : vector<1x128xf32>
    %442 = tpu.matmul %440, %102, %cst_128 {dimension_numbers = #tpu.dot_dimension_numbers<[1], [0], [0], [1], [0, 0, 1, 1], [], []>} : vector<1x32xf32>, vector<32x128xf32>, vector<1x128xf32> -> vector<1x128xf32>
    %443 = arith.addf %441, %442 : vector<1x128xf32>
    %cst_129 = arith.constant 5.000000e-01 : f32
    %444 = vector.broadcast %cst_129 : f32 to vector<1x128xf32>
    %445 = arith.mulf %444, %443 : vector<1x128xf32>
    %446 = tpu.concatenate %445, %443 in 0 : vector<1x128xf32>, vector<1x128xf32> -> vector<2x128xf32>
    %447 = math.tanh %446 : vector<2x128xf32>
    %448 = vector.extract_strided_slice %447 {offsets = [0, 0], sizes = [1, 128], strides = [1, 1]} : vector<2x128xf32> to vector<1x128xf32>
    %cst_130 = arith.constant 5.000000e-01 : f32
    %449 = vector.broadcast %cst_130 : f32 to vector<1x128xf32>
    %450 = arith.mulf %449, %448 : vector<1x128xf32>
    %cst_131 = arith.constant 5.000000e-01 : f32
    %451 = vector.broadcast %cst_131 : f32 to vector<1x128xf32>
    %452 = arith.addf %450, %451 : vector<1x128xf32>
    %453 = vector.extract_strided_slice %452 {offsets = [0, 0], sizes = [1, 32], strides = [1, 1]} : vector<1x128xf32> to vector<1x32xf32>
    %454 = vector.extract_strided_slice %452 {offsets = [0, 32], sizes = [1, 32], strides = [1, 1]} : vector<1x128xf32> to vector<1x32xf32>
    %455 = vector.extract_strided_slice %452 {offsets = [0, 96], sizes = [1, 32], strides = [1, 1]} : vector<1x128xf32> to vector<1x32xf32>
    %456 = vector.extract_strided_slice %447 {offsets = [1, 64], sizes = [1, 32], strides = [1, 1]} : vector<2x128xf32> to vector<1x32xf32>
    %457 = arith.mulf %454, %438 : vector<1x32xf32>
    %458 = arith.mulf %453, %456 : vector<1x32xf32>
    %459 = arith.addf %457, %458 : vector<1x32xf32>
    %460 = math.tanh %459 : vector<1x32xf32>
    %461 = arith.mulf %455, %460 : vector<1x32xf32>
    %c0_132 = arith.constant 0 : index
    %c0_133 = arith.constant 0 : index
    %462 = vector.load %arg13[%c0_132, %c0_133] : memref<32x128xf32, #tpu.memory_space<vmem>>, vector<32x128xf32>
    %cst_134 = arith.constant dense<0.000000e+00> : vector<1x128xf32>
    %463 = tpu.matmul %461, %462, %cst_134 {dimension_numbers = #tpu.dot_dimension_numbers<[1], [0], [0], [1], [0, 0, 1, 1], [], []>} : vector<1x32xf32>, vector<32x128xf32>, vector<1x128xf32> -> vector<1x128xf32>
    %c0_135 = arith.constant 0 : index
    %c0_136 = arith.constant 0 : index
    %464 = vector.load %arg14[%c0_135, %c0_136] : memref<1x128xf32, #tpu.memory_space<vmem>>, vector<1x128xf32>
    %465 = arith.addf %463, %464 : vector<1x128xf32>
    %466 = vector.shape_cast %465 : vector<1x128xf32> to vector<1x1x128xf32>
    %c0_137 = arith.constant 0 : index
    %c0_138 = arith.constant 0 : index
    %c0_139 = arith.constant 0 : index
    %467 = vector.load %arg15[%c0_137, %c0_138, %c0_139] : memref<1x1x128xf32, #tpu.memory_space<vmem>>, vector<1x1x128xf32>
    tpu.vector_store %arg15[%c0_137, %c0_138, %c0_139], %466 {strides = array<i32>} : memref<1x1x128xf32, #tpu.memory_space<vmem>>, vector<1x1x128xf32>,
    return
  }
  func.func @transform_0(%arg0: i32) -> (i32, i32, i32) {
    %c0_i32 = arith.constant 0 : i32
    %c0_i32_0 = arith.constant 0 : i32
    %c0_i32_1 = arith.constant 0 : i32
    return %arg0, %c0_i32, %c0_i32_0 : i32, i32, i32
  }
  func.func @transform_1(%arg0: i32) -> (i32, i32, i32) {
    %c0_i32 = arith.constant 0 : i32
    %c0_i32_0 = arith.constant 0 : i32
    %c0_i32_1 = arith.constant 0 : i32
    %c0_i32_2 = arith.constant 0 : i32
    return %c0_i32, %c0_i32_0, %c0_i32_1 : i32, i32, i32
  }
  func.func @transform_2(%arg0: i32) -> (i32, i32) {
    %c0_i32 = arith.constant 0 : i32
    %c0_i32_0 = arith.constant 0 : i32
    %c0_i32_1 = arith.constant 0 : i32
    return %c0_i32, %c0_i32_0 : i32, i32
  }
  func.func @transform_3(%arg0: i32) -> (i32, i32) {
    %c0_i32 = arith.constant 0 : i32
    %c0_i32_0 = arith.constant 0 : i32
    %c0_i32_1 = arith.constant 0 : i32
    return %c0_i32, %c0_i32_0 : i32, i32
  }
  func.func @transform_4(%arg0: i32) -> (i32, i32) {
    %c0_i32 = arith.constant 0 : i32
    %c0_i32_0 = arith.constant 0 : i32
    %c0_i32_1 = arith.constant 0 : i32
    return %c0_i32, %c0_i32_0 : i32, i32
  }
  func.func @transform_5(%arg0: i32) -> (i32, i32, i32) {
    %c0_i32 = arith.constant 0 : i32
    %c0_i32_0 = arith.constant 0 : i32
    %c0_i32_1 = arith.constant 0 : i32
    %c0_i32_2 = arith.constant 0 : i32
    return %c0_i32, %c0_i32_0, %c0_i32_1 : i32, i32, i32
  }
  func.func @transform_6(%arg0: i32) -> (i32, i32) {
    %c0_i32 = arith.constant 0 : i32
    %c0_i32_0 = arith.constant 0 : i32
    %c0_i32_1 = arith.constant 0 : i32
    return %c0_i32, %c0_i32_0 : i32, i32
  }
  func.func @transform_7(%arg0: i32) -> (i32, i32) {
    %c0_i32 = arith.constant 0 : i32
    %c0_i32_0 = arith.constant 0 : i32
    %c0_i32_1 = arith.constant 0 : i32
    return %c0_i32, %c0_i32_0 : i32, i32
  }
  func.func @transform_8(%arg0: i32) -> (i32, i32) {
    %c0_i32 = arith.constant 0 : i32
    %c0_i32_0 = arith.constant 0 : i32
    %c0_i32_1 = arith.constant 0 : i32
    return %c0_i32, %c0_i32_0 : i32, i32
  }
  func.func @transform_9(%arg0: i32) -> (i32, i32) {
    %c0_i32 = arith.constant 0 : i32
    %c0_i32_0 = arith.constant 0 : i32
    %c0_i32_1 = arith.constant 0 : i32
    return %c0_i32, %c0_i32_0 : i32, i32
  }
  func.func @transform_10(%arg0: i32) -> (i32, i32) {
    %c0_i32 = arith.constant 0 : i32
    %c0_i32_0 = arith.constant 0 : i32
    %c0_i32_1 = arith.constant 0 : i32
    return %c0_i32, %c0_i32_0 : i32, i32
  }
  func.func @transform_11(%arg0: i32) -> (i32, i32) {
    %c0_i32 = arith.constant 0 : i32
    %c0_i32_0 = arith.constant 0 : i32
    %c0_i32_1 = arith.constant 0 : i32
    return %c0_i32, %c0_i32_0 : i32, i32
  }
  func.func @transform_12(%arg0: i32) -> (i32, i32) {
    %c0_i32 = arith.constant 0 : i32
    %c0_i32_0 = arith.constant 0 : i32
    %c0_i32_1 = arith.constant 0 : i32
    return %c0_i32, %c0_i32_0 : i32, i32
  }
  func.func @transform_13(%arg0: i32) -> (i32, i32) {
    %c0_i32 = arith.constant 0 : i32
    %c0_i32_0 = arith.constant 0 : i32
    %c0_i32_1 = arith.constant 0 : i32
    return %c0_i32, %c0_i32_0 : i32, i32
  }
  func.func @transform_14(%arg0: i32) -> (i32, i32, i32) {
    %c0_i32 = arith.constant 0 : i32
    %c0_i32_0 = arith.constant 0 : i32
    %c0_i32_1 = arith.constant 0 : i32
    return %arg0, %c0_i32, %c0_i32_0 : i32, i32, i32
  }
}

</mosaic_0001>

<llo_original>
// kernel: conv_to_lstm_net.1
$region0: #{conv_to_lstm_net.1}
  #allocation0 [shape = 'u32[]', space=smem, size = 0x4, offset = 0x4, fixed_abs, tag = 'smem constant byte address 0x4 - core index']
  #allocation1 [shape = 'u32[72,128]{1,0:T(1,128)}', space=vmem, size = 0x9000, scoped, tag = 'internal scratch']
  %s0 = inlined_call_operand.vmem [shape: bf16[2,64,64], index: 0, kind: input, shape index: {}]
  %s1 = inlined_call_operand.vmem [shape: bf16[3,64,32], index: 1, kind: input, shape index: {}]
  %s2 = inlined_call_operand.vmem [shape: f32[1,32], index: 2, kind: input, shape index: {}]
  %s3 = inlined_call_operand.vmem [shape: f32[1,32], index: 3, kind: input, shape index: {}]
  %s4 = inlined_call_operand.vmem [shape: f32[34,68], index: 4, kind: input, shape index: {}]
  %s5 = inlined_call_operand.vmem [shape: bf16[3,32,32], index: 5, kind: input, shape index: {}]
  %s6 = inlined_call_operand.vmem [shape: f32[1,32], index: 6, kind: input, shape index: {}]
  %s7 = inlined_call_operand.vmem [shape: f32[1,32], index: 7, kind: input, shape index: {}]
  %s8 = inlined_call_operand.vmem [shape: f32[17,34], index: 8, kind: input, shape index: {}]
  %s9 = inlined_call_operand.vmem [shape: f32[32,128], index: 9, kind: input, shape index: {}]
  %s10 = inlined_call_operand.vmem [shape: f32[32,128], index: 10, kind: input, shape index: {}]
  %s11 = inlined_call_operand.vmem [shape: f32[1,128], index: 11, kind: input, shape index: {}]
  %s12 = inlined_call_operand.vmem [shape: f32[32,128], index: 12, kind: input, shape index: {}]
  %s13 = inlined_call_operand.vmem [shape: f32[1,128], index: 13, kind: input, shape index: {}]
  %s14 = inlined_call_operand.hbm [shape: f32[2,1,128], index: 14, kind: output, shape index: {}]
  %s15 = sld [smem:[#allocation0]]
  $region89: #{conv_to_lstm_net.1} parent=0
    _
  %s17 = ssub.s32 1, %s15
  %s18 = scalar_select 0, %s17, %s15
  $region1: #{conv_to_lstm_net.1} parent=0
    #allocation2 [shape = 'u8[1024]{0}', space=vmem, size = 0x400, scoped, tag = 'output window, operand 0']
    #allocation3 [shape = 's32[2]{0}', space=sflag, size = 0x8, scoped, tag = 'scoped memory for conv_to_lstm_net.1']
    %19 = vsyncpa [#allocation3], 0
    %s20 = scalar_lea.sflag [#allocation3], 1
    %21 = vsyncpa %s20, 0
    loop: start=0, step=1, limit=4
    $region2: #{conv_to_lstm_net.1} parent=1 // loop_pre_header
      _
    $region3: #{conv_to_lstm_net.1} parent=1 // loop_header
      %s23 = sphi 0, %s27
      %p24 = scmp.ge.s32.totalorder %s23, 4
      %s33 = sphi 0, %s35
      %s36 = sphi 0, %s33
      %s37 = sphi 0, %s36
      %s53 = sphi 0, %s37
      %s57 = sphi 0, %s57
      %s59 = sphi 0, %s57
      %s60 = sphi 0, %s59
      %s74 = sphi 0, %s60
      %s78 = sphi 0, %s78
      %s80 = sphi 0, %s78
      %s81 = sphi 0, %s80
      %s95 = sphi 0, %s81
      %s99 = sphi 0, %s99
      %s101 = sphi 0, %s99
      %s102 = sphi 0, %s101
      %s116 = sphi 0, %s102
      %s120 = sphi 0, %s120
      %s122 = sphi 0, %s120
      %s123 = sphi 0, %s122
      %s137 = sphi 0, %s123
      %s141 = sphi 0, %s141
      %s143 = sphi 0, %s141
      %s144 = sphi 0, %s143
      %s158 = sphi 0, %s144
      %s162 = sphi 0, %s162
      %s164 = sphi 0, %s162
      %s165 = sphi 0, %s164
      %s179 = sphi 0, %s165
      %s183 = sphi 0, %s183
      %s185 = sphi 0, %s183
      %s186 = sphi 0, %s185
      %s200 = sphi 0, %s186
      %s204 = sphi 0, %s204
      %s206 = sphi 0, %s204
      %s207 = sphi 0, %s206
      %s221 = sphi 0, %s207
      %s225 = sphi 0, %s225
      %s227 = sphi 0, %s225
      %s228 = sphi 0, %s227
      %s242 = sphi 0, %s228
      %s246 = sphi 0, %s246
      %s248 = sphi 0, %s246
      %s249 = sphi 0, %s248
      %s263 = sphi 0, %s249
      %s267 = sphi 0, %s267
      %s269 = sphi 0, %s267
      %s270 = sphi 0, %s269
      %s284 = sphi 0, %s270
      %s288 = sphi 0, %s288
      %s290 = sphi 0, %s288
      %s291 = sphi 0, %s290
      %s305 = sphi 0, %s291
      %s309 = sphi 0, %s309
      %s311 = sphi 0, %s309
      %s312 = sphi 0, %s311
      %s326 = sphi 0, %s312
      %s332 = sphi 0, %s334
      %s335 = sphi 0, %s332
      %s336 = sphi 0, %s335
      %s352 = sphi 0, %s336
    $region4: #{conv_to_lstm_net.1} parent=1 // loop_header_branch
      %26 = sbr.rel (%p24) target = $region8
    $region5: #{conv_to_lstm_net.1} parent=1 // loop_body
      %s28 = ssub.s32 %s23, 1
      %s29 = ssub.s32 %s23, 2
      %s30 = sadd.s32 %s23, 1
      %s31 = ssub.s32 %s23, %s30
      %p32 = scmp.eq.s32.totalorder %s31, 0
      %s34 = sadd.s32 %s33, 1
      %s35 = scalar_select %p32, %s33, %s34
      %p38 = pneg %p32
      %p39 = scmp.eq.s32.totalorder %s23, 1
      %p40 = por %p38, %p39
      %p41 = scmp.ne.s32.totalorder %s33, %s36
      %p42 = scmp.eq.s32.totalorder %s23, 0
      %p43 = por %p41, %p42
      %p44 = scmp.ne.s32.totalorder %s33, %s36
      %p45 = scmp.eq.s32.totalorder %s28, 1
      %p46 = por %p44, %p45
      %p47 = scmp.ne.s32.totalorder %s36, %s37
      %p48 = scmp.eq.s32.totalorder %s28, 0
      %p49 = por %p47, %p48
      %p50 = scmp.ne.s32.totalorder %s36, %s37
      %p51 = scmp.eq.s32.totalorder %s29, 1
      %p52 = por %p50, %p51
      %p54 = scmp.ne.s32.totalorder %s37, %s53
      %p55 = scmp.eq.s32.totalorder %s29, 0
      %p56 = por %p54, %p55
      %s58 = sadd.s32 %s57, 1
      %p61 = scmp.eq.s32.totalorder %s23, 1
      %p62 = scmp.ne.s32.totalorder %s57, %s59
      %p63 = scmp.eq.s32.totalorder %s23, 0
      %p64 = por %p62, %p63
      %p65 = scmp.ne.s32.totalorder %s57, %s59
      %p66 = scmp.eq.s32.totalorder %s28, 1
      %p67 = por %p65, %p66
      %p68 = scmp.ne.s32.totalorder %s59, %s60
      %p69 = scmp.eq.s32.totalorder %s28, 0
      %p70 = por %p68, %p69
      %p71 = scmp.ne.s32.totalorder %s59, %s60
      %p72 = scmp.eq.s32.totalorder %s29, 1
      %p73 = por %p71, %p72
      %p75 = scmp.ne.s32.totalorder %s60, %s74
      %p76 = scmp.eq.s32.totalorder %s29, 0
      %p77 = por %p75, %p76
      %s79 = sadd.s32 %s78, 1
      %p82 = scmp.eq.s32.totalorder %s23, 1
      %p83 = scmp.ne.s32.totalorder %s78, %s80
      %p84 = scmp.eq.s32.totalorder %s23, 0
      %p85 = por %p83, %p84
      %p86 = scmp.ne.s32.totalorder %s78, %s80
      %p87 = scmp.eq.s32.totalorder %s28, 1
      %p88 = por %p86, %p87
      %p89 = scmp.ne.s32.totalorder %s80, %s81
      %p90 = scmp.eq.s32.totalorder %s28, 0
      %p91 = por %p89, %p90
      %p92 = scmp.ne.s32.totalorder %s80, %s81
      %p93 = scmp.eq.s32.totalorder %s29, 1
      %p94 = por %p92, %p93
      %p96 = scmp.ne.s32.totalorder %s81, %s95
      %p97 = scmp.eq.s32.totalorder %s29, 0
      %p98 = por %p96, %p97
      %s100 = sadd.s32 %s99, 1
      %p103 = scmp.eq.s32.totalorder %s23, 1
      %p104 = scmp.ne.s32.totalorder %s99, %s101
      %p105 = scmp.eq.s32.totalorder %s23, 0
      %p106 = por %p104, %p105
      %p107 = scmp.ne.s32.totalorder %s99, %s101
      %p108 = scmp.eq.s32.totalorder %s28, 1
      %p109 = por %p107, %p108
      %p110 = scmp.ne.s32.totalorder %s101, %s102
      %p111 = scmp.eq.s32.totalorder %s28, 0
      %p112 = por %p110, %p111
      %p113 = scmp.ne.s32.totalorder %s101, %s102
      %p114 = scmp.eq.s32.totalorder %s29, 1
      %p115 = por %p113, %p114
      %p117 = scmp.ne.s32.totalorder %s102, %s116
      %p118 = scmp.eq.s32.totalorder %s29, 0
      %p119 = por %p117, %p118
      %s121 = sadd.s32 %s120, 1
      %p124 = scmp.eq.s32.totalorder %s23, 1
      %p125 = scmp.ne.s32.totalorder %s120, %s122
      %p126 = scmp.eq.s32.totalorder %s23, 0
      %p127 = por %p125, %p126
      %p128 = scmp.ne.s32.totalorder %s120, %s122
      %p129 = scmp.eq.s32.totalorder %s28, 1
      %p130 = por %p128, %p129
      %p131 = scmp.ne.s32.totalorder %s122, %s123
      %p132 = scmp.eq.s32.totalorder %s28, 0
      %p133 = por %p131, %p132
      %p134 = scmp.ne.s32.totalorder %s122, %s123
      %p135 = scmp.eq.s32.totalorder %s29, 1
      %p136 = por %p134, %p135
      %p138 = scmp.ne.s32.totalorder %s123, %s137
      %p139 = scmp.eq.s32.totalorder %s29, 0
      %p140 = por %p138, %p139
      %s142 = sadd.s32 %s141, 1
      %p145 = scmp.eq.s32.totalorder %s23, 1
      %p146 = scmp.ne.s32.totalorder %s141, %s143
      %p147 = scmp.eq.s32.totalorder %s23, 0
      %p148 = por %p146, %p147
      %p149 = scmp.ne.s32.totalorder %s141, %s143
      %p150 = scmp.eq.s32.totalorder %s28, 1
      %p151 = por %p149, %p150
      %p152 = scmp.ne.s32.totalorder %s143, %s144
      %p153 = scmp.eq.s32.totalorder %s28, 0
      %p154 = por %p152, %p153
      %p155 = scmp.ne.s32.totalorder %s143, %s144
      %p156 = scmp.eq.s32.totalorder %s29, 1
      %p157 = por %p155, %p156
      %p159 = scmp.ne.s32.totalorder %s144, %s158
      %p160 = scmp.eq.s32.totalorder %s29, 0
      %p161 = por %p159, %p160
      %s163 = sadd.s32 %s162, 1
      %p166 = scmp.eq.s32.totalorder %s23, 1
      %p167 = scmp.ne.s32.totalorder %s162, %s164
      %p168 = scmp.eq.s32.totalorder %s23, 0
      %p169 = por %p167, %p168
      %p170 = scmp.ne.s32.totalorder %s162, %s164
      %p171 = scmp.eq.s32.totalorder %s28, 1
      %p172 = por %p170, %p171
      %p173 = scmp.ne.s32.totalorder %s164, %s165
      %p174 = scmp.eq.s32.totalorder %s28, 0
      %p175 = por %p173, %p174
      %p176 = scmp.ne.s32.totalorder %s164, %s165
      %p177 = scmp.eq.s32.totalorder %s29, 1
      %p178 = por %p176, %p177
      %p180 = scmp.ne.s32.totalorder %s165, %s179
      %p181 = scmp.eq.s32.totalorder %s29, 0
      %p182 = por %p180, %p181
      %s184 = sadd.s32 %s183, 1
      %p187 = scmp.eq.s32.totalorder %s23, 1
      %p188 = scmp.ne.s32.totalorder %s183, %s185
      %p189 = scmp.eq.s32.totalorder %s23, 0
      %p190 = por %p188, %p189
      %p191 = scmp.ne.s32.totalorder %s183, %s185
      %p192 = scmp.eq.s32.totalorder %s28, 1
      %p193 = por %p191, %p192
      %p194 = scmp.ne.s32.totalorder %s185, %s186
      %p195 = scmp.eq.s32.totalorder %s28, 0
      %p196 = por %p194, %p195
      %p197 = scmp.ne.s32.totalorder %s185, %s186
      %p198 = scmp.eq.s32.totalorder %s29, 1
      %p199 = por %p197, %p198
      %p201 = scmp.ne.s32.totalorder %s186, %s200
      %p202 = scmp.eq.s32.totalorder %s29, 0
      %p203 = por %p201, %p202
      %s205 = sadd.s32 %s204, 1
      %p208 = scmp.eq.s32.totalorder %s23, 1
      %p209 = scmp.ne.s32.totalorder %s204, %s206
      %p210 = scmp.eq.s32.totalorder %s23, 0
      %p211 = por %p209, %p210
      %p212 = scmp.ne.s32.totalorder %s204, %s206
      %p213 = scmp.eq.s32.totalorder %s28, 1
      %p214 = por %p212, %p213
      %p215 = scmp.ne.s32.totalorder %s206, %s207
      %p216 = scmp.eq.s32.totalorder %s28, 0
      %p217 = por %p215, %p216
      %p218 = scmp.ne.s32.totalorder %s206, %s207
      %p219 = scmp.eq.s32.totalorder %s29, 1
      %p220 = por %p218, %p219
      %p222 = scmp.ne.s32.totalorder %s207, %s221
      %p223 = scmp.eq.s32.totalorder %s29, 0
      %p224 = por %p222, %p223
      %s226 = sadd.s32 %s225, 1
      %p229 = scmp.eq.s32.totalorder %s23, 1
      %p230 = scmp.ne.s32.totalorder %s225, %s227
      %p231 = scmp.eq.s32.totalorder %s23, 0
      %p232 = por %p230, %p231
      %p233 = scmp.ne.s32.totalorder %s225, %s227
      %p234 = scmp.eq.s32.totalorder %s28, 1
      %p235 = por %p233, %p234
      %p236 = scmp.ne.s32.totalorder %s227, %s228
      %p237 = scmp.eq.s32.totalorder %s28, 0
      %p238 = por %p236, %p237
      %p239 = scmp.ne.s32.totalorder %s227, %s228
      %p240 = scmp.eq.s32.totalorder %s29, 1
      %p241 = por %p239, %p240
      %p243 = scmp.ne.s32.totalorder %s228, %s242
      %p244 = scmp.eq.s32.totalorder %s29, 0
      %p245 = por %p243, %p244
      %s247 = sadd.s32 %s246, 1
      %p250 = scmp.eq.s32.totalorder %s23, 1
      %p251 = scmp.ne.s32.totalorder %s246, %s248
      %p252 = scmp.eq.s32.totalorder %s23, 0
      %p253 = por %p251, %p252
      %p254 = scmp.ne.s32.totalorder %s246, %s248
      %p255 = scmp.eq.s32.totalorder %s28, 1
      %p256 = por %p254, %p255
      %p257 = scmp.ne.s32.totalorder %s248, %s249
      %p258 = scmp.eq.s32.totalorder %s28, 0
      %p259 = por %p257, %p258
      %p260 = scmp.ne.s32.totalorder %s248, %s249
      %p261 = scmp.eq.s32.totalorder %s29, 1
      %p262 = por %p260, %p261
      %p264 = scmp.ne.s32.totalorder %s249, %s263
      %p265 = scmp.eq.s32.totalorder %s29, 0
      %p266 = por %p264, %p265
      %s268 = sadd.s32 %s267, 1
      %p271 = scmp.eq.s32.totalorder %s23, 1
      %p272 = scmp.ne.s32.totalorder %s267, %s269
      %p273 = scmp.eq.s32.totalorder %s23, 0
      %p274 = por %p272, %p273
      %p275 = scmp.ne.s32.totalorder %s267, %s269
      %p276 = scmp.eq.s32.totalorder %s28, 1
      %p277 = por %p275, %p276
      %p278 = scmp.ne.s32.totalorder %s269, %s270
      %p279 = scmp.eq.s32.totalorder %s28, 0
      %p280 = por %p278, %p279
      %p281 = scmp.ne.s32.totalorder %s269, %s270
      %p282 = scmp.eq.s32.totalorder %s29, 1
      %p283 = por %p281, %p282
      %p285 = scmp.ne.s32.totalorder %s270, %s284
      %p286 = scmp.eq.s32.totalorder %s29, 0
      %p287 = por %p285, %p286
      %s289 = sadd.s32 %s288, 1
      %p292 = scmp.eq.s32.totalorder %s23, 1
      %p293 = scmp.ne.s32.totalorder %s288, %s290
      %p294 = scmp.eq.s32.totalorder %s23, 0
      %p295 = por %p293, %p294
      %p296 = scmp.ne.s32.totalorder %s288, %s290
      %p297 = scmp.eq.s32.totalorder %s28, 1
      %p298 = por %p296, %p297
      %p299 = scmp.ne.s32.totalorder %s290, %s291
      %p300 = scmp.eq.s32.totalorder %s28, 0
      %p301 = por %p299, %p300
      %p302 = scmp.ne.s32.totalorder %s290, %s291
      %p303 = scmp.eq.s32.totalorder %s29, 1
      %p304 = por %p302, %p303
      %p306 = scmp.ne.s32.totalorder %s291, %s305
      %p307 = scmp.eq.s32.totalorder %s29, 0
      %p308 = por %p306, %p307
      %s310 = sadd.s32 %s309, 1
      %p313 = scmp.eq.s32.totalorder %s23, 1
      %p314 = scmp.ne.s32.totalorder %s309, %s311
      %p315 = scmp.eq.s32.totalorder %s23, 0
      %p316 = por %p314, %p315
      %p317 = scmp.ne.s32.totalorder %s309, %s311
      %p318 = scmp.eq.s32.totalorder %s28, 1
      %p319 = por %p317, %p318
      %p320 = scmp.ne.s32.totalorder %s311, %s312
      %p321 = scmp.eq.s32.totalorder %s28, 0
      %p322 = por %p320, %p321
      %p323 = scmp.ne.s32.totalorder %s311, %s312
      %p324 = scmp.eq.s32.totalorder %s29, 1
      %p325 = por %p323, %p324
      %p327 = scmp.ne.s32.totalorder %s312, %s326
      %p328 = scmp.eq.s32.totalorder %s29, 0
      %p329 = por %p327, %p328
      %s330 = ssub.s32 %s23, %s30
      %p331 = scmp.eq.s32.totalorder %s330, 0
      %s333 = sadd.s32 %s332, 1
      %s334 = scalar_select %p331, %s332, %s333
      %p337 = pneg %p331
      %p338 = scmp.eq.s32.totalorder %s23, 1
      %p339 = por %p337, %p338
      %p340 = scmp.ne.s32.totalorder %s332, %s335
      %p341 = scmp.eq.s32.totalorder %s23, 0
      %p342 = por %p340, %p341
      %p343 = scmp.ne.s32.totalorder %s332, %s335
      %p344 = scmp.eq.s32.totalorder %s28, 1
      %p345 = por %p343, %p344
      %p346 = scmp.ne.s32.totalorder %s335, %s336
      %p347 = scmp.eq.s32.totalorder %s28, 0
      %p348 = por %p346, %p347
      %p349 = scmp.ne.s32.totalorder %s335, %s336
      %p350 = scmp.eq.s32.totalorder %s29, 1
      %p351 = por %p349, %p350
      %p353 = scmp.ne.s32.totalorder %s336, %s352
      %p354 = scmp.eq.s32.totalorder %s29, 0
      %p355 = por %p353, %p354
      %p356 = scmp.le.s32.totalorder 1, %s23
      %p357 = scmp.lt.s32.totalorder %s23, 3
      %p358 = pnand %p356, %p357
      %p359 = pneg %p358
      // Predicated region
      $region9: #{conv_to_lstm_net.1} parent=5 // pred_check
        _
      $region10: #{conv_to_lstm_net.1} parent=5 // pred_check_branch
        %361 = sbr.rel (%p358) target = $region12
      $region11: #{conv_to_lstm_net.1} parent=5 // pred_region
        %s362 = ssub.s32 %s23, 1
        // Predicated region
        $region13: #{conv_to_lstm_net.1} parent=11 // pred_check
          %p363 = pneg %p70
        $region14: #{conv_to_lstm_net.1} parent=11 // pred_check_branch
          %365 = sbr.rel (%p363) target = $region16
        $region15: #{conv_to_lstm_net.1} parent=11 // pred_region
          _
        $region16: #{conv_to_lstm_net.1} parent=11 // pred_fallthru
          _
        // Predicated region
        $region17: #{conv_to_lstm_net.1} parent=11 // pred_check
          %p366 = pneg %p91
        $region18: #{conv_to_lstm_net.1} parent=11 // pred_check_branch
          %368 = sbr.rel (%p366) target = $region20
        $region19: #{conv_to_lstm_net.1} parent=11 // pred_region
          _
        $region20: #{conv_to_lstm_net.1} parent=11 // pred_fallthru
          _
        // Predicated region
        $region21: #{conv_to_lstm_net.1} parent=11 // pred_check
          %p369 = pneg %p112
        $region22: #{conv_to_lstm_net.1} parent=11 // pred_check_branch
          %371 = sbr.rel (%p369) target = $region24
        $region23: #{conv_to_lstm_net.1} parent=11 // pred_region
          _
        $region24: #{conv_to_lstm_net.1} parent=11 // pred_fallthru
          _
        // Predicated region
        $region25: #{conv_to_lstm_net.1} parent=11 // pred_check
          %p372 = pneg %p133
        $region26: #{conv_to_lstm_net.1} parent=11 // pred_check_branch
          %374 = sbr.rel (%p372) target = $region28
        $region27: #{conv_to_lstm_net.1} parent=11 // pred_region
          _
        $region28: #{conv_to_lstm_net.1} parent=11 // pred_fallthru
          _
        // Predicated region
        $region29: #{conv_to_lstm_net.1} parent=11 // pred_check
          %p375 = pneg %p154
        $region30: #{conv_to_lstm_net.1} parent=11 // pred_check_branch
          %377 = sbr.rel (%p375) target = $region32
        $region31: #{conv_to_lstm_net.1} parent=11 // pred_region
          _
        $region32: #{conv_to_lstm_net.1} parent=11 // pred_fallthru
          _
        // Predicated region
        $region33: #{conv_to_lstm_net.1} parent=11 // pred_check
          %p378 = pneg %p175
        $region34: #{conv_to_lstm_net.1} parent=11 // pred_check_branch
          %380 = sbr.rel (%p378) target = $region36
        $region35: #{conv_to_lstm_net.1} parent=11 // pred_region
          _
        $region36: #{conv_to_lstm_net.1} parent=11 // pred_fallthru
          _
        // Predicated region
        $region37: #{conv_to_lstm_net.1} parent=11 // pred_check
          %p381 = pneg %p196
        $region38: #{conv_to_lstm_net.1} parent=11 // pred_check_branch
          %383 = sbr.rel (%p381) target = $region40
        $region39: #{conv_to_lstm_net.1} parent=11 // pred_region
          _
        $region40: #{conv_to_lstm_net.1} parent=11 // pred_fallthru
          _
        // Predicated region
        $region41: #{conv_to_lstm_net.1} parent=11 // pred_check
          %p384 = pneg %p217
        $region42: #{conv_to_lstm_net.1} parent=11 // pred_check_branch
          %386 = sbr.rel (%p384) target = $region44
        $region43: #{conv_to_lstm_net.1} parent=11 // pred_region
          _
        $region44: #{conv_to_lstm_net.1} parent=11 // pred_fallthru
          _
        // Predicated region
        $region45: #{conv_to_lstm_net.1} parent=11 // pred_check
          %p387 = pneg %p238
        $region46: #{conv_to_lstm_net.1} parent=11 // pred_check_branch
          %389 = sbr.rel (%p387) target = $region48
        $region47: #{conv_to_lstm_net.1} parent=11 // pred_region
          _
        $region48: #{conv_to_lstm_net.1} parent=11 // pred_fallthru
          _
        // Predicated region
        $region49: #{conv_to_lstm_net.1} parent=11 // pred_check
          %p390 = pneg %p259
        $region50: #{conv_to_lstm_net.1} parent=11 // pred_check_branch
          %392 = sbr.rel (%p390) target = $region52
        $region51: #{conv_to_lstm_net.1} parent=11 // pred_region
          _
        $region52: #{conv_to_lstm_net.1} parent=11 // pred_fallthru
          _
        // Predicated region
        $region53: #{conv_to_lstm_net.1} parent=11 // pred_check
          %p393 = pneg %p280
        $region54: #{conv_to_lstm_net.1} parent=11 // pred_check_branch
          %395 = sbr.rel (%p393) target = $region56
        $region55: #{conv_to_lstm_net.1} parent=11 // pred_region
          _
        $region56: #{conv_to_lstm_net.1} parent=11 // pred_fallthru
          _
        // Predicated region
        $region57: #{conv_to_lstm_net.1} parent=11 // pred_check
          %p396 = pneg %p301
        $region58: #{conv_to_lstm_net.1} parent=11 // pred_check_branch
          %398 = sbr.rel (%p396) target = $region60
        $region59: #{conv_to_lstm_net.1} parent=11 // pred_region
          _
        $region60: #{conv_to_lstm_net.1} parent=11 // pred_fallthru
          _
        // Predicated region
        $region61: #{conv_to_lstm_net.1} parent=11 // pred_check
          %p399 = pneg %p322
        $region62: #{conv_to_lstm_net.1} parent=11 // pred_check_branch
          %401 = sbr.rel (%p399) target = $region64
        $region63: #{conv_to_lstm_net.1} parent=11 // pred_region
          _
        $region64: #{conv_to_lstm_net.1} parent=11 // pred_fallthru
          _
      $region12: #{conv_to_lstm_net.1} parent=5 // pred_fallthru
        _
      %p402 = scmp.lt.s32.totalorder %s23, 2
      // Predicated region
      $region65: #{conv_to_lstm_net.1} parent=5 // pred_check
        %p403 = pneg %p402
      $region66: #{conv_to_lstm_net.1} parent=5 // pred_check_branch
        %405 = sbr.rel (%p403) target = $region68
      $region67: #{conv_to_lstm_net.1} parent=5 // pred_region
        // Predicated region
        $region69: #{conv_to_lstm_net.1} parent=67 // pred_check
          %p406 = pneg %p43
        $region70: #{conv_to_lstm_net.1} parent=67 // pred_check_branch
          %408 = sbr.rel (%p406) target = $region72
        $region71: #{conv_to_lstm_net.1} parent=67 // pred_region
          %p409 = scmp.lt.s32.totalorder %s23, 1
          %s410 = scalar_select %p409, %s23, 1
          %s411 = smul.addr %s410, 8
          %s412 = smul.addr %s411, 4
          %s413 = scalar_lea.vmem %s0, %s412
        $region72: #{conv_to_lstm_net.1} parent=67 // pred_fallthru
          _
      $region68: #{conv_to_lstm_net.1} parent=5 // pred_fallthru
        _
      %p414 = scmp.le.s32.totalorder 1, %s23
      %p415 = scmp.lt.s32.totalorder %s23, 3
      %p416 = pnand %p414, %p415
      %p417 = pneg %p416
      // Predicated region
      $region73: #{conv_to_lstm_net.1} parent=5 // pred_check
        _
      $region74: #{conv_to_lstm_net.1} parent=5 // pred_check_branch
        %419 = sbr.rel (%p416) target = $region76
      $region75: #{conv_to_lstm_net.1} parent=5 // pred_region
        %s420 = ssub.s32 %s23, 1
        %p421 = scmp.lt.s32.totalorder %s28, 1
        %s422 = scalar_select %p421, %s28, 1
        %s423 = smul.addr %s422, 8
        %s424 = smul.addr %s423, 4
        %s425 = scalar_lea.vmem %s0, %s424
        %p426 = pneg %p49
        %p427 = pneg %p46
        %p428 = pneg %p70
        %p429 = pneg %p67
        %p430 = pneg %p91
        %p431 = pneg %p88
        %p432 = pneg %p112
        %p433 = pneg %p109
        %p434 = pneg %p133
        %p435 = pneg %p130
        %p436 = pneg %p154
        %p437 = pneg %p151
        %p438 = pneg %p175
        %p439 = pneg %p172
        %p440 = pneg %p196
        %p441 = pneg %p193
        %p442 = pneg %p217
        %p443 = pneg %p214
        %p444 = pneg %p238
        %p445 = pneg %p235
        %p446 = pneg %p259
        %p447 = pneg %p256
        %p448 = pneg %p280
        %p449 = pneg %p277
        %p450 = pneg %p301
        %p451 = pneg %p298
        %p452 = pneg %p322
        %p453 = pneg %p319
        %p454 = pneg %p348
        %p455 = pneg %p345
        %s456 = sand.u32 %s335, 1
        %s457 = scalar_lea.sflag [#allocation3], %s456
        %s458 = sand.u32 %s335, 1
        %s459 = scalar_lea.vmem [#allocation2], %s458
        %p460 = scmp.lt.s32.totalorder %s28, 1
        %s461 = scalar_select %p460, %s28, 1
        %s462 = smul.addr %s461, 8
        %s463 = smul.addr %s462, 4
        %s464 = scalar_lea.vmem %s0, %s463
        %v466 = vld [vmem:[%s464] sm:$0xf]
        %v467 = vld [vmem:[%s464 + $0x4] sm:$0xf]
        %v468 = vld [vmem:[%s464 + $0x8] sm:$0xf]
        %v469 = vld [vmem:[%s464 + $0xc] sm:$0xf]
        %v470 = vld [vmem:[%s464 + $0x10] sm:$0xf]
        %v471 = vld [vmem:[%s464 + $0x14] sm:$0xf]
        %v472 = vld [vmem:[%s464 + $0x18] sm:$0xf]
        %v473 = vld [vmem:[%s464 + $0x1c] sm:$0xf]
        %v474 = vld [vmem:[%s2] sm:$0x1]
        %v475 = vld [vmem:[%s3] sm:$0x1]
        %v476 = vld [vmem:[%s4] sm:$0xff]
        %v477 = vld [vmem:[%s4 + $0x8] sm:$0xff]
        %v478 = vld [vmem:[%s4 + $0x10] sm:$0xff]
        %v479 = vld [vmem:[%s4 + $0x18] sm:$0xff]
        %v480 = vld [vmem:[%s4 + $0x20] sm:$0x3]
        %v489 = vunpack.c.l.b16 %v466
        %v490 = vunpack.c.l.b16 %v467
        %v491 = vunpack.c.l.b16 %v468
        %v492 = vunpack.c.l.b16 %v469
        %v493 = vunpack.c.l.b16 %v470
        %v494 = vunpack.c.l.b16 %v471
        %v495 = vunpack.c.l.b16 %v472
        %v496 = vunpack.c.l.b16 %v473
        %v497 = vpack.c.b16 %v490, %v489
        %v498 = vpack.c.b16 %v492, %v491
        %v499 = vpack.c.b16 %v494, %v493
        %v500 = vpack.c.b16 %v496, %v495
        %vm501 = vsmask.f32 1280
        %v503 = vshrl.u32 %v497, 16
        %v505 = vrot.slane %v503, 6
        %v506 = vshll.u32 %v497, 16
        %v508 = vrot.slane %v506, 7
        %v509 = vor.u32 %v505, %v508
        %v511 = vshrl.u32 %v498, 16
        %v513 = vrot.slane %v511, 6
        %v514 = vshll.u32 %v498, 16
        %v516 = vrot.slane %v514, 7
        %v517 = vor.u32 %v513, %v516
        %v518 = vsel %vm501, %v509, %v517
        %v520 = vshrl.u32 %v499, 16
        %v522 = vrot.slane %v520, 6
        %v523 = vshll.u32 %v499, 16
        %v525 = vrot.slane %v523, 7
        %v526 = vor.u32 %v522, %v525
        %v527 = vsel %vm501, %v517, %v526
        %v529 = vshrl.u32 %v500, 16
        %v531 = vrot.slane %v529, 6
        %v532 = vshll.u32 %v500, 16
        %v534 = vrot.slane %v532, 7
        %v535 = vor.u32 %v531, %v534
        %v536 = vsel %vm501, %v526, %v535
        %vm539 = vcmask 1041408
        %vm540 = vmand %vm539, %vm501
        %v541 = vsel %vm540, 0, %v509
        %v542 = vsel %vm540, %v535, 0
        %v543 = vld [vmem:[%s1] sm:$0xf]
        %v544 = vld [vmem:[%s1 + $0x4] sm:$0xf]
        %v545 = vld [vmem:[%s1 + $0x8] sm:$0xf]
        %v546 = vld [vmem:[%s1 + $0xc] sm:$0xf]
        %v547 = vld [vmem:[%s1 + $0x10] sm:$0xf]
        %v548 = vld [vmem:[%s1 + $0x14] sm:$0xf]
        %v549 = vld [vmem:[%s1 + $0x18] sm:$0xf]
        %v550 = vld [vmem:[%s1 + $0x1c] sm:$0xf]
        %s551 = scalar_lea.vmem %s1, 32
        %v552 = vld [vmem:[%s551] sm:$0xf]
        %v553 = vld [vmem:[%s551 + $0x4] sm:$0xf]
        %v554 = vld [vmem:[%s551 + $0x8] sm:$0xf]
        %v555 = vld [vmem:[%s551 + $0xc] sm:$0xf]
        %v556 = vld [vmem:[%s551 + $0x10] sm:$0xf]
        %v557 = vld [vmem:[%s551 + $0x14] sm:$0xf]
        %v558 = vld [vmem:[%s551 + $0x18] sm:$0xf]
        %v559 = vld [vmem:[%s551 + $0x1c] sm:$0xf]
        %vm560 = vsmask.f32 7424
        %v562 = vshrl.u32 %v541, 16
        %v564 = vshll.u32 %v541, 16
        %v566 = vrot.slane %v564, 1
        %v567 = vor.u32 %v562, %v566
        %v569 = vshll.u32 %v518, 16
        %v571 = vrot.slane %v569, 1
        %v572 = vsel %vm560, %v567, %v571
        %v573 = vshrl.u32 %v518, 16
        %v575 = vor.u32 %v573, %v571
        %v577 = vshll.u32 %v527, 16
        %v579 = vrot.slane %v577, 1
        %v580 = vsel %vm560, %v575, %v579
        %v581 = vshrl.u32 %v527, 16
        %v583 = vor.u32 %v581, %v579
        %v585 = vshll.u32 %v536, 16
        %v587 = vrot.slane %v585, 1
        %v588 = vsel %vm560, %v583, %v587
        %v589 = vshrl.u32 %v536, 16
        %v591 = vor.u32 %v589, %v587
        %v593 = vshll.u32 %v542, 16
        %v595 = vrot.slane %v593, 1
        %v596 = vsel %vm560, %v591, %v595
        %v597 = vshrl.u32 %v542, 16
        %v599 = vor.u32 %v597, %v595
        %v608 = vunpack.c.l.b16 %v552
        %v609 = vunpack.c.l.b16 %v553
        %v610 = vunpack.c.l.b16 %v554
        %v611 = vunpack.c.l.b16 %v555
        %v612 = vunpack.c.l.b16 %v556
        %v613 = vunpack.c.l.b16 %v557
        %v614 = vunpack.c.l.b16 %v558
        %v615 = vunpack.c.l.b16 %v559
        %v616 = vpack.c.b16 %v609, %v608
        %v617 = vpack.c.b16 %v611, %v610
        %v618 = vpack.c.b16 %v613, %v612
        %v619 = vpack.c.b16 %v615, %v614
        %vm624 = vcmask 523264
        %v626 = vsel %vm624, %v572, 0
        %v629 = vsel %vm624, %v580, 0
        %v632 = vsel %vm624, %v588, 0
        %v635 = vsel %vm624, %v596, 0
        %v638 = vsel %vm624, %v599, 0
        %640 = vmatpush.bf16.msra.mxu0 0
        %641 = vmatpush.bf16.msra.mxu0 0
        %642 = vmatpush.bf16.msra.mxu0 0
        %643 = vmatpush.bf16.msra.mxu0 0
        %644 = vmatpush.bf16.msra.mxu0 %v619
        %645 = vmatpush.bf16.msra.mxu0 %v618
        %646 = vmatpush.bf16.msra.mxu0 %v617
        %647 = vmatpush.bf16.msra.mxu0 %v616
        %648 = vmatmul.bf16.gmra.mxu0 %v626
        %v649 = vpop.f32.mrf.mxu0
        %v650 = vadd.f32 0.0, %v649
        %v651 = vpop.f32.mrf.mxu0
        %v652 = vadd.f32 0.0, %v651
        %653 = vmatmul.bf16.gmra.mxu0 %v629
        %v654 = vpop.f32.mrf.mxu0
        %v655 = vadd.f32 0.0, %v654
        %v656 = vpop.f32.mrf.mxu0
        %v657 = vadd.f32 0.0, %v656
        %658 = vmatmul.bf16.gmra.mxu0 %v632
        %v659 = vpop.f32.mrf.mxu0
        %v660 = vadd.f32 0.0, %v659
        %v661 = vpop.f32.mrf.mxu0
        %v662 = vadd.f32 0.0, %v661
        %663 = vmatmul.bf16.gmra.mxu0 %v635
        %v664 = vpop.f32.mrf.mxu0
        %v665 = vadd.f32 0.0, %v664
        %v666 = vpop.f32.mrf.mxu0
        %v667 = vadd.f32 0.0, %v666
        %668 = vmatmul.bf16.gmra.mxu0 %v638
        %v669 = vpop.f32.mrf.mxu0
        %v670 = vadd.f32 0.0, %v669
        %v671 = vpop.f32.mrf.mxu0
        %672 = vdwg.mxu0
        %v681 = vunpack.c.l.b16 %v543
        %v682 = vunpack.c.l.b16 %v544
        %v683 = vunpack.c.l.b16 %v545
        %v684 = vunpack.c.l.b16 %v546
        %v685 = vunpack.c.l.b16 %v547
        %v686 = vunpack.c.l.b16 %v548
        %v687 = vunpack.c.l.b16 %v549
        %v688 = vunpack.c.l.b16 %v550
        %v689 = vpack.c.b16 %v682, %v681
        %v690 = vpack.c.b16 %v684, %v683
        %v691 = vpack.c.b16 %v686, %v685
        %v692 = vpack.c.b16 %v688, %v687
        %v697 = vsel %vm624, %v541, 0
        %v699 = vsel %vm624, %v518, 0
        %v701 = vsel %vm624, %v527, 0
        %v703 = vsel %vm624, %v536, 0
        %v705 = vsel %vm624, %v542, 0
        %707 = vmatpush.bf16.msra.mxu0 0
        %708 = vmatpush.bf16.msra.mxu0 0
        %709 = vmatpush.bf16.msra.mxu0 0
        %710 = vmatpush.bf16.msra.mxu0 0
        %711 = vmatpush.bf16.msra.mxu0 %v692
        %712 = vmatpush.bf16.msra.mxu0 %v691
        %713 = vmatpush.bf16.msra.mxu0 %v690
        %714 = vmatpush.bf16.msra.mxu0 %v689
        %715 = vmatmul.bf16.gmra.mxu0 %v697
        %v716 = vpop.f32.mrf.mxu0
        %v717 = vadd.f32 %v650, %v716
        %v718 = vpop.f32.mrf.mxu0
        %v719 = vadd.f32 %v652, %v718
        %720 = vmatmul.bf16.gmra.mxu0 %v699
        %v721 = vpop.f32.mrf.mxu0
        %v722 = vadd.f32 %v655, %v721
        %v723 = vpop.f32.mrf.mxu0
        %v724 = vadd.f32 %v657, %v723
        %725 = vmatmul.bf16.gmra.mxu0 %v701
        %v726 = vpop.f32.mrf.mxu0
        %v727 = vadd.f32 %v660, %v726
        %v728 = vpop.f32.mrf.mxu0
        %v729 = vadd.f32 %v662, %v728
        %730 = vmatmul.bf16.gmra.mxu0 %v703
        %v731 = vpop.f32.mrf.mxu0
        %v732 = vadd.f32 %v665, %v731
        %v733 = vpop.f32.mrf.mxu0
        %v734 = vadd.f32 %v667, %v733
        %735 = vmatmul.bf16.gmra.mxu0 %v705
        %v736 = vpop.f32.mrf.mxu0
        %v737 = vadd.f32 %v670, %v736
        %v738 = vpop.f32.mrf.mxu0
        %739 = vdwg.mxu0
        %s740 = scalar_lea.vmem %s1, 64
        %v741 = vld [vmem:[%s740] sm:$0xf]
        %v742 = vld [vmem:[%s740 + $0x4] sm:$0xf]
        %v743 = vld [vmem:[%s740 + $0x8] sm:$0xf]
        %v744 = vld [vmem:[%s740 + $0xc] sm:$0xf]
        %v745 = vld [vmem:[%s740 + $0x10] sm:$0xf]
        %v746 = vld [vmem:[%s740 + $0x14] sm:$0xf]
        %v747 = vld [vmem:[%s740 + $0x18] sm:$0xf]
        %v748 = vld [vmem:[%s740 + $0x1c] sm:$0xf]
        %vm751 = vcmask 1046528
        %v752 = vrot.slane %v541, 1
        %v753 = vrot.slane %v518, 1
        %v754 = vsel %vm751, %v752, %v753
        %v755 = vrot.slane %v527, 1
        %v756 = vsel %vm751, %v753, %v755
        %v757 = vrot.slane %v536, 1
        %v758 = vsel %vm751, %v755, %v757
        %v759 = vrot.slane %v542, 1
        %v760 = vsel %vm751, %v757, %v759
        %v769 = vunpack.c.l.b16 %v741
        %v770 = vunpack.c.l.b16 %v742
        %v771 = vunpack.c.l.b16 %v743
        %v772 = vunpack.c.l.b16 %v744
        %v773 = vunpack.c.l.b16 %v745
        %v774 = vunpack.c.l.b16 %v746
        %v775 = vunpack.c.l.b16 %v747
        %v776 = vunpack.c.l.b16 %v748
        %v777 = vpack.c.b16 %v770, %v769
        %v778 = vpack.c.b16 %v772, %v771
        %v779 = vpack.c.b16 %v774, %v773
        %v780 = vpack.c.b16 %v776, %v775
        %v786 = vsel %vm624, %v754, 0
        %v789 = vsel %vm624, %v756, 0
        %v792 = vsel %vm624, %v758, 0
        %v795 = vsel %vm624, %v760, 0
        %v798 = vsel %vm624, %v759, 0
        %800 = vmatpush.bf16.msra.mxu0 0
        %801 = vmatpush.bf16.msra.mxu0 0
        %802 = vmatpush.bf16.msra.mxu0 0
        %803 = vmatpush.bf16.msra.mxu0 0
        %804 = vmatpush.bf16.msra.mxu0 %v780
        %805 = vmatpush.bf16.msra.mxu0 %v779
        %806 = vmatpush.bf16.msra.mxu0 %v778
        %807 = vmatpush.bf16.msra.mxu0 %v777
        %808 = vmatmul.bf16.gmra.mxu0 %v786
        %v809 = vpop.f32.mrf.mxu0
        %v810 = vadd.f32 0.0, %v809
        %v811 = vpop.f32.mrf.mxu0
        %v812 = vadd.f32 0.0, %v811
        %813 = vmatmul.bf16.gmra.mxu0 %v789
        %v814 = vpop.f32.mrf.mxu0
        %v815 = vadd.f32 0.0, %v814
        %v816 = vpop.f32.mrf.mxu0
        %v817 = vadd.f32 0.0, %v816
        %818 = vmatmul.bf16.gmra.mxu0 %v792
        %v819 = vpop.f32.mrf.mxu0
        %v820 = vadd.f32 0.0, %v819
        %v821 = vpop.f32.mrf.mxu0
        %v822 = vadd.f32 0.0, %v821
        %823 = vmatmul.bf16.gmra.mxu0 %v795
        %v824 = vpop.f32.mrf.mxu0
        %v825 = vadd.f32 0.0, %v824
        %v826 = vpop.f32.mrf.mxu0
        %v827 = vadd.f32 0.0, %v826
        %828 = vmatmul.bf16.gmra.mxu0 %v798
        %v829 = vpop.f32.mrf.mxu0
        %v830 = vadd.f32 0.0, %v829
        %v831 = vpop.f32.mrf.mxu0
        %832 = vdwg.mxu0
        %v833 = vadd.f32 %v717, %v810
        %v834 = vadd.f32 %v719, %v812
        %v835 = vadd.f32 %v722, %v815
        %v836 = vadd.f32 %v724, %v817
        %v837 = vadd.f32 %v727, %v820
        %v838 = vadd.f32 %v729, %v822
        %v839 = vadd.f32 %v732, %v825
        %v840 = vadd.f32 %v734, %v827
        %v841 = vadd.f32 %v737, %v830
        %vm842 = vcmask 261120
        %v843 = vsel %vm842, %v833, 0.0
        %v844 = vsel %vm842, %v834, 0.0
        %v845 = vadd.f32 %v843, %v844
        %v846 = vsel %vm842, %v835, 0.0
        %v847 = vadd.f32 %v845, %v846
        %v848 = vsel %vm842, %v836, 0.0
        %v849 = vadd.f32 %v847, %v848
        %v850 = vsel %vm842, %v837, 0.0
        %v851 = vadd.f32 %v849, %v850
        %v852 = vsel %vm842, %v838, 0.0
        %v853 = vadd.f32 %v851, %v852
        %v854 = vsel %vm842, %v839, 0.0
        %v855 = vadd.f32 %v853, %v854
        %v856 = vsel %vm842, %v840, 0.0
        %v857 = vadd.f32 %v855, %v856
        %vm858 = vcmask 257024
        %v859 = vsel %vm858, %v841, 0.0
        %v860 = vadd.f32 %v857, %v859
        %v861 = vrot.slane %v860, 4
        %v862 = vadd.f32 %v860, %v861
        %v863 = vrot.slane %v862, 2
        %v864 = vadd.f32 %v862, %v863
        %v865 = vrot.slane %v864, 1
        %v866 = vadd.f32 %v864, %v865
        %v867 = vrcp.pop 68.0
        %v868 = vmul.f32 68.0, %v867
        %v869 = vsub.f32 1.0, %v868
        %v870 = vmul.f32 %v867, %v869
        %v871 = vadd.f32 %v867, %v870
        %vm872 = vweird.f32 %v867
        %v873 = vsel %vm872, %v867, %v871
        %v874 = vmul.f32 %v866, %v873
        %v875 = vmul.f32 %v833, %v833
        %v876 = vmul.f32 %v834, %v834
        %v877 = vmul.f32 %v835, %v835
        %v878 = vmul.f32 %v836, %v836
        %v879 = vmul.f32 %v837, %v837
        %v880 = vmul.f32 %v838, %v838
        %v881 = vmul.f32 %v839, %v839
        %v882 = vmul.f32 %v840, %v840
        %v883 = vmul.f32 %v841, %v841
        %v884 = vsel %vm842, %v875, 0.0
        %v885 = vsel %vm842, %v876, 0.0
        %v886 = vadd.f32 %v884, %v885
        %v887 = vsel %vm842, %v877, 0.0
        %v888 = vadd.f32 %v886, %v887
        %v889 = vsel %vm842, %v878, 0.0
        %v890 = vadd.f32 %v888, %v889
        %v891 = vsel %vm842, %v879, 0.0
        %v892 = vadd.f32 %v890, %v891
        %v893 = vsel %vm842, %v880, 0.0
        %v894 = vadd.f32 %v892, %v893
        %v895 = vsel %vm842, %v881, 0.0
        %v896 = vadd.f32 %v894, %v895
        %v897 = vsel %vm842, %v882, 0.0
        %v898 = vadd.f32 %v896, %v897
        %v899 = vsel %vm858, %v883, 0.0
        %v900 = vadd.f32 %v898, %v899
        %v901 = vrot.slane %v900, 4
        %v902 = vadd.f32 %v900, %v901
        %v903 = vrot.slane %v902, 2
        %v904 = vadd.f32 %v902, %v903
        %v905 = vrot.slane %v904, 1
        %v906 = vadd.f32 %v904, %v905
        %v907 = vmul.f32 %v906, %v873
        %v908 = vmul.f32 %v874, %v874
        %v909 = vsub.f32 %v907, %v908
        %v910 = vmax.f32 %v909, 0.0
        %v911 = vadd.f32 %v910, 1e-05
        %v912 = vrsqrt.pop %v911
        %v913 = vmul.f32 %v912, %v911
        %v914 = vmul.f32 %v913, %v912
        %v915 = vmul.f32 0.5, %v914
        %v916 = vsub.f32 1.5, %v915
        %v917 = vmul.f32 %v912, %v916
        %vm918 = vweird.f32 %v911
        %vm919 = vweird.f32 %v912
        %vm920 = vmor %vm918, %vm919
        %v921 = vsel %vm920, %v912, %v917
        %v922 = vmul.f32 %v474, %v921
        %v923 = vmul.f32 %v874, %v922
        %v924 = vsub.f32 %v475, %v923
        %v926 = vperm.slane %v922, 0
        %v928 = vmul.f32 %v833, %v926
        %v929 = vmul.f32 %v834, %v926
        %v930 = vmul.f32 %v835, %v926
        %v931 = vmul.f32 %v836, %v926
        %v932 = vmul.f32 %v837, %v926
        %v933 = vmul.f32 %v838, %v926
        %v934 = vmul.f32 %v839, %v926
        %v935 = vmul.f32 %v840, %v926
        %v936 = vmul.f32 %v841, %v926
        %v938 = vperm.slane %v924, 0
        %v940 = vadd.f32 %v928, %v938
        %v941 = vadd.f32 %v929, %v938
        %v942 = vadd.f32 %v930, %v938
        %v943 = vadd.f32 %v931, %v938
        %v944 = vadd.f32 %v932, %v938
        %v945 = vadd.f32 %v933, %v938
        %v946 = vadd.f32 %v934, %v938
        %v947 = vadd.f32 %v935, %v938
        %v948 = vadd.f32 %v936, %v938
        %v949 = vmax.f32 %v940, 0.0
        %v950 = vmax.f32 %v941, 0.0
        %v951 = vmax.f32 %v942, 0.0
        %v952 = vmax.f32 %v943, 0.0
        %v953 = vmax.f32 %v944, 0.0
        %v954 = vmax.f32 %v945, 0.0
        %v955 = vmax.f32 %v946, 0.0
        %v956 = vmax.f32 %v947, 0.0
        %v957 = vmax.f32 %v948, 0.0
        %vm958 = vcmask 556032
        %v960 = vsel %vm958, %v476, 0
        %v963 = vsel %vm958, %v477, 0
        %v966 = vsel %vm958, %v478, 0
        %v969 = vsel %vm958, %v479, 0
        %v972 = vsel %vm958, %v480, 0
        %vm974 = vcmask 1043456
        %v976 = vsel %vm974, %v957, 0
        %978 = vmatpush.msra.mxu0 0.0
        %979 = vmatpush.msra.mxu0 0.0
        %980 = vmatpush.msra.mxu0 0.0
        %981 = vmatpush.msra.mxu0 0.0
        %982 = vmatpush.msra.mxu0 0.0
        %983 = vmatpush.msra.mxu0 0.0
        %984 = vmatpush.msra.mxu0 0.0
        %985 = vmatpush.msra.mxu0 %v976
        %986 = vmatpush.msra.mxu0 %v956
        %987 = vmatpush.msra.mxu0 %v955
        %988 = vmatpush.msra.mxu0 %v954
        %989 = vmatpush.msra.mxu0 %v953
        %990 = vmatpush.msra.mxu0 %v952
        %991 = vmatpush.msra.mxu0 %v951
        %992 = vmatpush.msra.mxu0 %v950
        %993 = vmatpush.msra.mxu0 %v949
        %994 = vmatmul.f32.gmra.mxu0 %v960
        %v995 = vpop.f32.mrf.mxu0
        %v996 = vadd.f32 0.0, %v995
        %997 = vmatmul.f32.gmra.mxu0 %v963
        %v998 = vpop.f32.mrf.mxu0
        %v999 = vadd.f32 0.0, %v998
        %1000 = vmatmul.f32.gmra.mxu0 %v966
        %v1001 = vpop.f32.mrf.mxu0
        %v1002 = vadd.f32 0.0, %v1001
        %1003 = vmatmul.f32.gmra.mxu0 %v969
        %v1004 = vpop.f32.mrf.mxu0
        %v1005 = vadd.f32 0.0, %v1004
        %1006 = vmatmul.f32.gmra.mxu0 %v972
        %v1007 = vpop.f32.mrf.mxu0
        %v1008 = vadd.f32 0.0, %v1007
        %1009 = vdwg.mxu0
        %v1010 = vld [vmem:[%s6] sm:$0x1]
        %v1011 = vld [vmem:[%s7] sm:$0x1]
        %v1012 = vld [vmem:[%s8] sm:$0xff]
        %v1013 = vld [vmem:[%s8 + $0x8] sm:$0xff]
        %v1014 = vld [vmem:[%s8 + $0x10] sm:$0x1]
        %v1015 = vpack.c.bf16 %v996, %v996
        %v1016 = vpack.c.bf16 %v999, %v999
        %v1017 = vpack.c.bf16 %v1002, %v1002
        %v1018 = vpack.c.bf16 %v1005, %v1005
        %v1019 = vpack.c.bf16 %v1008, %v1008
        %v1025 = vunpack.c.l.b16 %v1015
        %v1026 = vunpack.c.l.b16 %v1016
        %v1027 = vunpack.c.l.b16 %v1017
        %v1028 = vunpack.c.l.b16 %v1018
        %v1029 = vunpack.c.l.b16 %v1019
        %v1030 = vpack.c.b16 %v1026, %v1025
        %v1031 = vpack.c.b16 %v1028, %v1027
        %v1032 = vpack.c.b16 %v1029, %v1029
        %vm1033 = vsmask.f32 256
        %v1035 = vshrl.u32 %v1030, 16
        %v1037 = vrot.slane %v1035, 7
        %v1038 = vshll.u32 %v1030, 16
        %v1040 = vor.u32 %v1037, %v1038
        %v1042 = vshrl.u32 %v1031, 16
        %v1044 = vrot.slane %v1042, 7
        %v1045 = vshll.u32 %v1031, 16
        %v1047 = vor.u32 %v1044, %v1045
        %v1048 = vsel %vm1033, %v1037, %v1047
        %v1050 = vshrl.u32 %v1032, 16
        %v1052 = vrot.slane %v1050, 7
        %v1053 = vshll.u32 %v1032, 16
        %v1055 = vor.u32 %v1052, %v1053
        %v1056 = vsel %vm1033, %v1044, %v1055
        %vm1059 = vcmask 1040384
        %vm1060 = vmand %vm1059, %vm1033
        %v1061 = vsel %vm1060, 0, %v1040
        %v1062 = vsel %vm540, %v1056, 0
        %v1063 = vld [vmem:[%s5] sm:$0xf]
        %v1064 = vld [vmem:[%s5 + $0x4] sm:$0xf]
        %v1065 = vld [vmem:[%s5 + $0x8] sm:$0xf]
        %v1066 = vld [vmem:[%s5 + $0xc] sm:$0xf]
        %s1067 = scalar_lea.vmem %s5, 16
        %v1068 = vld [vmem:[%s1067] sm:$0xf]
        %v1069 = vld [vmem:[%s1067 + $0x4] sm:$0xf]
        %v1070 = vld [vmem:[%s1067 + $0x8] sm:$0xf]
        %v1071 = vld [vmem:[%s1067 + $0xc] sm:$0xf]
        %v1073 = vshrl.u32 %v1061, 16
        %v1075 = vshll.u32 %v1061, 16
        %v1077 = vrot.slane %v1075, 1
        %v1078 = vor.u32 %v1073, %v1077
        %v1080 = vshll.u32 %v1048, 16
        %v1082 = vrot.slane %v1080, 1
        %v1083 = vsel %vm560, %v1078, %v1082
        %v1084 = vshrl.u32 %v1048, 16
        %v1086 = vor.u32 %v1084, %v1082
        %v1088 = vshll.u32 %v1062, 16
        %v1090 = vrot.slane %v1088, 1
        %v1091 = vsel %vm560, %v1086, %v1090
        %v1092 = vshrl.u32 %v1062, 16
        %v1094 = vor.u32 %v1092, %v1090
        %v1099 = vunpack.c.l.b16 %v1068
        %v1100 = vunpack.c.l.b16 %v1069
        %v1101 = vunpack.c.l.b16 %v1070
        %v1102 = vunpack.c.l.b16 %v1071
        %v1103 = vpack.c.b16 %v1100, %v1099
        %v1104 = vpack.c.b16 %v1102, %v1101
        %v1108 = vsel %vm842, %v1083, 0
        %v1111 = vsel %vm842, %v1091, 0
        %v1114 = vsel %vm842, %v1094, 0
        %1116 = vmatpush.bf16.msra.mxu0 0
        %1117 = vmatpush.bf16.msra.mxu0 0
        %1118 = vmatpush.bf16.msra.mxu0 0
        %1119 = vmatpush.bf16.msra.mxu0 0
        %1120 = vmatpush.bf16.msra.mxu0 0
        %1121 = vmatpush.bf16.msra.mxu0 0
        %1122 = vmatpush.bf16.msra.mxu0 %v1104
        %1123 = vmatpush.bf16.msra.mxu0 %v1103
        %1124 = vmatmul.bf16.gmra.mxu0 %v1108
        %v1125 = vpop.f32.mrf.mxu0
        %v1126 = vadd.f32 0.0, %v1125
        %v1127 = vpop.f32.mrf.mxu0
        %v1128 = vadd.f32 0.0, %v1127
        %1129 = vmatmul.bf16.gmra.mxu0 %v1111
        %v1130 = vpop.f32.mrf.mxu0
        %v1131 = vadd.f32 0.0, %v1130
        %v1132 = vpop.f32.mrf.mxu0
        %v1133 = vadd.f32 0.0, %v1132
        %1134 = vmatmul.bf16.gmra.mxu0 %v1114
        %v1135 = vpop.f32.mrf.mxu0
        %v1136 = vadd.f32 0.0, %v1135
        %v1137 = vpop.f32.mrf.mxu0
        %1138 = vdwg.mxu0
        %v1143 = vunpack.c.l.b16 %v1063
        %v1144 = vunpack.c.l.b16 %v1064
        %v1145 = vunpack.c.l.b16 %v1065
        %v1146 = vunpack.c.l.b16 %v1066
        %v1147 = vpack.c.b16 %v1144, %v1143
        %v1148 = vpack.c.b16 %v1146, %v1145
        %v1151 = vsel %vm842, %v1061, 0
        %v1153 = vsel %vm842, %v1048, 0
        %v1155 = vsel %vm842, %v1062, 0
        %1157 = vmatpush.bf16.msra.mxu0 0
        %1158 = vmatpush.bf16.msra.mxu0 0
        %1159 = vmatpush.bf16.msra.mxu0 0
        %1160 = vmatpush.bf16.msra.mxu0 0
        %1161 = vmatpush.bf16.msra.mxu0 0
        %1162 = vmatpush.bf16.msra.mxu0 0
        %1163 = vmatpush.bf16.msra.mxu0 %v1148
        %1164 = vmatpush.bf16.msra.mxu0 %v1147
        %1165 = vmatmul.bf16.gmra.mxu0 %v1151
        %v1166 = vpop.f32.mrf.mxu0
        %v1167 = vadd.f32 %v1126, %v1166
        %v1168 = vpop.f32.mrf.mxu0
        %v1169 = vadd.f32 %v1128, %v1168
        %1170 = vmatmul.bf16.gmra.mxu0 %v1153
        %v1171 = vpop.f32.mrf.mxu0
        %v1172 = vadd.f32 %v1131, %v1171
        %v1173 = vpop.f32.mrf.mxu0
        %v1174 = vadd.f32 %v1133, %v1173
        %1175 = vmatmul.bf16.gmra.mxu0 %v1155
        %v1176 = vpop.f32.mrf.mxu0
        %v1177 = vadd.f32 %v1136, %v1176
        %v1178 = vpop.f32.mrf.mxu0
        %1179 = vdwg.mxu0
        %s1180 = scalar_lea.vmem %s5, 32
        %v1181 = vld [vmem:[%s1180] sm:$0xf]
        %v1182 = vld [vmem:[%s1180 + $0x4] sm:$0xf]
        %v1183 = vld [vmem:[%s1180 + $0x8] sm:$0xf]
        %v1184 = vld [vmem:[%s1180 + $0xc] sm:$0xf]
        %v1187 = vrot.slane %v1061, 1
        %v1188 = vrot.slane %v1048, 1
        %v1189 = vsel %vm751, %v1187, %v1188
        %v1190 = vrot.slane %v1062, 1
        %v1191 = vsel %vm751, %v1188, %v1190
        %v1196 = vunpack.c.l.b16 %v1181
        %v1197 = vunpack.c.l.b16 %v1182
        %v1198 = vunpack.c.l.b16 %v1183
        %v1199 = vunpack.c.l.b16 %v1184
        %v1200 = vpack.c.b16 %v1197, %v1196
        %v1201 = vpack.c.b16 %v1199, %v1198
        %v1205 = vsel %vm842, %v1189, 0
        %v1208 = vsel %vm842, %v1191, 0
        %v1211 = vsel %vm842, %v1190, 0
        %1213 = vmatpush.bf16.msra.mxu0 0
        %1214 = vmatpush.bf16.msra.mxu0 0
        %1215 = vmatpush.bf16.msra.mxu0 0
        %1216 = vmatpush.bf16.msra.mxu0 0
        %1217 = vmatpush.bf16.msra.mxu0 0
        %1218 = vmatpush.bf16.msra.mxu0 0
        %1219 = vmatpush.bf16.msra.mxu0 %v1201
        %1220 = vmatpush.bf16.msra.mxu0 %v1200
        %1221 = vmatmul.bf16.gmra.mxu0 %v1205
        %v1222 = vpop.f32.mrf.mxu0
        %v1223 = vadd.f32 0.0, %v1222
        %v1224 = vpop.f32.mrf.mxu0
        %v1225 = vadd.f32 0.0, %v1224
        %1226 = vmatmul.bf16.gmra.mxu0 %v1208
        %v1227 = vpop.f32.mrf.mxu0
        %v1228 = vadd.f32 0.0, %v1227
        %v1229 = vpop.f32.mrf.mxu0
        %v1230 = vadd.f32 0.0, %v1229
        %1231 = vmatmul.bf16.gmra.mxu0 %v1211
        %v1232 = vpop.f32.mrf.mxu0
        %v1233 = vadd.f32 0.0, %v1232
        %v1234 = vpop.f32.mrf.mxu0
        %1235 = vdwg.mxu0
        %v1236 = vadd.f32 %v1167, %v1223
        %v1237 = vadd.f32 %v1169, %v1225
        %v1238 = vadd.f32 %v1172, %v1228
        %v1239 = vadd.f32 %v1174, %v1230
        %v1240 = vadd.f32 %v1177, %v1233
        %v1241 = vsel %vm842, %v1236, 0.0
        %v1242 = vsel %vm842, %v1237, 0.0
        %v1243 = vadd.f32 %v1241, %v1242
        %v1244 = vsel %vm842, %v1238, 0.0
        %v1245 = vadd.f32 %v1243, %v1244
        %v1246 = vsel %vm842, %v1239, 0.0
        %v1247 = vadd.f32 %v1245, %v1246
        %vm1248 = vcmask 254976
        %v1249 = vsel %vm1248, %v1240, 0.0
        %v1250 = vadd.f32 %v1247, %v1249
        %v1251 = vrot.slane %v1250, 4
        %v1252 = vadd.f32 %v1250, %v1251
        %v1253 = vrot.slane %v1252, 2
        %v1254 = vadd.f32 %v1252, %v1253
        %v1255 = vrot.slane %v1254, 1
        %v1256 = vadd.f32 %v1254, %v1255
        %v1257 = vrcp.pop 34.0
        %v1258 = vmul.f32 34.0, %v1257
        %v1259 = vsub.f32 1.0, %v1258
        %v1260 = vmul.f32 %v1257, %v1259
        %v1261 = vadd.f32 %v1257, %v1260
        %vm1262 = vweird.f32 %v1257
        %v1263 = vsel %vm1262, %v1257, %v1261
        %v1264 = vmul.f32 %v1256, %v1263
        %v1265 = vmul.f32 %v1236, %v1236
        %v1266 = vmul.f32 %v1237, %v1237
        %v1267 = vmul.f32 %v1238, %v1238
        %v1268 = vmul.f32 %v1239, %v1239
        %v1269 = vmul.f32 %v1240, %v1240
        %v1270 = vsel %vm842, %v1265, 0.0
        %v1271 = vsel %vm842, %v1266, 0.0
        %v1272 = vadd.f32 %v1270, %v1271
        %v1273 = vsel %vm842, %v1267, 0.0
        %v1274 = vadd.f32 %v1272, %v1273
        %v1275 = vsel %vm842, %v1268, 0.0
        %v1276 = vadd.f32 %v1274, %v1275
        %v1277 = vsel %vm1248, %v1269, 0.0
        %v1278 = vadd.f32 %v1276, %v1277
        %v1279 = vrot.slane %v1278, 4
        %v1280 = vadd.f32 %v1278, %v1279
        %v1281 = vrot.slane %v1280, 2
        %v1282 = vadd.f32 %v1280, %v1281
        %v1283 = vrot.slane %v1282, 1
        %v1284 = vadd.f32 %v1282, %v1283
        %v1285 = vmul.f32 %v1284, %v1263
        %v1286 = vmul.f32 %v1264, %v1264
        %v1287 = vsub.f32 %v1285, %v1286
        %v1288 = vmax.f32 %v1287, 0.0
        %v1289 = vadd.f32 %v1288, 1e-05
        %v1290 = vrsqrt.pop %v1289
        %v1291 = vmul.f32 %v1290, %v1289
        %v1292 = vmul.f32 %v1291, %v1290
        %v1293 = vmul.f32 0.5, %v1292
        %v1294 = vsub.f32 1.5, %v1293
        %v1295 = vmul.f32 %v1290, %v1294
        %vm1296 = vweird.f32 %v1289
        %vm1297 = vweird.f32 %v1290
        %vm1298 = vmor %vm1296, %vm1297
        %v1299 = vsel %vm1298, %v1290, %v1295
        %v1300 = vmul.f32 %v1010, %v1299
        %v1301 = vmul.f32 %v1264, %v1300
        %v1302 = vsub.f32 %v1011, %v1301
        %v1304 = vperm.slane %v1300, 0
        %v1306 = vmul.f32 %v1236, %v1304
        %v1307 = vmul.f32 %v1237, %v1304
        %v1308 = vmul.f32 %v1238, %v1304
        %v1309 = vmul.f32 %v1239, %v1304
        %v1310 = vmul.f32 %v1240, %v1304
        %v1312 = vperm.slane %v1302, 0
        %v1314 = vadd.f32 %v1306, %v1312
        %v1315 = vadd.f32 %v1307, %v1312
        %v1316 = vadd.f32 %v1308, %v1312
        %v1317 = vadd.f32 %v1309, %v1312
        %v1318 = vadd.f32 %v1310, %v1312
        %v1319 = vmax.f32 %v1314, 0.0
        %v1320 = vmax.f32 %v1315, 0.0
        %v1321 = vmax.f32 %v1316, 0.0
        %v1322 = vmax.f32 %v1317, 0.0
        %v1323 = vmax.f32 %v1318, 0.0
        %vm1324 = vcmask 277504
        %v1326 = vsel %vm1324, %v1012, 0
        %v1329 = vsel %vm1324, %v1013, 0
        %v1332 = vsel %vm1324, %v1014, 0
        %vm1334 = vcmask 1041408
        %v1336 = vsel %vm1334, %v1323, 0
        %1338 = vmatpush.msra.mxu0 0.0
        %1339 = vmatpush.msra.mxu0 0.0
        %1340 = vmatpush.msra.mxu0 0.0
        %1341 = vmatpush.msra.mxu0 0.0
        %1342 = vmatpush.msra.mxu0 0.0
        %1343 = vmatpush.msra.mxu0 0.0
        %1344 = vmatpush.msra.mxu0 0.0
        %1345 = vmatpush.msra.mxu0 0.0
        %1346 = vmatpush.msra.mxu0 0.0
        %1347 = vmatpush.msra.mxu0 0.0
        %1348 = vmatpush.msra.mxu0 0.0
        %1349 = vmatpush.msra.mxu0 %v1336
        %1350 = vmatpush.msra.mxu0 %v1322
        %1351 = vmatpush.msra.mxu0 %v1321
        %1352 = vmatpush.msra.mxu0 %v1320
        %1353 = vmatpush.msra.mxu0 %v1319
        %1354 = vmatmul.f32.gmra.mxu0 %v1326
        %v1355 = vpop.f32.mrf.mxu0
        %v1356 = vadd.f32 0.0, %v1355
        %1357 = vmatmul.f32.gmra.mxu0 %v1329
        %v1358 = vpop.f32.mrf.mxu0
        %v1359 = vadd.f32 0.0, %v1358
        %1360 = vmatmul.f32.gmra.mxu0 %v1332
        %v1361 = vpop.f32.mrf.mxu0
        %v1362 = vadd.f32 0.0, %v1361
        %1363 = vdwg.mxu0
        %v1364 = vld [vmem:[%s9] sm:$0xff]
        %v1365 = vld [vmem:[%s9 + $0x8] sm:$0xff]
        %v1366 = vld [vmem:[%s9 + $0x10] sm:$0xff]
        %v1367 = vld [vmem:[%s9 + $0x18] sm:$0xff]
        %v1368 = vld [vmem:[%s11] sm:$0x1]
        %v1370 = vperm.slane %v1368, 0
        %v1373 = vsel %vm842, %v1356, 0
        %v1376 = vsel %vm842, %v1359, 0
        %v1379 = vsel %vm842, %v1362, 0
        %1381 = vmatpush.msra.mxu0 0.0
        %1382 = vmatpush.msra.mxu0 0.0
        %1383 = vmatpush.msra.mxu0 0.0
        %1384 = vmatpush.msra.mxu0 0.0
        %1385 = vmatpush.msra.mxu0 0.0
        %1386 = vmatpush.msra.mxu0 0.0
        %1387 = vmatpush.msra.mxu0 0.0
        %1388 = vmatpush.msra.mxu0 0.0
        %1389 = vmatpush.msra.mxu0 0.0
        %1390 = vmatpush.msra.mxu0 0.0
        %1391 = vmatpush.msra.mxu0 0.0
        %1392 = vmatpush.msra.mxu0 0.0
        %1393 = vmatpush.msra.mxu0 %v1367
        %1394 = vmatpush.msra.mxu0 %v1366
        %1395 = vmatpush.msra.mxu0 %v1365
        %1396 = vmatpush.msra.mxu0 %v1364
        %1397 = vmatmul.f32.gmra.mxu0 %v1373
        %v1398 = vpop.f32.mrf.mxu0
        %v1399 = vadd.f32 %v1370, %v1398
        %1400 = vmatmul.f32.gmra.mxu0 %v1376
        %v1401 = vpop.f32.mrf.mxu0
        %v1402 = vadd.f32 %v1370, %v1401
        %1403 = vmatmul.f32.gmra.mxu0 %v1379
        %v1404 = vpop.f32.mrf.mxu0
        %v1405 = vadd.f32 %v1370, %v1404
        %1406 = vdwg.mxu0
        %v1407 = vld [vmem:[%s10] sm:$0xff]
        %v1408 = vld [vmem:[%s10 + $0x8] sm:$0xff]
        %v1409 = vld [vmem:[%s10 + $0x10] sm:$0xff]
        %v1410 = vld [vmem:[%s10 + $0x18] sm:$0xff]
        %v1412 = vsel %vm842, 0.0, 0
        %1414 = vmatpush.msra.mxu0 0.0
        %1415 = vmatpush.msra.mxu0 0.0
        %1416 = vmatpush.msra.mxu0 0.0
        %1417 = vmatpush.msra.mxu0 0.0
        %1418 = vmatpush.msra.mxu0 0.0
        %1419 = vmatpush.msra.mxu0 0.0
        %1420 = vmatpush.msra.mxu0 0.0
        %1421 = vmatpush.msra.mxu0 0.0
        %1422 = vmatpush.msra.mxu0 0.0
        %1423 = vmatpush.msra.mxu0 0.0
        %1424 = vmatpush.msra.mxu0 0.0
        %1425 = vmatpush.msra.mxu0 0.0
        %1426 = vmatpush.msra.mxu0 %v1410
        %1427 = vmatpush.msra.mxu0 %v1409
        %1428 = vmatpush.msra.mxu0 %v1408
        %1429 = vmatpush.msra.mxu0 %v1407
        %1430 = vmatmul.f32.gmra.mxu0 %v1412
        %v1431 = vpop.f32.mrf.mxu0
        %v1432 = vadd.f32 0.0, %v1431
        %1433 = vdwg.mxu0
        %v1434 = vadd.f32 %v1399, %v1432
        %v1435 = vmul.f32 %v1434, 0.5
        %v1437 = vrot.slane %v1434, 7
        %vm1439 = vcmask 1040384
        %v1440 = vsel %vm1439, %v1435, %v1437
        %v1441 = vtanh.pop %v1440
        %v1442 = vmul.f32 %v1441, 0.5
        %v1443 = vadd.f32 %v1442, 0.5
        %v1444 = vmul.f32 %v1443, 0.0
        %v1446 = vrot.slane %v1441, 1
        %1447 = vrot.lane.b32.xlu0 %v1446, 64
        %v1448 = vpop.permute.xlu0 %1447
        %v1450 = vmul.f32 %v1443, %v1448
        %1452 = vrot.lane.b32.xlu0 %v1450, 32
        %v1453 = vpop.permute.xlu0 %1452
        %v1455 = vadd.f32 %v1444, %v1453
        %v1456 = vtanh.pop %v1455
        %1458 = vrot.lane.b32.xlu0 %v1456, 64
        %v1459 = vpop.permute.xlu0 %1458
        %v1461 = vmul.f32 %v1443, %v1459
        %1463 = vrot.lane.b32.xlu0 %v1461, 32
        %v1464 = vpop.permute.xlu0 %1463
        %v1465 = vsel %vm842, %v1464, 0
        %1467 = vmatpush.msra.mxu0 0.0
        %1468 = vmatpush.msra.mxu0 0.0
        %1469 = vmatpush.msra.mxu0 0.0
        %1470 = vmatpush.msra.mxu0 0.0
        %1471 = vmatpush.msra.mxu0 0.0
        %1472 = vmatpush.msra.mxu0 0.0
        %1473 = vmatpush.msra.mxu0 0.0
        %1474 = vmatpush.msra.mxu0 0.0
        %1475 = vmatpush.msra.mxu0 0.0
        %1476 = vmatpush.msra.mxu0 0.0
        %1477 = vmatpush.msra.mxu0 0.0
        %1478 = vmatpush.msra.mxu0 0.0
        %1479 = vmatpush.msra.mxu0 %v1410
        %1480 = vmatpush.msra.mxu0 %v1409
        %1481 = vmatpush.msra.mxu0 %v1408
        %1482 = vmatpush.msra.mxu0 %v1407
        %1483 = vmatmul.f32.gmra.mxu0 %v1465
        %v1484 = vpop.f32.mrf.mxu0
        %v1485 = vadd.f32 0.0, %v1484
        %1486 = vdwg.mxu0
        %v1488 = vrot.slane %v1485, 7
        %v1490 = vadd.f32 %v1399, %v1488
        %v1491 = vmul.f32 %v1490, 0.5
        %v1493 = vrot.slane %v1491, 1
        %v1495 = vsel %vm1439, %v1493, %v1490
        %v1496 = vtanh.pop %v1495
        %v1497 = vmul.f32 %v1496, 0.5
        %v1498 = vadd.f32 %v1497, 0.5
        %v1499 = vmul.f32 %v1498, %v1455
        %v1501 = vrot.slane %v1496, 1
        %1502 = vrot.lane.b32.xlu0 %v1501, 64
        %v1503 = vpop.permute.xlu0 %1502
        %v1505 = vmul.f32 %v1498, %v1503
        %1507 = vrot.lane.b32.xlu0 %v1505, 32
        %v1508 = vpop.permute.xlu0 %1507
        %v1510 = vadd.f32 %v1499, %v1508
        %v1511 = vtanh.pop %v1510
        %1513 = vrot.lane.b32.xlu0 %v1511, 64
        %v1514 = vpop.permute.xlu0 %1513
        %v1516 = vmul.f32 %v1498, %v1514
        %1518 = vrot.lane.b32.xlu0 %v1516, 32
        %v1519 = vpop.permute.xlu0 %1518
        %v1520 = vsel %vm842, %v1519, 0
        %1522 = vmatpush.msra.mxu0 0.0
        %1523 = vmatpush.msra.mxu0 0.0
        %1524 = vmatpush.msra.mxu0 0.0
        %1525 = vmatpush.msra.mxu0 0.0
        %1526 = vmatpush.msra.mxu0 0.0
        %1527 = vmatpush.msra.mxu0 0.0
        %1528 = vmatpush.msra.mxu0 0.0
        %1529 = vmatpush.msra.mxu0 0.0
        %1530 = vmatpush.msra.mxu0 0.0
        %1531 = vmatpush.msra.mxu0 0.0
        %1532 = vmatpush.msra.mxu0 0.0
        %1533 = vmatpush.msra.mxu0 0.0
        %1534 = vmatpush.msra.mxu0 %v1410
        %1535 = vmatpush.msra.mxu0 %v1409
        %1536 = vmatpush.msra.mxu0 %v1408
        %1537 = vmatpush.msra.mxu0 %v1407
        %1538 = vmatmul.f32.gmra.mxu0 %v1520
        %v1539 = vpop.f32.mrf.mxu0
        %v1540 = vadd.f32 0.0, %v1539
        %1541 = vdwg.mxu0
        %v1543 = vrot.slane %v1540, 6
        %v1545 = vadd.f32 %v1399, %v1543
        %v1546 = vmul.f32 %v1545, 0.5
        %v1548 = vrot.slane %v1546, 2
        %v1551 = vrot.slane %v1545, 1
        %v1553 = vsel %vm1439, %v1548, %v1551
        %v1554 = vtanh.pop %v1553
        %v1555 = vmul.f32 %v1554, 0.5
        %v1556 = vadd.f32 %v1555, 0.5
        %v1557 = vmul.f32 %v1556, %v1510
        %v1559 = vrot.slane %v1554, 1
        %1560 = vrot.lane.b32.xlu0 %v1559, 64
        %v1561 = vpop.permute.xlu0 %1560
        %v1563 = vmul.f32 %v1556, %v1561
        %1565 = vrot.lane.b32.xlu0 %v1563, 32
        %v1566 = vpop.permute.xlu0 %1565
        %v1568 = vadd.f32 %v1557, %v1566
        %v1569 = vtanh.pop %v1568
        %1571 = vrot.lane.b32.xlu0 %v1569, 64
        %v1572 = vpop.permute.xlu0 %1571
        %v1574 = vmul.f32 %v1556, %v1572
        %1576 = vrot.lane.b32.xlu0 %v1574, 32
        %v1577 = vpop.permute.xlu0 %1576
        %v1578 = vsel %vm842, %v1577, 0
        %1580 = vmatpush.msra.mxu0 0.0
        %1581 = vmatpush.msra.mxu0 0.0
        %1582 = vmatpush.msra.mxu0 0.0
        %1583 = vmatpush.msra.mxu0 0.0
        %1584 = vmatpush.msra.mxu0 0.0
        %1585 = vmatpush.msra.mxu0 0.0
        %1586 = vmatpush.msra.mxu0 0.0
        %1587 = vmatpush.msra.mxu0 0.0
        %1588 = vmatpush.msra.mxu0 0.0
        %1589 = vmatpush.msra.mxu0 0.0
        %1590 = vmatpush.msra.mxu0 0.0
        %1591 = vmatpush.msra.mxu0 0.0
        %1592 = vmatpush.msra.mxu0 %v1410
        %1593 = vmatpush.msra.mxu0 %v1409
        %1594 = vmatpush.msra.mxu0 %v1408
        %1595 = vmatpush.msra.mxu0 %v1407
        %1596 = vmatmul.f32.gmra.mxu0 %v1578
        %v1597 = vpop.f32.mrf.mxu0
        %v1598 = vadd.f32 0.0, %v1597
        %1599 = vdwg.mxu0
        %v1601 = vrot.slane %v1598, 5
        %v1603 = vadd.f32 %v1399, %v1601
        %v1604 = vmul.f32 %v1603, 0.5
        %v1606 = vrot.slane %v1604, 3
        %v1609 = vrot.slane %v1603, 2
        %v1611 = vsel %vm1439, %v1606, %v1609
        %v1612 = vtanh.pop %v1611
        %v1613 = vmul.f32 %v1612, 0.5
        %v1614 = vadd.f32 %v1613, 0.5
        %v1615 = vmul.f32 %v1614, %v1568
        %v1617 = vrot.slane %v1612, 1
        %1618 = vrot.lane.b32.xlu0 %v1617, 64
        %v1619 = vpop.permute.xlu0 %1618
        %v1621 = vmul.f32 %v1614, %v1619
        %1623 = vrot.lane.b32.xlu0 %v1621, 32
        %v1624 = vpop.permute.xlu0 %1623
        %v1626 = vadd.f32 %v1615, %v1624
        %v1627 = vtanh.pop %v1626
        %1629 = vrot.lane.b32.xlu0 %v1627, 64
        %v1630 = vpop.permute.xlu0 %1629
        %v1632 = vmul.f32 %v1614, %v1630
        %1634 = vrot.lane.b32.xlu0 %v1632, 32
        %v1635 = vpop.permute.xlu0 %1634
        %v1636 = vsel %vm842, %v1635, 0
        %1638 = vmatpush.msra.mxu0 0.0
        %1639 = vmatpush.msra.mxu0 0.0
        %1640 = vmatpush.msra.mxu0 0.0
        %1641 = vmatpush.msra.mxu0 0.0
        %1642 = vmatpush.msra.mxu0 0.0
        %1643 = vmatpush.msra.mxu0 0.0
        %1644 = vmatpush.msra.mxu0 0.0
        %1645 = vmatpush.msra.mxu0 0.0
        %1646 = vmatpush.msra.mxu0 0.0
        %1647 = vmatpush.msra.mxu0 0.0
        %1648 = vmatpush.msra.mxu0 0.0
        %1649 = vmatpush.msra.mxu0 0.0
        %1650 = vmatpush.msra.mxu0 %v1410
        %1651 = vmatpush.msra.mxu0 %v1409
        %1652 = vmatpush.msra.mxu0 %v1408
        %1653 = vmatpush.msra.mxu0 %v1407
        %1654 = vmatmul.f32.gmra.mxu0 %v1636
        %v1655 = vpop.f32.mrf.mxu0
        %v1656 = vadd.f32 0.0, %v1655
        %1657 = vdwg.mxu0
        %v1659 = vrot.slane %v1656, 4
        %v1661 = vadd.f32 %v1399, %v1659
        %v1662 = vmul.f32 %v1661, 0.5
        %v1664 = vrot.slane %v1662, 4
        %v1667 = vrot.slane %v1661, 3
        %v1669 = vsel %vm1439, %v1664, %v1667
        %v1670 = vtanh.pop %v1669
        %v1671 = vmul.f32 %v1670, 0.5
        %v1672 = vadd.f32 %v1671, 0.5
        %v1673 = vmul.f32 %v1672, %v1626
        %v1675 = vrot.slane %v1670, 1
        %1676 = vrot.lane.b32.xlu0 %v1675, 64
        %v1677 = vpop.permute.xlu0 %1676
        %v1679 = vmul.f32 %v1672, %v1677
        %1681 = vrot.lane.b32.xlu0 %v1679, 32
        %v1682 = vpop.permute.xlu0 %1681
        %v1684 = vadd.f32 %v1673, %v1682
        %v1685 = vtanh.pop %v1684
        %1687 = vrot.lane.b32.xlu0 %v1685, 64
        %v1688 = vpop.permute.xlu0 %1687
        %v1690 = vmul.f32 %v1672, %v1688
        %1692 = vrot.lane.b32.xlu0 %v1690, 32
        %v1693 = vpop.permute.xlu0 %1692
        %v1694 = vsel %vm842, %v1693, 0
        %1696 = vmatpush.msra.mxu0 0.0
        %1697 = vmatpush.msra.mxu0 0.0
        %1698 = vmatpush.msra.mxu0 0.0
        %1699 = vmatpush.msra.mxu0 0.0
        %1700 = vmatpush.msra.mxu0 0.0
        %1701 = vmatpush.msra.mxu0 0.0
        %1702 = vmatpush.msra.mxu0 0.0
        %1703 = vmatpush.msra.mxu0 0.0
        %1704 = vmatpush.msra.mxu0 0.0
        %1705 = vmatpush.msra.mxu0 0.0
        %1706 = vmatpush.msra.mxu0 0.0
        %1707 = vmatpush.msra.mxu0 0.0
        %1708 = vmatpush.msra.mxu0 %v1410
        %1709 = vmatpush.msra.mxu0 %v1409
        %1710 = vmatpush.msra.mxu0 %v1408
        %1711 = vmatpush.msra.mxu0 %v1407
        %1712 = vmatmul.f32.gmra.mxu0 %v1694
        %v1713 = vpop.f32.mrf.mxu0
        %v1714 = vadd.f32 0.0, %v1713
        %1715 = vdwg.mxu0
        %v1717 = vrot.slane %v1714, 3
        %v1719 = vadd.f32 %v1399, %v1717
        %v1720 = vmul.f32 %v1719, 0.5
        %v1722 = vrot.slane %v1720, 5
        %v1725 = vrot.slane %v1719, 4
        %v1727 = vsel %vm1439, %v1722, %v1725
        %v1728 = vtanh.pop %v1727
        %v1729 = vmul.f32 %v1728, 0.5
        %v1730 = vadd.f32 %v1729, 0.5
        %v1731 = vmul.f32 %v1730, %v1684
        %v1733 = vrot.slane %v1728, 1
        %1734 = vrot.lane.b32.xlu0 %v1733, 64
        %v1735 = vpop.permute.xlu0 %1734
        %v1737 = vmul.f32 %v1730, %v1735
        %1739 = vrot.lane.b32.xlu0 %v1737, 32
        %v1740 = vpop.permute.xlu0 %1739
        %v1742 = vadd.f32 %v1731, %v1740
        %v1743 = vtanh.pop %v1742
        %1745 = vrot.lane.b32.xlu0 %v1743, 64
        %v1746 = vpop.permute.xlu0 %1745
        %v1748 = vmul.f32 %v1730, %v1746
        %1750 = vrot.lane.b32.xlu0 %v1748, 32
        %v1751 = vpop.permute.xlu0 %1750
        %v1752 = vsel %vm842, %v1751, 0
        %1754 = vmatpush.msra.mxu0 0.0
        %1755 = vmatpush.msra.mxu0 0.0
        %1756 = vmatpush.msra.mxu0 0.0
        %1757 = vmatpush.msra.mxu0 0.0
        %1758 = vmatpush.msra.mxu0 0.0
        %1759 = vmatpush.msra.mxu0 0.0
        %1760 = vmatpush.msra.mxu0 0.0
        %1761 = vmatpush.msra.mxu0 0.0
        %1762 = vmatpush.msra.mxu0 0.0
        %1763 = vmatpush.msra.mxu0 0.0
        %1764 = vmatpush.msra.mxu0 0.0
        %1765 = vmatpush.msra.mxu0 0.0
        %1766 = vmatpush.msra.mxu0 %v1410
        %1767 = vmatpush.msra.mxu0 %v1409
        %1768 = vmatpush.msra.mxu0 %v1408
        %1769 = vmatpush.msra.mxu0 %v1407
        %1770 = vmatmul.f32.gmra.mxu0 %v1752
        %v1771 = vpop.f32.mrf.mxu0
        %v1772 = vadd.f32 0.0, %v1771
        %1773 = vdwg.mxu0
        %v1775 = vrot.slane %v1772, 2
        %v1777 = vadd.f32 %v1399, %v1775
        %v1778 = vmul.f32 %v1777, 0.5
        %v1780 = vrot.slane %v1778, 6
        %v1783 = vrot.slane %v1777, 5
        %v1785 = vsel %vm1439, %v1780, %v1783
        %v1786 = vtanh.pop %v1785
        %v1787 = vmul.f32 %v1786, 0.5
        %v1788 = vadd.f32 %v1787, 0.5
        %v1789 = vmul.f32 %v1788, %v1742
        %v1791 = vrot.slane %v1786, 1
        %1792 = vrot.lane.b32.xlu0 %v1791, 64
        %v1793 = vpop.permute.xlu0 %1792
        %v1795 = vmul.f32 %v1788, %v1793
        %1797 = vrot.lane.b32.xlu0 %v1795, 32
        %v1798 = vpop.permute.xlu0 %1797
        %v1800 = vadd.f32 %v1789, %v1798
        %v1801 = vtanh.pop %v1800
        %1803 = vrot.lane.b32.xlu0 %v1801, 64
        %v1804 = vpop.permute.xlu0 %1803
        %v1806 = vmul.f32 %v1788, %v1804
        %1808 = vrot.lane.b32.xlu0 %v1806, 32
        %v1809 = vpop.permute.xlu0 %1808
        %v1810 = vsel %vm842, %v1809, 0
        %1812 = vmatpush.msra.mxu0 0.0
        %1813 = vmatpush.msra.mxu0 0.0
        %1814 = vmatpush.msra.mxu0 0.0
        %1815 = vmatpush.msra.mxu0 0.0
        %1816 = vmatpush.msra.mxu0 0.0
        %1817 = vmatpush.msra.mxu0 0.0
        %1818 = vmatpush.msra.mxu0 0.0
        %1819 = vmatpush.msra.mxu0 0.0
        %1820 = vmatpush.msra.mxu0 0.0
        %1821 = vmatpush.msra.mxu0 0.0
        %1822 = vmatpush.msra.mxu0 0.0
        %1823 = vmatpush.msra.mxu0 0.0
        %1824 = vmatpush.msra.mxu0 %v1410
        %1825 = vmatpush.msra.mxu0 %v1409
        %1826 = vmatpush.msra.mxu0 %v1408
        %1827 = vmatpush.msra.mxu0 %v1407
        %1828 = vmatmul.f32.gmra.mxu0 %v1810
        %v1829 = vpop.f32.mrf.mxu0
        %v1830 = vadd.f32 0.0, %v1829
        %1831 = vdwg.mxu0
        %v1833 = vrot.slane %v1830, 1
        %v1835 = vadd.f32 %v1399, %v1833
        %v1836 = vmul.f32 %v1835, 0.5
        %v1838 = vrot.slane %v1836, 7
        %v1841 = vrot.slane %v1835, 6
        %v1843 = vsel %vm1439, %v1838, %v1841
        %v1844 = vtanh.pop %v1843
        %v1845 = vmul.f32 %v1844, 0.5
        %v1846 = vadd.f32 %v1845, 0.5
        %v1847 = vmul.f32 %v1846, %v1800
        %v1849 = vrot.slane %v1844, 1
        %1850 = vrot.lane.b32.xlu0 %v1849, 64
        %v1851 = vpop.permute.xlu0 %1850
        %v1853 = vmul.f32 %v1846, %v1851
        %1855 = vrot.lane.b32.xlu0 %v1853, 32
        %v1856 = vpop.permute.xlu0 %1855
        %v1858 = vadd.f32 %v1847, %v1856
        %v1859 = vtanh.pop %v1858
        %1861 = vrot.lane.b32.xlu0 %v1859, 64
        %v1862 = vpop.permute.xlu0 %1861
        %v1864 = vmul.f32 %v1846, %v1862
        %1866 = vrot.lane.b32.xlu0 %v1864, 32
        %v1867 = vpop.permute.xlu0 %1866
        %v1868 = vsel %vm842, %v1867, 0
        %1870 = vmatpush.msra.mxu0 0.0
        %1871 = vmatpush.msra.mxu0 0.0
        %1872 = vmatpush.msra.mxu0 0.0
        %1873 = vmatpush.msra.mxu0 0.0
        %1874 = vmatpush.msra.mxu0 0.0
        %1875 = vmatpush.msra.mxu0 0.0
        %1876 = vmatpush.msra.mxu0 0.0
        %1877 = vmatpush.msra.mxu0 0.0
        %1878 = vmatpush.msra.mxu0 0.0
        %1879 = vmatpush.msra.mxu0 0.0
        %1880 = vmatpush.msra.mxu0 0.0
        %1881 = vmatpush.msra.mxu0 0.0
        %1882 = vmatpush.msra.mxu0 %v1410
        %1883 = vmatpush.msra.mxu0 %v1409
        %1884 = vmatpush.msra.mxu0 %v1408
        %1885 = vmatpush.msra.mxu0 %v1407
        %1886 = vmatmul.f32.gmra.mxu0 %v1868
        %v1887 = vpop.f32.mrf.mxu0
        %v1888 = vadd.f32 0.0, %v1887
        %1889 = vdwg.mxu0
        %v1890 = vadd.f32 %v1402, %v1888
        %v1891 = vmul.f32 %v1890, 0.5
        %v1893 = vrot.slane %v1890, 7
        %v1895 = vsel %vm1439, %v1891, %v1893
        %v1896 = vtanh.pop %v1895
        %v1897 = vmul.f32 %v1896, 0.5
        %v1898 = vadd.f32 %v1897, 0.5
        %v1899 = vmul.f32 %v1898, %v1858
        %v1901 = vrot.slane %v1896, 1
        %1902 = vrot.lane.b32.xlu0 %v1901, 64
        %v1903 = vpop.permute.xlu0 %1902
        %v1905 = vmul.f32 %v1898, %v1903
        %1907 = vrot.lane.b32.xlu0 %v1905, 32
        %v1908 = vpop.permute.xlu0 %1907
        %v1910 = vadd.f32 %v1899, %v1908
        %v1911 = vtanh.pop %v1910
        %1913 = vrot.lane.b32.xlu0 %v1911, 64
        %v1914 = vpop.permute.xlu0 %1913
        %v1916 = vmul.f32 %v1898, %v1914
        %1918 = vrot.lane.b32.xlu0 %v1916, 32
        %v1919 = vpop.permute.xlu0 %1918
        %v1920 = vsel %vm842, %v1919, 0
        %1922 = vmatpush.msra.mxu0 0.0
        %1923 = vmatpush.msra.mxu0 0.0
        %1924 = vmatpush.msra.mxu0 0.0
        %1925 = vmatpush.msra.mxu0 0.0
        %1926 = vmatpush.msra.mxu0 0.0
        %1927 = vmatpush.msra.mxu0 0.0
        %1928 = vmatpush.msra.mxu0 0.0
        %1929 = vmatpush.msra.mxu0 0.0
        %1930 = vmatpush.msra.mxu0 0.0
        %1931 = vmatpush.msra.mxu0 0.0
        %1932 = vmatpush.msra.mxu0 0.0
        %1933 = vmatpush.msra.mxu0 0.0
        %1934 = vmatpush.msra.mxu0 %v1410
        %1935 = vmatpush.msra.mxu0 %v1409
        %1936 = vmatpush.msra.mxu0 %v1408
        %1937 = vmatpush.msra.mxu0 %v1407
        %1938 = vmatmul.f32.gmra.mxu0 %v1920
        %v1939 = vpop.f32.mrf.mxu0
        %v1940 = vadd.f32 0.0, %v1939
        %1941 = vdwg.mxu0
        %v1943 = vrot.slane %v1940, 7
        %v1945 = vadd.f32 %v1402, %v1943
        %v1946 = vmul.f32 %v1945, 0.5
        %v1948 = vrot.slane %v1946, 1
        %v1950 = vsel %vm1439, %v1948, %v1945
        %v1951 = vtanh.pop %v1950
        %v1952 = vmul.f32 %v1951, 0.5
        %v1953 = vadd.f32 %v1952, 0.5
        %v1954 = vmul.f32 %v1953, %v1910
        %v1956 = vrot.slane %v1951, 1
        %1957 = vrot.lane.b32.xlu0 %v1956, 64
        %v1958 = vpop.permute.xlu0 %1957
        %v1960 = vmul.f32 %v1953, %v1958
        %1962 = vrot.lane.b32.xlu0 %v1960, 32
        %v1963 = vpop.permute.xlu0 %1962
        %v1965 = vadd.f32 %v1954, %v1963
        %v1966 = vtanh.pop %v1965
        %1968 = vrot.lane.b32.xlu0 %v1966, 64
        %v1969 = vpop.permute.xlu0 %1968
        %v1971 = vmul.f32 %v1953, %v1969
        %1973 = vrot.lane.b32.xlu0 %v1971, 32
        %v1974 = vpop.permute.xlu0 %1973
        %v1975 = vsel %vm842, %v1974, 0
        %1977 = vmatpush.msra.mxu0 0.0
        %1978 = vmatpush.msra.mxu0 0.0
        %1979 = vmatpush.msra.mxu0 0.0
        %1980 = vmatpush.msra.mxu0 0.0
        %1981 = vmatpush.msra.mxu0 0.0
        %1982 = vmatpush.msra.mxu0 0.0
        %1983 = vmatpush.msra.mxu0 0.0
        %1984 = vmatpush.msra.mxu0 0.0
        %1985 = vmatpush.msra.mxu0 0.0
        %1986 = vmatpush.msra.mxu0 0.0
        %1987 = vmatpush.msra.mxu0 0.0
        %1988 = vmatpush.msra.mxu0 0.0
        %1989 = vmatpush.msra.mxu0 %v1410
        %1990 = vmatpush.msra.mxu0 %v1409
        %1991 = vmatpush.msra.mxu0 %v1408
        %1992 = vmatpush.msra.mxu0 %v1407
        %1993 = vmatmul.f32.gmra.mxu0 %v1975
        %v1994 = vpop.f32.mrf.mxu0
        %v1995 = vadd.f32 0.0, %v1994
        %1996 = vdwg.mxu0
        %v1998 = vrot.slane %v1995, 6
        %v2000 = vadd.f32 %v1402, %v1998
        %v2001 = vmul.f32 %v2000, 0.5
        %v2003 = vrot.slane %v2001, 2
        %v2006 = vrot.slane %v2000, 1
        %v2008 = vsel %vm1439, %v2003, %v2006
        %v2009 = vtanh.pop %v2008
        %v2010 = vmul.f32 %v2009, 0.5
        %v2011 = vadd.f32 %v2010, 0.5
        %v2012 = vmul.f32 %v2011, %v1965
        %v2014 = vrot.slane %v2009, 1
        %2015 = vrot.lane.b32.xlu0 %v2014, 64
        %v2016 = vpop.permute.xlu0 %2015
        %v2018 = vmul.f32 %v2011, %v2016
        %2020 = vrot.lane.b32.xlu0 %v2018, 32
        %v2021 = vpop.permute.xlu0 %2020
        %v2023 = vadd.f32 %v2012, %v2021
        %v2024 = vtanh.pop %v2023
        %2026 = vrot.lane.b32.xlu0 %v2024, 64
        %v2027 = vpop.permute.xlu0 %2026
        %v2029 = vmul.f32 %v2011, %v2027
        %2031 = vrot.lane.b32.xlu0 %v2029, 32
        %v2032 = vpop.permute.xlu0 %2031
        %v2033 = vsel %vm842, %v2032, 0
        %2035 = vmatpush.msra.mxu0 0.0
        %2036 = vmatpush.msra.mxu0 0.0
        %2037 = vmatpush.msra.mxu0 0.0
        %2038 = vmatpush.msra.mxu0 0.0
        %2039 = vmatpush.msra.mxu0 0.0
        %2040 = vmatpush.msra.mxu0 0.0
        %2041 = vmatpush.msra.mxu0 0.0
        %2042 = vmatpush.msra.mxu0 0.0
        %2043 = vmatpush.msra.mxu0 0.0
        %2044 = vmatpush.msra.mxu0 0.0
        %2045 = vmatpush.msra.mxu0 0.0
        %2046 = vmatpush.msra.mxu0 0.0
        %2047 = vmatpush.msra.mxu0 %v1410
        %2048 = vmatpush.msra.mxu0 %v1409
        %2049 = vmatpush.msra.mxu0 %v1408
        %2050 = vmatpush.msra.mxu0 %v1407
        %2051 = vmatmul.f32.gmra.mxu0 %v2033
        %v2052 = vpop.f32.mrf.mxu0
        %v2053 = vadd.f32 0.0, %v2052
        %2054 = vdwg.mxu0
        %v2056 = vrot.slane %v2053, 5
        %v2058 = vadd.f32 %v1402, %v2056
        %v2059 = vmul.f32 %v2058, 0.5
        %v2061 = vrot.slane %v2059, 3
        %v2064 = vrot.slane %v2058, 2
        %v2066 = vsel %vm1439, %v2061, %v2064
        %v2067 = vtanh.pop %v2066
        %v2068 = vmul.f32 %v2067, 0.5
        %v2069 = vadd.f32 %v2068, 0.5
        %v2070 = vmul.f32 %v2069, %v2023
        %v2072 = vrot.slane %v2067, 1
        %2073 = vrot.lane.b32.xlu0 %v2072, 64
        %v2074 = vpop.permute.xlu0 %2073
        %v2076 = vmul.f32 %v2069, %v2074
        %2078 = vrot.lane.b32.xlu0 %v2076, 32
        %v2079 = vpop.permute.xlu0 %2078
        %v2081 = vadd.f32 %v2070, %v2079
        %v2082 = vtanh.pop %v2081
        %2084 = vrot.lane.b32.xlu0 %v2082, 64
        %v2085 = vpop.permute.xlu0 %2084
        %v2087 = vmul.f32 %v2069, %v2085
        %2089 = vrot.lane.b32.xlu0 %v2087, 32
        %v2090 = vpop.permute.xlu0 %2089
        %v2091 = vsel %vm842, %v2090, 0
        %2093 = vmatpush.msra.mxu0 0.0
        %2094 = vmatpush.msra.mxu0 0.0
        %2095 = vmatpush.msra.mxu0 0.0
        %2096 = vmatpush.msra.mxu0 0.0
        %2097 = vmatpush.msra.mxu0 0.0
        %2098 = vmatpush.msra.mxu0 0.0
        %2099 = vmatpush.msra.mxu0 0.0
        %2100 = vmatpush.msra.mxu0 0.0
        %2101 = vmatpush.msra.mxu0 0.0
        %2102 = vmatpush.msra.mxu0 0.0
        %2103 = vmatpush.msra.mxu0 0.0
        %2104 = vmatpush.msra.mxu0 0.0
        %2105 = vmatpush.msra.mxu0 %v1410
        %2106 = vmatpush.msra.mxu0 %v1409
        %2107 = vmatpush.msra.mxu0 %v1408
        %2108 = vmatpush.msra.mxu0 %v1407
        %2109 = vmatmul.f32.gmra.mxu0 %v2091
        %v2110 = vpop.f32.mrf.mxu0
        %v2111 = vadd.f32 0.0, %v2110
        %2112 = vdwg.mxu0
        %v2114 = vrot.slane %v2111, 4
        %v2116 = vadd.f32 %v1402, %v2114
        %v2117 = vmul.f32 %v2116, 0.5
        %v2119 = vrot.slane %v2117, 4
        %v2122 = vrot.slane %v2116, 3
        %v2124 = vsel %vm1439, %v2119, %v2122
        %v2125 = vtanh.pop %v2124
        %v2126 = vmul.f32 %v2125, 0.5
        %v2127 = vadd.f32 %v2126, 0.5
        %v2128 = vmul.f32 %v2127, %v2081
        %v2130 = vrot.slane %v2125, 1
        %2131 = vrot.lane.b32.xlu0 %v2130, 64
        %v2132 = vpop.permute.xlu0 %2131
        %v2134 = vmul.f32 %v2127, %v2132
        %2136 = vrot.lane.b32.xlu0 %v2134, 32
        %v2137 = vpop.permute.xlu0 %2136
        %v2139 = vadd.f32 %v2128, %v2137
        %v2140 = vtanh.pop %v2139
        %2142 = vrot.lane.b32.xlu0 %v2140, 64
        %v2143 = vpop.permute.xlu0 %2142
        %v2145 = vmul.f32 %v2127, %v2143
        %2147 = vrot.lane.b32.xlu0 %v2145, 32
        %v2148 = vpop.permute.xlu0 %2147
        %v2149 = vsel %vm842, %v2148, 0
        %2151 = vmatpush.msra.mxu0 0.0
        %2152 = vmatpush.msra.mxu0 0.0
        %2153 = vmatpush.msra.mxu0 0.0
        %2154 = vmatpush.msra.mxu0 0.0
        %2155 = vmatpush.msra.mxu0 0.0
        %2156 = vmatpush.msra.mxu0 0.0
        %2157 = vmatpush.msra.mxu0 0.0
        %2158 = vmatpush.msra.mxu0 0.0
        %2159 = vmatpush.msra.mxu0 0.0
        %2160 = vmatpush.msra.mxu0 0.0
        %2161 = vmatpush.msra.mxu0 0.0
        %2162 = vmatpush.msra.mxu0 0.0
        %2163 = vmatpush.msra.mxu0 %v1410
        %2164 = vmatpush.msra.mxu0 %v1409
        %2165 = vmatpush.msra.mxu0 %v1408
        %2166 = vmatpush.msra.mxu0 %v1407
        %2167 = vmatmul.f32.gmra.mxu0 %v2149
        %v2168 = vpop.f32.mrf.mxu0
        %v2169 = vadd.f32 0.0, %v2168
        %2170 = vdwg.mxu0
        %v2172 = vrot.slane %v2169, 3
        %v2174 = vadd.f32 %v1402, %v2172
        %v2175 = vmul.f32 %v2174, 0.5
        %v2177 = vrot.slane %v2175, 5
        %v2180 = vrot.slane %v2174, 4
        %v2182 = vsel %vm1439, %v2177, %v2180
        %v2183 = vtanh.pop %v2182
        %v2184 = vmul.f32 %v2183, 0.5
        %v2185 = vadd.f32 %v2184, 0.5
        %v2186 = vmul.f32 %v2185, %v2139
        %v2188 = vrot.slane %v2183, 1
        %2189 = vrot.lane.b32.xlu0 %v2188, 64
        %v2190 = vpop.permute.xlu0 %2189
        %v2192 = vmul.f32 %v2185, %v2190
        %2194 = vrot.lane.b32.xlu0 %v2192, 32
        %v2195 = vpop.permute.xlu0 %2194
        %v2197 = vadd.f32 %v2186, %v2195
        %v2198 = vtanh.pop %v2197
        %2200 = vrot.lane.b32.xlu0 %v2198, 64
        %v2201 = vpop.permute.xlu0 %2200
        %v2203 = vmul.f32 %v2185, %v2201
        %2205 = vrot.lane.b32.xlu0 %v2203, 32
        %v2206 = vpop.permute.xlu0 %2205
        %v2207 = vsel %vm842, %v2206, 0
        %2209 = vmatpush.msra.mxu0 0.0
        %2210 = vmatpush.msra.mxu0 0.0
        %2211 = vmatpush.msra.mxu0 0.0
        %2212 = vmatpush.msra.mxu0 0.0
        %2213 = vmatpush.msra.mxu0 0.0
        %2214 = vmatpush.msra.mxu0 0.0
        %2215 = vmatpush.msra.mxu0 0.0
        %2216 = vmatpush.msra.mxu0 0.0
        %2217 = vmatpush.msra.mxu0 0.0
        %2218 = vmatpush.msra.mxu0 0.0
        %2219 = vmatpush.msra.mxu0 0.0
        %2220 = vmatpush.msra.mxu0 0.0
        %2221 = vmatpush.msra.mxu0 %v1410
        %2222 = vmatpush.msra.mxu0 %v1409
        %2223 = vmatpush.msra.mxu0 %v1408
        %2224 = vmatpush.msra.mxu0 %v1407
        %2225 = vmatmul.f32.gmra.mxu0 %v2207
        %v2226 = vpop.f32.mrf.mxu0
        %v2227 = vadd.f32 0.0, %v2226
        %2228 = vdwg.mxu0
        %v2230 = vrot.slane %v2227, 2
        %v2232 = vadd.f32 %v1402, %v2230
        %v2233 = vmul.f32 %v2232, 0.5
        %v2235 = vrot.slane %v2233, 6
        %v2238 = vrot.slane %v2232, 5
        %v2240 = vsel %vm1439, %v2235, %v2238
        %v2241 = vtanh.pop %v2240
        %v2242 = vmul.f32 %v2241, 0.5
        %v2243 = vadd.f32 %v2242, 0.5
        %v2244 = vmul.f32 %v2243, %v2197
        %v2246 = vrot.slane %v2241, 1
        %2247 = vrot.lane.b32.xlu0 %v2246, 64
        %v2248 = vpop.permute.xlu0 %2247
        %v2250 = vmul.f32 %v2243, %v2248
        %2252 = vrot.lane.b32.xlu0 %v2250, 32
        %v2253 = vpop.permute.xlu0 %2252
        %v2255 = vadd.f32 %v2244, %v2253
        %v2256 = vtanh.pop %v2255
        %2258 = vrot.lane.b32.xlu0 %v2256, 64
        %v2259 = vpop.permute.xlu0 %2258
        %v2261 = vmul.f32 %v2243, %v2259
        %2263 = vrot.lane.b32.xlu0 %v2261, 32
        %v2264 = vpop.permute.xlu0 %2263
        %v2265 = vsel %vm842, %v2264, 0
        %2267 = vmatpush.msra.mxu0 0.0
        %2268 = vmatpush.msra.mxu0 0.0
        %2269 = vmatpush.msra.mxu0 0.0
        %2270 = vmatpush.msra.mxu0 0.0
        %2271 = vmatpush.msra.mxu0 0.0
        %2272 = vmatpush.msra.mxu0 0.0
        %2273 = vmatpush.msra.mxu0 0.0
        %2274 = vmatpush.msra.mxu0 0.0
        %2275 = vmatpush.msra.mxu0 0.0
        %2276 = vmatpush.msra.mxu0 0.0
        %2277 = vmatpush.msra.mxu0 0.0
        %2278 = vmatpush.msra.mxu0 0.0
        %2279 = vmatpush.msra.mxu0 %v1410
        %2280 = vmatpush.msra.mxu0 %v1409
        %2281 = vmatpush.msra.mxu0 %v1408
        %2282 = vmatpush.msra.mxu0 %v1407
        %2283 = vmatmul.f32.gmra.mxu0 %v2265
        %v2284 = vpop.f32.mrf.mxu0
        %v2285 = vadd.f32 0.0, %v2284
        %2286 = vdwg.mxu0
        %v2288 = vrot.slane %v2285, 1
        %v2290 = vadd.f32 %v1402, %v2288
        %v2291 = vmul.f32 %v2290, 0.5
        %v2293 = vrot.slane %v2291, 7
        %v2296 = vrot.slane %v2290, 6
        %v2298 = vsel %vm1439, %v2293, %v2296
        %v2299 = vtanh.pop %v2298
        %v2300 = vmul.f32 %v2299, 0.5
        %v2301 = vadd.f32 %v2300, 0.5
        %v2302 = vmul.f32 %v2301, %v2255
        %v2304 = vrot.slane %v2299, 1
        %2305 = vrot.lane.b32.xlu0 %v2304, 64
        %v2306 = vpop.permute.xlu0 %2305
        %v2308 = vmul.f32 %v2301, %v2306
        %2310 = vrot.lane.b32.xlu0 %v2308, 32
        %v2311 = vpop.permute.xlu0 %2310
        %v2313 = vadd.f32 %v2302, %v2311
        %v2314 = vtanh.pop %v2313
        %2316 = vrot.lane.b32.xlu0 %v2314, 64
        %v2317 = vpop.permute.xlu0 %2316
        %v2319 = vmul.f32 %v2301, %v2317
        %2321 = vrot.lane.b32.xlu0 %v2319, 32
        %v2322 = vpop.permute.xlu0 %2321
        %v2323 = vsel %vm842, %v2322, 0
        %2325 = vmatpush.msra.mxu0 0.0
        %2326 = vmatpush.msra.mxu0 0.0
        %2327 = vmatpush.msra.mxu0 0.0
        %2328 = vmatpush.msra.mxu0 0.0
        %2329 = vmatpush.msra.mxu0 0.0
        %2330 = vmatpush.msra.mxu0 0.0
        %2331 = vmatpush.msra.mxu0 0.0
        %2332 = vmatpush.msra.mxu0 0.0
        %2333 = vmatpush.msra.mxu0 0.0
        %2334 = vmatpush.msra.mxu0 0.0
        %2335 = vmatpush.msra.mxu0 0.0
        %2336 = vmatpush.msra.mxu0 0.0
        %2337 = vmatpush.msra.mxu0 %v1410
        %2338 = vmatpush.msra.mxu0 %v1409
        %2339 = vmatpush.msra.mxu0 %v1408
        %2340 = vmatpush.msra.mxu0 %v1407
        %2341 = vmatmul.f32.gmra.mxu0 %v2323
        %v2342 = vpop.f32.mrf.mxu0
        %v2343 = vadd.f32 0.0, %v2342
        %2344 = vdwg.mxu0
        %v2345 = vadd.f32 %v1405, %v2343
        %v2346 = vmul.f32 %v2345, 0.5
        %v2348 = vrot.slane %v2345, 7
        %v2350 = vsel %vm1439, %v2346, %v2348
        %v2351 = vtanh.pop %v2350
        %v2352 = vmul.f32 %v2351, 0.5
        %v2353 = vadd.f32 %v2352, 0.5
        %v2354 = vmul.f32 %v2353, %v2313
        %v2356 = vrot.slane %v2351, 1
        %2357 = vrot.lane.b32.xlu0 %v2356, 64
        %v2358 = vpop.permute.xlu0 %2357
        %v2360 = vmul.f32 %v2353, %v2358
        %2362 = vrot.lane.b32.xlu0 %v2360, 32
        %v2363 = vpop.permute.xlu0 %2362
        %v2365 = vadd.f32 %v2354, %v2363
        %v2366 = vtanh.pop %v2365
        %2368 = vrot.lane.b32.xlu0 %v2366, 64
        %v2369 = vpop.permute.xlu0 %2368
        %v2371 = vmul.f32 %v2353, %v2369
        %v2372 = vld [vmem:[%s12] sm:$0xff]
        %v2373 = vld [vmem:[%s12 + $0x8] sm:$0xff]
        %v2374 = vld [vmem:[%s12 + $0x10] sm:$0xff]
        %v2375 = vld [vmem:[%s12 + $0x18] sm:$0xff]
        %v2376 = vld [vmem:[%s13] sm:$0x1]
        %2378 = vrot.lane.b32.xlu0 %v2371, 32
        %v2379 = vpop.permute.xlu0 %2378
        %v2380 = vsel %vm842, %v2379, 0
        %2382 = vmatpush.msra.mxu0 0.0
        %2383 = vmatpush.msra.mxu0 0.0
        %2384 = vmatpush.msra.mxu0 0.0
        %2385 = vmatpush.msra.mxu0 0.0
        %2386 = vmatpush.msra.mxu0 0.0
        %2387 = vmatpush.msra.mxu0 0.0
        %2388 = vmatpush.msra.mxu0 0.0
        %2389 = vmatpush.msra.mxu0 0.0
        %2390 = vmatpush.msra.mxu0 0.0
        %2391 = vmatpush.msra.mxu0 0.0
        %2392 = vmatpush.msra.mxu0 0.0
        %2393 = vmatpush.msra.mxu0 0.0
        %2394 = vmatpush.msra.mxu0 %v2375
        %2395 = vmatpush.msra.mxu0 %v2374
        %2396 = vmatpush.msra.mxu0 %v2373
        %2397 = vmatpush.msra.mxu0 %v2372
        %2398 = vmatmul.f32.gmra.mxu0 %v2380
        %v2399 = vpop.f32.mrf.mxu0
        %v2400 = vadd.f32 %v2376, %v2399
        %2401 = vdwg.mxu0
        %2402 = vst [vmem:[%s459] sm:$0x1] %v2400
        %s2403 = sand.u32 %s335, 1
        %s2404 = scalar_lea.sflag [#allocation3], %s2403
        %s2405 = sand.u32 %s335, 1
        %s2406 = scalar_lea.vmem [#allocation2], %s2405
        // Predicated region
        $region77: #{conv_to_lstm_net.1} parent=75 // pred_check
          %p2407 = pneg %p345
        $region78: #{conv_to_lstm_net.1} parent=75 // pred_check_branch
          %2409 = sbr.rel (%p2407) target = $region80
        $region79: #{conv_to_lstm_net.1} parent=75 // pred_region
          %2411 = vsyncadd %s2404, 0
          %s2412 = scalar_lea.hbm %s14, %s28
          %s2414 = sshll.u32 %s2406, 4
          %s2415 = int_to_ptr.vmem [resolvable:$true] %s2414
          %s2416 = sshll.u32 %s2412, 4
          %s2417 = int_to_ptr.hbm [resolvable:$true] %s2416
          %2419 = dma.vmem_to_hbm [thread:$0]  %s2415, 16, %s2417, %s2404
        $region80: #{conv_to_lstm_net.1} parent=75 // pred_fallthru
          _
      $region76: #{conv_to_lstm_net.1} parent=5 // pred_fallthru
        _
      %p2420 = scmp.le.s32.totalorder 2, %s23
      // Predicated region
      $region81: #{conv_to_lstm_net.1} parent=5 // pred_check
        %p2421 = pneg %p2420
      $region82: #{conv_to_lstm_net.1} parent=5 // pred_check_branch
        %2423 = sbr.rel (%p2421) target = $region84
      $region83: #{conv_to_lstm_net.1} parent=5 // pred_region
        %s2424 = ssub.s32 %s23, 2
        // Predicated region
        $region85: #{conv_to_lstm_net.1} parent=83 // pred_check
          %p2425 = pneg %p351
        $region86: #{conv_to_lstm_net.1} parent=83 // pred_check_branch
          %2427 = sbr.rel (%p2425) target = $region88
        $region87: #{conv_to_lstm_net.1} parent=83 // pred_region
          %s2428 = sand.u32 %s336, 1
          %s2429 = scalar_lea.sflag [#allocation3], %s2428
          %s2430 = sand.u32 %s336, 1
          %s2431 = scalar_lea.vmem [#allocation2], %s2430
          %2433 = dma.done %s2429, 16
        $region88: #{conv_to_lstm_net.1} parent=83 // pred_fallthru
          _
      $region84: #{conv_to_lstm_net.1} parent=5 // pred_fallthru
        _
    $region6: #{conv_to_lstm_net.1} parent=1 // loop_footer
      %s27 = sadd.s32 1, %s23
    $region7: #{conv_to_lstm_net.1} parent=1 // loop_footer_branch
      %22 = sbr.rel target = $region3
    $region8: #{conv_to_lstm_net.1} parent=1 // loop_exit
      _
    %2434 = vsyncpa [#allocation3], 1
    %s2435 = scalar_lea.sflag [#allocation3], 1
    %2436 = vsyncpa %s2435, 1

</llo_original>
